<compile_context>
chip_gen: v7x
topology: tpu7x:2x2x1
jax: 0.10.0
libtpu: 0.0.40
codegen_flags: <defaults>
</compile_context>

<pallas_src>
import functools
from collections import namedtuple

import jax
import jax.numpy as jnp
from jax.experimental import pallas as pl
from jax.experimental.pallas import tpu as pltpu


# MaxPool(5, stride 2) window offsets 0..4 mapped to (parity, offset-in-parity):
#   d -> (parity, offset): 0->(0,0) 1->(1,0) 2->(0,1) 3->(1,1) 4->(0,2)
_POOL_TAPS = ((0, 0), (1, 0), (0, 1), (1, 1), (0, 2))

_VMEM_LIMIT = 32 * 1024 * 1024

ConvMeta = namedtuple("ConvMeta", "CH CW CHh CWh CWp PH PW K KP MP")


def _round_up(x, m):
    return -(-x // m) * m


# --------------------------- im2col patch layout --------------------------- #

def _conv_patches(x, k=5, s=2):
    """im2col patches for Conv2d(k=5, stride=2, valid), parity-split + padded.

    Returns (patches, meta) with patches shaped (N, MP, KP) bf16.  Row index
    m encodes (rho, u, sig, v) = (conv-row parity, row half-index, conv-col
    parity, col half-index):
        m = ((rho * CHh + u) * 2 + sig) * CWp + v
        patches[n, m, c*25 + di*5 + dj] = x[n, c, 2*(2u+rho)+di, 2*(2v+sig)+dj]
    v is zero-padded CWh -> CWp (multiple of 8) and the contraction dim is
    zero-padded K -> KP (multiple of 128) so the kernel gets aligned,
    lane-dense operands and can merge (batch-block, MP) into one matmul M dim.
    """
    # TODO(synk): patch extraction is still XLA glue; it could move in-kernel
    # with manual DMA from the raw NCHW input (dominant only for large inputs).
    N, C, H, W = x.shape
    CH = (H - k) // s + 1
    CW = (W - k) // s + 1
    PH = (CH - 5) // 2 + 1
    PW = (CW - 5) // 2 + 1
    CHh = (CH + 1) // 2
    CWh = (CW + 1) // 2
    CWp = _round_up(CWh, 8)
    K = C * k * k
    KP = _round_up(K, 128)
    MP = 2 * CHh * 2 * CWp

    xb = x.astype(jnp.bfloat16)
    taps = []
    for di in range(k):
        for dj in range(k):
            taps.append(jax.lax.slice(
                xb, (0, 0, di, dj),
                (N, C, di + s * (CH - 1) + 1, dj + s * (CW - 1) + 1),
                (1, 1, s, s)))                                 # (N, C, CH, CW)
    p = jnp.stack(taps, axis=2)                                # (N, C, 25, CH, CW)
    p = p.reshape(N, K, CH, CW)                                # K = (c, di, dj)
    p = jnp.pad(p, ((0, 0), (0, 0), (0, 2 * CHh - CH), (0, 2 * CWh - CW)))
    p = p.reshape(N, K, CHh, 2, CWh, 2)                        # (n, K, u, rho, v, sig)
    p = p.transpose(0, 3, 2, 5, 4, 1)                          # (n, rho, u, sig, v, K)
    p = jnp.pad(p, ((0, 0), (0, 0), (0, 0), (0, 0),
                    (0, CWp - CWh), (0, KP - K)))
    patches = p.reshape(N, MP, KP)
    return patches, ConvMeta(CH, CW, CHh, CWh, CWp, PH, PW, K, KP, MP)


def _pack_conv_weights(w, b, KP):
    O = w.shape[0]
    K = w.shape[1] * w.shape[2] * w.shape[3]
    wc = jnp.pad(w.reshape(O, K), ((0, 0), (0, KP - K))).T.astype(jnp.bfloat16)
    bc = b.reshape(1, O).astype(jnp.float32)
    return wc, bc                                              # (KP, O), (1, O)


# ------------------- fused conv + bias + ReLU + maxpool --------------------- #

def _conv_relu_pool_body(a_ref, w_ref, b_ref, act_sc, *, nb, chh, cwp, ph, pw):
    """One MXU dot (conv) + bias + ReLU + separable MaxPool(5,2).

    Returns the pooled activation as an (NB, PH, PW, O) f32 value.  `act_sc`
    (shape (NB, 2, CHh, 2*CWp, O), f32) is fully overwritten before any read,
    so no stale data survives across grid steps.
    """
    kp = a_ref.shape[-1]
    o = w_ref.shape[-1]
    mp = 2 * chh * 2 * cwp
    acc = jnp.dot(a_ref[...].reshape(nb * mp, kp), w_ref[...],
                  preferred_element_type=jnp.float32)          # ONE (M,K)@(K,O)
    act_sc[...] = jnp.maximum(acc + b_ref[...], 0.0).reshape(
        nb, 2, chh, 2 * cwp, o)
    # Separable MaxPool: 5 column taps per conv-row parity, then 5 row taps.
    # Tap bounds never reach the zero-padded / out-of-range positions (asserted
    # in the wrappers: PW <= CWh - 2 and PH <= CHh - 2).
    cols = []
    for rho in range(2):
        r = None
        for sig, cd in _POOL_TAPS:
            c0 = sig * cwp + cd
            t = act_sc[:, rho, :, c0:c0 + pw, :]               # (NB, CHh, PW, O)
            r = t if r is None else jnp.maximum(r, t)
        cols.append(r)
    res = None
    for rho, rd in _POOL_TAPS:
        t = cols[rho][:, rd:rd + ph, :, :]                     # (NB, PH, PW, O)
        res = t if res is None else jnp.maximum(res, t)
    return res


def _conv_relu_pool_kernel(a_ref, w_ref, b_ref, o_ref, act_sc, **meta):
    o_ref[...] = _conv_relu_pool_body(a_ref, w_ref, b_ref, act_sc,
                                      **meta).astype(o_ref.dtype)


def _conv_pool_mlp_kernel(a_ref, wc_ref, bc_ref, w1_ref, b1_ref, w2_ref, b2_ref,
                          o_ref, act_sc, feat_sc, **meta):
    pooled = _conv_relu_pool_body(a_ref, wc_ref, bc_ref, act_sc, **meta)
    nb = pooled.shape[0]
    for n in range(nb):                    # PH == PW == 1: (NB,1,1,O) -> (NB,O)
        feat_sc[n:n + 1, :] = pooled[n, 0]
    feat = feat_sc[...].astype(jnp.bfloat16)
    h = jnp.dot(feat, w1_ref[...], preferred_element_type=jnp.float32)
    h = jnp.maximum(h + b1_ref[...], 0.0).astype(jnp.bfloat16)
    o_ref[...] = (jnp.dot(h, w2_ref[...], preferred_element_type=jnp.float32)
                  + b2_ref[...])


def _pick_batch_block(n, per_item_bytes, budget=12 * 1024 * 1024):
    """Largest batch block keeping >=2 grid steps (both v7x TCs busy) and the
    double-buffered input block under a VMEM budget.  Falls back to 1."""
    best = 1
    for d in range(1, n + 1):
        if n % d:
            continue
        if n >= 2 and n // d < 2:
            continue
        if 2 * d * per_item_bytes > budget:
            continue
        best = d
    return best


def conv_relu_pool(x, w, b):
    """Fused Conv2d(5, stride 2, valid)+bias+ReLU+MaxPool2d(5, 2); x is NCHW.
    Returns pooled activations as (N, PH, PW, O) in bf16 (channel-last)."""
    O = w.shape[0]
    assert w.shape[2] == w.shape[3] == 5 and w.shape[1] == x.shape[1]
    patches, m = _conv_patches(x)
    N = x.shape[0]
    assert m.PH >= 1 and m.PW >= 1
    assert m.PW + 2 <= m.CWh and m.PH + 2 <= m.CHh   # taps never read padding
    wc, bc = _pack_conv_weights(w, b, m.KP)
    per_item = (m.MP * m.KP * 2 + 2 * m.CHh * 2 * m.CWp * O * 4
                + m.PH * m.PW * O * 2)
    NB = _pick_batch_block(N, per_item)
    kernel = functools.partial(_conv_relu_pool_kernel, nb=NB, chh=m.CHh,
                               cwp=m.CWp, ph=m.PH, pw=m.PW)
    cost = pl.CostEstimate(
        flops=int(2 * N * m.MP * m.KP * O),
        transcendentals=0,
        bytes_accessed=int(patches.size * 2 + wc.size * 2 + bc.size * 4
                           + N * m.PH * m.PW * O * 2))
    return pl.pallas_call(
        kernel,
        grid=(N // NB,),
        in_specs=[
            pl.BlockSpec((NB, m.MP, m.KP), lambda n: (n, 0, 0)),
            pl.BlockSpec((m.KP, O), lambda n: (0, 0)),
            pl.BlockSpec((1, O), lambda n: (0, 0)),
        ],
        out_specs=pl.BlockSpec((NB, m.PH, m.PW, O), lambda n: (n, 0, 0, 0)),
        out_shape=jax.ShapeDtypeStruct((N, m.PH, m.PW, O), jnp.bfloat16),
        scratch_shapes=[pltpu.VMEM((NB, 2, m.CHh, 2 * m.CWp, O), jnp.float32)],
        compiler_params=pltpu.CompilerParams(
            dimension_semantics=("parallel",),
            vmem_limit_bytes=_VMEM_LIMIT),
        cost_estimate=cost,
    )(patches, wc, bc)


def conv_pool_mlp(x, wconv, bconv, w1, b1, w2, b2):
    """Fused conv2+bias+ReLU+pool  +  fc1(+ReLU)  +  fc2, one grid-less call.
    Requires the pooled spatial extent to be 1x1 (whole batch in one block)."""
    O = wconv.shape[0]
    patches, m = _conv_patches(x)
    N = x.shape[0]
    assert m.PH == 1 and m.PW == 1
    assert m.PW + 2 <= m.CWh and m.PH + 2 <= m.CHh
    wc, bc = _pack_conv_weights(wconv, bconv, m.KP)
    H1 = w1.shape[1]
    nc = w2.shape[1]
    kernel = functools.partial(_conv_pool_mlp_kernel, nb=N, chh=m.CHh,
                               cwp=m.CWp, ph=1, pw=1)
    cost = pl.CostEstimate(
        flops=int(2 * N * m.MP * m.KP * O + 2 * N * O * H1 + 2 * N * H1 * nc),
        transcendentals=0,
        bytes_accessed=int(patches.size * 2 + wc.size * 2 + bc.size * 4
                           + w1.size * 2 + w2.size * 2 + N * nc * 4))
    return pl.pallas_call(
        kernel,
        out_shape=jax.ShapeDtypeStruct((N, nc), jnp.float32),
        scratch_shapes=[
            pltpu.VMEM((N, 2, m.CHh, 2 * m.CWp, O), jnp.float32),
            pltpu.VMEM((N, O), jnp.float32),
        ],
        compiler_params=pltpu.CompilerParams(vmem_limit_bytes=_VMEM_LIMIT),
        cost_estimate=cost,
    )(patches, wc, bc,
      w1.astype(jnp.bfloat16), b1.reshape(1, -1).astype(jnp.float32),
      w2.astype(jnp.bfloat16), b2.reshape(1, -1).astype(jnp.float32))


# ------------- standalone MLP (fallback when pooled spatial > 1x1) ---------- #

def _mlp_kernel(x_ref, w1_ref, b1_ref, w2_ref, b2_ref, o_ref):
    h = jnp.dot(x_ref[...], w1_ref[...], preferred_element_type=jnp.float32)
    h = jnp.maximum(h + b1_ref[...], 0.0).astype(jnp.bfloat16)
    o_ref[...] = (jnp.dot(h, w2_ref[...], preferred_element_type=jnp.float32)
                  + b2_ref[...])


def mlp(x, w1, b1, w2, b2):
    N = x.shape[0]
    nc = w2.shape[1]
    return pl.pallas_call(
        _mlp_kernel,
        out_shape=jax.ShapeDtypeStruct((N, nc), jnp.float32),
        compiler_params=pltpu.CompilerParams(vmem_limit_bytes=_VMEM_LIMIT),
    )(x.astype(jnp.bfloat16),
      w1.astype(jnp.bfloat16), b1.reshape(1, -1).astype(jnp.float32),
      w2.astype(jnp.bfloat16), b2.reshape(1, -1).astype(jnp.float32))


# ------------------------------ model + params ------------------------------ #

def init_params(key, input_size=(1, 64, 64), num_classes=2):
    C, H, W = input_size

    def uniform(k, shape, fan_in):
        bound = 1.0 / (fan_in ** 0.5)
        return jax.random.uniform(k, shape, jnp.float32, -bound, bound)

    ks = jax.random.split(key, 8)
    oh, ow = H, W
    for _ in range(4):                 # conv1 -> pool -> conv2 -> pool (k=5, s=2)
        oh = (oh - 5) // 2 + 1
        ow = (ow - 5) // 2 + 1
    output_size = 64 * oh * ow

    return {
        "conv1_w": uniform(ks[0], (32, C, 5, 5), C * 25),
        "conv1_b": uniform(ks[1], (32,), C * 25),
        "conv2_w": uniform(ks[2], (64, 32, 5, 5), 32 * 25),
        "conv2_b": uniform(ks[3], (64,), 32 * 25),
        "fc1_w": uniform(ks[4], (output_size, 128), output_size),  # stored (in, out)
        "fc1_b": uniform(ks[5], (128,), output_size),
        "fc2_w": uniform(ks[6], (128, num_classes), 128),
        "fc2_b": uniform(ks[7], (num_classes,), 128),
    }


def forward(params, x):
    # Stage 1: conv1 + bias + ReLU + pool, one fused kernel -> (N, PH1, PW1, 32)
    y = conv_relu_pool(x, params["conv1_w"], params["conv1_b"])
    x2 = y.transpose(0, 3, 1, 2)                  # NCHW for the stage-2 im2col
    N, _, H2, W2 = x2.shape
    CH2, CW2 = (H2 - 5) // 2 + 1, (W2 - 5) // 2 + 1
    PH2, PW2 = (CH2 - 5) // 2 + 1, (CW2 - 5) // 2 + 1
    if PH2 == 1 and PW2 == 1:
        # Stage 2: conv2 + bias + ReLU + pool + fc1(+ReLU) + fc2, all fused.
        return conv_pool_mlp(x2, params["conv2_w"], params["conv2_b"],
                             params["fc1_w"], params["fc1_b"],
                             params["fc2_w"], params["fc2_b"])
    # General fallback (pooled spatial > 1x1, e.g. the 128x862 spectrogram cfg).
    y2 = conv_relu_pool(x2, params["conv2_w"], params["conv2_b"])
    feat = y2.transpose(0, 3, 1, 2).reshape(N, -1)  # PyTorch (C,H,W) flatten order
    return mlp(feat, params["fc1_w"], params["fc1_b"],
               params["fc2_w"], params["fc2_b"])


def reference_forward(params, x):
    """Pure-JAX (XLA, f32) reference for correctness checking."""
    def conv(x, w, b):
        y = jax.lax.conv_general_dilated(
            x, w, (2, 2), "VALID", dimension_numbers=("NCHW", "OIHW", "NCHW"))
        return y + b.reshape(1, -1, 1, 1)

    def pool(x):
        return jax.lax.reduce_window(
            x, -jnp.inf, jax.lax.max, (1, 1, 5, 5), (1, 1, 2, 2), "VALID")

    x = pool(jax.nn.relu(conv(x, params["conv1_w"], params["conv1_b"])))
    x = pool(jax.nn.relu(conv(x, params["conv2_w"], params["conv2_b"])))
    x = x.reshape(x.shape[0], -1)
    x = jax.nn.relu(x @ params["fc1_w"] + params["fc1_b"])
    return x @ params["fc2_w"] + params["fc2_b"]


if __name__ == "__main__":
    key = jax.random.PRNGKey(0)
    k_params, k_x = jax.random.split(key)

    # input_size=(1, 64, 64): conv1 -> 30x30, pool -> 13x13, conv2 -> 5x5,
    # pool -> 1x1, flatten = 64, fc1: 64 -> 128, fc2: 128 -> 2.
    params = init_params(k_params, input_size=(1, 64, 64), num_classes=2)
    x = jax.random.normal(k_x, (2, 1, 64, 64), dtype=jnp.float32)

    out = jax.block_until_ready(jax.jit(forward)(params, x))
    ref = jax.block_until_ready(jax.jit(reference_forward)(params, x))

    assert out.shape == (2, 2), out.shape
    # bf16 MXU inputs (f32 accumulate) vs the f32 XLA reference -> loosened tol;
    # structural bugs would show as O(0.1+) errors, bf16 noise is ~5e-3.
    assert jnp.allclose(out, ref, atol=5e-2, rtol=5e-2), (out, ref)
    print("KERNEL_OK")
</pallas_src>

<mosaic_0001>
module attributes {stable_mosaic.version = 11 : i64} {
  func.func @_conv_relu_pool_kernel(%arg0: i32, %arg1: memref<1x960x128xbf16, #tpu.memory_space<vmem>>, %arg2: memref<128x32xbf16, #tpu.memory_space<vmem>>, %arg3: memref<1x32xf32, #tpu.memory_space<vmem>>, %arg4: memref<1x13x13x32xbf16, #tpu.memory_space<vmem>>, %arg5: memref<1x2x15x32x32xf32, #tpu.memory_space<vmem>>) attributes {dimension_semantics = [#tpu.dimension_semantics<parallel>], iteration_bounds = array<i64: 2>, scalar_prefetch = 0 : i64, scratch_operands = 1 : i64, tpu.core_type = #tpu.core_type<tc>, window_params = [{transform_indices = @transform_0, window_bounds = array<i64: 1, 960, 128>}, {pipeline_mode = #tpu.pipeline_mode<synchronous>, transform_indices = @transform_1, window_bounds = array<i64: 128, 32>}, {pipeline_mode = #tpu.pipeline_mode<synchronous>, transform_indices = @transform_2, window_bounds = array<i64: 1, 32>}, {transform_indices = @transform_3, window_bounds = array<i64: 1, 13, 13, 32>}]} {
    %c0 = arith.constant 0 : index
    %c0_0 = arith.constant 0 : index
    %c0_1 = arith.constant 0 : index
    %0 = vector.load %arg1[%c0, %c0_0, %c0_1] : memref<1x960x128xbf16, #tpu.memory_space<vmem>>, vector<1x960x128xbf16>
    %1 = vector.shape_cast %0 : vector<1x960x128xbf16> to vector<960x128xbf16>
    %c0_2 = arith.constant 0 : index
    %c0_3 = arith.constant 0 : index
    %2 = vector.load %arg2[%c0_2, %c0_3] : memref<128x32xbf16, #tpu.memory_space<vmem>>, vector<128x32xbf16>
    %cst = arith.constant dense<0.000000e+00> : vector<960x32xf32>
    %3 = tpu.matmul %1, %2, %cst {dimension_numbers = #tpu.dot_dimension_numbers<[1], [0], [0], [1], [0, 0, 1, 1], [], []>} : vector<960x128xbf16>, vector<128x32xbf16>, vector<960x32xf32> -> vector<960x32xf32>
    %c0_4 = arith.constant 0 : index
    %c0_5 = arith.constant 0 : index
    %4 = vector.load %arg3[%c0_4, %c0_5] : memref<1x32xf32, #tpu.memory_space<vmem>>, vector<1x32xf32>
    %5 = vector.broadcast %4 : vector<1x32xf32> to vector<960x32xf32>
    %6 = arith.addf %3, %5 : vector<960x32xf32>
    %cst_6 = arith.constant 0.000000e+00 : f32
    %7 = vector.broadcast %cst_6 : f32 to vector<960x32xf32>
    %8 = arith.maximumf %6, %7 : vector<960x32xf32>
    %9 = vector.shape_cast %8 : vector<960x32xf32> to vector<1x2x15x32x32xf32>
    %c0_7 = arith.constant 0 : index
    %c0_8 = arith.constant 0 : index
    %c0_9 = arith.constant 0 : index
    %c0_10 = arith.constant 0 : index
    %c0_11 = arith.constant 0 : index
    %10 = vector.load %arg5[%c0_7, %c0_8, %c0_9, %c0_10, %c0_11] : memref<1x2x15x32x32xf32, #tpu.memory_space<vmem>>, vector<1x2x15x32x32xf32>
    tpu.vector_store %arg5[%c0_7, %c0_8, %c0_9, %c0_10, %c0_11], %9 {strides = array<i32>} : memref<1x2x15x32x32xf32, #tpu.memory_space<vmem>>, vector<1x2x15x32x32xf32>,
    %c0_12 = arith.constant 0 : index
    %c0_13 = arith.constant 0 : index
    %c0_14 = arith.constant 0 : index
    %c0_15 = arith.constant 0 : index
    %c0_16 = arith.constant 0 : index
    %11 = vector.load %arg5[%c0_12, %c0_13, %c0_14, %c0_15, %c0_16] : memref<1x2x15x32x32xf32, #tpu.memory_space<vmem>>, vector<1x1x15x13x32xf32>
    %12 = vector.shape_cast %11 : vector<1x1x15x13x32xf32> to vector<1x15x13x32xf32>
    %c0_17 = arith.constant 0 : index
    %c0_18 = arith.constant 0 : index
    %c0_19 = arith.constant 0 : index
    %c16 = arith.constant 16 : index
    %c0_20 = arith.constant 0 : index
    %13 = vector.load %arg5[%c0_17, %c0_18, %c0_19, %c16, %c0_20] : memref<1x2x15x32x32xf32, #tpu.memory_space<vmem>>, vector<1x1x15x13x32xf32>
    %14 = vector.shape_cast %13 : vector<1x1x15x13x32xf32> to vector<1x15x13x32xf32>
    %15 = arith.maximumf %12, %14 : vector<1x15x13x32xf32>
    %c0_21 = arith.constant 0 : index
    %c0_22 = arith.constant 0 : index
    %c0_23 = arith.constant 0 : index
    %c1 = arith.constant 1 : index
    %c0_24 = arith.constant 0 : index
    %16 = vector.load %arg5[%c0_21, %c0_22, %c0_23, %c1, %c0_24] : memref<1x2x15x32x32xf32, #tpu.memory_space<vmem>>, vector<1x1x15x13x32xf32>
    %17 = vector.shape_cast %16 : vector<1x1x15x13x32xf32> to vector<1x15x13x32xf32>
    %18 = arith.maximumf %15, %17 : vector<1x15x13x32xf32>
    %c0_25 = arith.constant 0 : index
    %c0_26 = arith.constant 0 : index
    %c0_27 = arith.constant 0 : index
    %c17 = arith.constant 17 : index
    %c0_28 = arith.constant 0 : index
    %19 = vector.load %arg5[%c0_25, %c0_26, %c0_27, %c17, %c0_28] : memref<1x2x15x32x32xf32, #tpu.memory_space<vmem>>, vector<1x1x15x13x32xf32>
    %20 = vector.shape_cast %19 : vector<1x1x15x13x32xf32> to vector<1x15x13x32xf32>
    %21 = arith.maximumf %18, %20 : vector<1x15x13x32xf32>
    %c0_29 = arith.constant 0 : index
    %c0_30 = arith.constant 0 : index
    %c0_31 = arith.constant 0 : index
    %c2 = arith.constant 2 : index
    %c0_32 = arith.constant 0 : index
    %22 = vector.load %arg5[%c0_29, %c0_30, %c0_31, %c2, %c0_32] : memref<1x2x15x32x32xf32, #tpu.memory_space<vmem>>, vector<1x1x15x13x32xf32>
    %23 = vector.shape_cast %22 : vector<1x1x15x13x32xf32> to vector<1x15x13x32xf32>
    %24 = arith.maximumf %21, %23 : vector<1x15x13x32xf32>
    %c0_33 = arith.constant 0 : index
    %c1_34 = arith.constant 1 : index
    %c0_35 = arith.constant 0 : index
    %c0_36 = arith.constant 0 : index
    %c0_37 = arith.constant 0 : index
    %25 = vector.load %arg5[%c0_33, %c1_34, %c0_35, %c0_36, %c0_37] : memref<1x2x15x32x32xf32, #tpu.memory_space<vmem>>, vector<1x1x15x13x32xf32>
    %26 = vector.shape_cast %25 : vector<1x1x15x13x32xf32> to vector<1x15x13x32xf32>
    %c0_38 = arith.constant 0 : index
    %c1_39 = arith.constant 1 : index
    %c0_40 = arith.constant 0 : index
    %c16_41 = arith.constant 16 : index
    %c0_42 = arith.constant 0 : index
    %27 = vector.load %arg5[%c0_38, %c1_39, %c0_40, %c16_41, %c0_42] : memref<1x2x15x32x32xf32, #tpu.memory_space<vmem>>, vector<1x1x15x13x32xf32>
    %28 = vector.shape_cast %27 : vector<1x1x15x13x32xf32> to vector<1x15x13x32xf32>
    %29 = arith.maximumf %26, %28 : vector<1x15x13x32xf32>
    %c0_43 = arith.constant 0 : index
    %c1_44 = arith.constant 1 : index
    %c0_45 = arith.constant 0 : index
    %c1_46 = arith.constant 1 : index
    %c0_47 = arith.constant 0 : index
    %30 = vector.load %arg5[%c0_43, %c1_44, %c0_45, %c1_46, %c0_47] : memref<1x2x15x32x32xf32, #tpu.memory_space<vmem>>, vector<1x1x15x13x32xf32>
    %31 = vector.shape_cast %30 : vector<1x1x15x13x32xf32> to vector<1x15x13x32xf32>
    %32 = arith.maximumf %29, %31 : vector<1x15x13x32xf32>
    %c0_48 = arith.constant 0 : index
    %c1_49 = arith.constant 1 : index
    %c0_50 = arith.constant 0 : index
    %c17_51 = arith.constant 17 : index
    %c0_52 = arith.constant 0 : index
    %33 = vector.load %arg5[%c0_48, %c1_49, %c0_50, %c17_51, %c0_52] : memref<1x2x15x32x32xf32, #tpu.memory_space<vmem>>, vector<1x1x15x13x32xf32>
    %34 = vector.shape_cast %33 : vector<1x1x15x13x32xf32> to vector<1x15x13x32xf32>
    %35 = arith.maximumf %32, %34 : vector<1x15x13x32xf32>
    %c0_53 = arith.constant 0 : index
    %c1_54 = arith.constant 1 : index
    %c0_55 = arith.constant 0 : index
    %c2_56 = arith.constant 2 : index
    %c0_57 = arith.constant 0 : index
    %36 = vector.load %arg5[%c0_53, %c1_54, %c0_55, %c2_56, %c0_57] : memref<1x2x15x32x32xf32, #tpu.memory_space<vmem>>, vector<1x1x15x13x32xf32>
    %37 = vector.shape_cast %36 : vector<1x1x15x13x32xf32> to vector<1x15x13x32xf32>
    %38 = arith.maximumf %35, %37 : vector<1x15x13x32xf32>
    %39 = vector.extract_strided_slice %24 {offsets = [0, 0, 0, 0], sizes = [1, 13, 13, 32], strides = [1, 1, 1, 1]} : vector<1x15x13x32xf32> to vector<1x13x13x32xf32>
    %40 = vector.extract_strided_slice %38 {offsets = [0, 0, 0, 0], sizes = [1, 13, 13, 32], strides = [1, 1, 1, 1]} : vector<1x15x13x32xf32> to vector<1x13x13x32xf32>
    %41 = arith.maximumf %39, %40 : vector<1x13x13x32xf32>
    %42 = vector.extract_strided_slice %24 {offsets = [0, 1, 0, 0], sizes = [1, 13, 13, 32], strides = [1, 1, 1, 1]} : vector<1x15x13x32xf32> to vector<1x13x13x32xf32>
    %43 = arith.maximumf %41, %42 : vector<1x13x13x32xf32>
    %44 = vector.extract_strided_slice %38 {offsets = [0, 1, 0, 0], sizes = [1, 13, 13, 32], strides = [1, 1, 1, 1]} : vector<1x15x13x32xf32> to vector<1x13x13x32xf32>
    %45 = arith.maximumf %43, %44 : vector<1x13x13x32xf32>
    %46 = vector.extract_strided_slice %24 {offsets = [0, 2, 0, 0], sizes = [1, 13, 13, 32], strides = [1, 1, 1, 1]} : vector<1x15x13x32xf32> to vector<1x13x13x32xf32>
    %47 = arith.maximumf %45, %46 : vector<1x13x13x32xf32>
    %48 = arith.truncf %47 : vector<1x13x13x32xf32> to vector<1x13x13x32xbf16>
    %c0_58 = arith.constant 0 : index
    %c0_59 = arith.constant 0 : index
    %c0_60 = arith.constant 0 : index
    %c0_61 = arith.constant 0 : index
    %49 = vector.load %arg4[%c0_58, %c0_59, %c0_60, %c0_61] : memref<1x13x13x32xbf16, #tpu.memory_space<vmem>>, vector<1x13x13x32xbf16>
    tpu.vector_store %arg4[%c0_58, %c0_59, %c0_60, %c0_61], %48 {strides = array<i32>} : memref<1x13x13x32xbf16, #tpu.memory_space<vmem>>, vector<1x13x13x32xbf16>,
    return
  }
  func.func @transform_0(%arg0: i32) -> (i32, i32, i32) {
    %c0_i32 = arith.constant 0 : i32
    %c0_i32_0 = arith.constant 0 : i32
    %c0_i32_1 = arith.constant 0 : i32
    return %arg0, %c0_i32, %c0_i32_0 : i32, i32, i32
  }
  func.func @transform_1(%arg0: i32) -> (i32, i32) {
    %c0_i32 = arith.constant 0 : i32
    %c0_i32_0 = arith.constant 0 : i32
    %c0_i32_1 = arith.constant 0 : i32
    return %c0_i32, %c0_i32_0 : i32, i32
  }
  func.func @transform_2(%arg0: i32) -> (i32, i32) {
    %c0_i32 = arith.constant 0 : i32
    %c0_i32_0 = arith.constant 0 : i32
    %c0_i32_1 = arith.constant 0 : i32
    return %c0_i32, %c0_i32_0 : i32, i32
  }
  func.func @transform_3(%arg0: i32) -> (i32, i32, i32, i32) {
    %c0_i32 = arith.constant 0 : i32
    %c0_i32_0 = arith.constant 0 : i32
    %c0_i32_1 = arith.constant 0 : i32
    %c0_i32_2 = arith.constant 0 : i32
    return %arg0, %c0_i32, %c0_i32_0, %c0_i32_1 : i32, i32, i32, i32
  }
}

module attributes {stable_mosaic.version = 11 : i64} {
  func.func @_conv_pool_mlp_kernel(%arg0: memref<2x96x896xbf16, #tpu.memory_space<vmem>>, %arg1: memref<896x64xbf16, #tpu.memory_space<vmem>>, %arg2: memref<1x64xf32, #tpu.memory_space<vmem>>, %arg3: memref<64x128xbf16, #tpu.memory_space<vmem>>, %arg4: memref<1x128xf32, #tpu.memory_space<vmem>>, %arg5: memref<128x2xbf16, #tpu.memory_space<vmem>>, %arg6: memref<1x2xf32, #tpu.memory_space<vmem>>, %arg7: memref<2x2xf32, #tpu.memory_space<vmem>>, %arg8: memref<2x2x3x16x64xf32, #tpu.memory_space<vmem>>, %arg9: memref<2x64xf32, #tpu.memory_space<vmem>>) attributes {dimension_semantics = [], scalar_prefetch = 0 : i64, scratch_operands = 2 : i64, tpu.core_type = #tpu.core_type<tc>} {
    %c0 = arith.constant 0 : index
    %c0_0 = arith.constant 0 : index
    %c0_1 = arith.constant 0 : index
    %0 = vector.load %arg0[%c0, %c0_0, %c0_1] : memref<2x96x896xbf16, #tpu.memory_space<vmem>>, vector<2x96x896xbf16>
    %1 = vector.shape_cast %0 : vector<2x96x896xbf16> to vector<192x896xbf16>
    %c0_2 = arith.constant 0 : index
    %c0_3 = arith.constant 0 : index
    %2 = vector.load %arg1[%c0_2, %c0_3] : memref<896x64xbf16, #tpu.memory_space<vmem>>, vector<896x64xbf16>
    %cst = arith.constant dense<0.000000e+00> : vector<192x64xf32>
    %3 = tpu.matmul %1, %2, %cst {dimension_numbers = #tpu.dot_dimension_numbers<[1], [0], [0], [1], [0, 0, 1, 1], [], []>} : vector<192x896xbf16>, vector<896x64xbf16>, vector<192x64xf32> -> vector<192x64xf32>
    %c0_4 = arith.constant 0 : index
    %c0_5 = arith.constant 0 : index
    %4 = vector.load %arg2[%c0_4, %c0_5] : memref<1x64xf32, #tpu.memory_space<vmem>>, vector<1x64xf32>
    %5 = vector.broadcast %4 : vector<1x64xf32> to vector<192x64xf32>
    %6 = arith.addf %3, %5 : vector<192x64xf32>
    %cst_6 = arith.constant 0.000000e+00 : f32
    %7 = vector.broadcast %cst_6 : f32 to vector<192x64xf32>
    %8 = arith.maximumf %6, %7 : vector<192x64xf32>
    %9 = vector.shape_cast %8 : vector<192x64xf32> to vector<2x2x3x16x64xf32>
    %c0_7 = arith.constant 0 : index
    %c0_8 = arith.constant 0 : index
    %c0_9 = arith.constant 0 : index
    %c0_10 = arith.constant 0 : index
    %c0_11 = arith.constant 0 : index
    %10 = vector.load %arg8[%c0_7, %c0_8, %c0_9, %c0_10, %c0_11] : memref<2x2x3x16x64xf32, #tpu.memory_space<vmem>>, vector<2x2x3x16x64xf32>
    tpu.vector_store %arg8[%c0_7, %c0_8, %c0_9, %c0_10, %c0_11], %9 {strides = array<i32>} : memref<2x2x3x16x64xf32, #tpu.memory_space<vmem>>, vector<2x2x3x16x64xf32>,
    %c0_12 = arith.constant 0 : index
    %c0_13 = arith.constant 0 : index
    %c0_14 = arith.constant 0 : index
    %c0_15 = arith.constant 0 : index
    %c0_16 = arith.constant 0 : index
    %11 = vector.load %arg8[%c0_12, %c0_13, %c0_14, %c0_15, %c0_16] : memref<2x2x3x16x64xf32, #tpu.memory_space<vmem>>, vector<2x1x3x1x64xf32>
    %12 = vector.shape_cast %11 : vector<2x1x3x1x64xf32> to vector<2x3x1x64xf32>
    %c0_17 = arith.constant 0 : index
    %c0_18 = arith.constant 0 : index
    %c0_19 = arith.constant 0 : index
    %c8 = arith.constant 8 : index
    %c0_20 = arith.constant 0 : index
    %13 = vector.load %arg8[%c0_17, %c0_18, %c0_19, %c8, %c0_20] : memref<2x2x3x16x64xf32, #tpu.memory_space<vmem>>, vector<2x1x3x1x64xf32>
    %14 = vector.shape_cast %13 : vector<2x1x3x1x64xf32> to vector<2x3x1x64xf32>
    %15 = arith.maximumf %12, %14 : vector<2x3x1x64xf32>
    %c0_21 = arith.constant 0 : index
    %c0_22 = arith.constant 0 : index
    %c0_23 = arith.constant 0 : index
    %c1 = arith.constant 1 : index
    %c0_24 = arith.constant 0 : index
    %16 = vector.load %arg8[%c0_21, %c0_22, %c0_23, %c1, %c0_24] : memref<2x2x3x16x64xf32, #tpu.memory_space<vmem>>, vector<2x1x3x1x64xf32>
    %17 = vector.shape_cast %16 : vector<2x1x3x1x64xf32> to vector<2x3x1x64xf32>
    %18 = arith.maximumf %15, %17 : vector<2x3x1x64xf32>
    %c0_25 = arith.constant 0 : index
    %c0_26 = arith.constant 0 : index
    %c0_27 = arith.constant 0 : index
    %c9 = arith.constant 9 : index
    %c0_28 = arith.constant 0 : index
    %19 = vector.load %arg8[%c0_25, %c0_26, %c0_27, %c9, %c0_28] : memref<2x2x3x16x64xf32, #tpu.memory_space<vmem>>, vector<2x1x3x1x64xf32>
    %20 = vector.shape_cast %19 : vector<2x1x3x1x64xf32> to vector<2x3x1x64xf32>
    %21 = arith.maximumf %18, %20 : vector<2x3x1x64xf32>
    %c0_29 = arith.constant 0 : index
    %c0_30 = arith.constant 0 : index
    %c0_31 = arith.constant 0 : index
    %c2 = arith.constant 2 : index
    %c0_32 = arith.constant 0 : index
    %22 = vector.load %arg8[%c0_29, %c0_30, %c0_31, %c2, %c0_32] : memref<2x2x3x16x64xf32, #tpu.memory_space<vmem>>, vector<2x1x3x1x64xf32>
    %23 = vector.shape_cast %22 : vector<2x1x3x1x64xf32> to vector<2x3x1x64xf32>
    %24 = arith.maximumf %21, %23 : vector<2x3x1x64xf32>
    %c0_33 = arith.constant 0 : index
    %c1_34 = arith.constant 1 : index
    %c0_35 = arith.constant 0 : index
    %c0_36 = arith.constant 0 : index
    %c0_37 = arith.constant 0 : index
    %25 = vector.load %arg8[%c0_33, %c1_34, %c0_35, %c0_36, %c0_37] : memref<2x2x3x16x64xf32, #tpu.memory_space<vmem>>, vector<2x1x3x1x64xf32>
    %26 = vector.shape_cast %25 : vector<2x1x3x1x64xf32> to vector<2x3x1x64xf32>
    %c0_38 = arith.constant 0 : index
    %c1_39 = arith.constant 1 : index
    %c0_40 = arith.constant 0 : index
    %c8_41 = arith.constant 8 : index
    %c0_42 = arith.constant 0 : index
    %27 = vector.load %arg8[%c0_38, %c1_39, %c0_40, %c8_41, %c0_42] : memref<2x2x3x16x64xf32, #tpu.memory_space<vmem>>, vector<2x1x3x1x64xf32>
    %28 = vector.shape_cast %27 : vector<2x1x3x1x64xf32> to vector<2x3x1x64xf32>
    %29 = arith.maximumf %26, %28 : vector<2x3x1x64xf32>
    %c0_43 = arith.constant 0 : index
    %c1_44 = arith.constant 1 : index
    %c0_45 = arith.constant 0 : index
    %c1_46 = arith.constant 1 : index
    %c0_47 = arith.constant 0 : index
    %30 = vector.load %arg8[%c0_43, %c1_44, %c0_45, %c1_46, %c0_47] : memref<2x2x3x16x64xf32, #tpu.memory_space<vmem>>, vector<2x1x3x1x64xf32>
    %31 = vector.shape_cast %30 : vector<2x1x3x1x64xf32> to vector<2x3x1x64xf32>
    %32 = arith.maximumf %29, %31 : vector<2x3x1x64xf32>
    %c0_48 = arith.constant 0 : index
    %c1_49 = arith.constant 1 : index
    %c0_50 = arith.constant 0 : index
    %c9_51 = arith.constant 9 : index
    %c0_52 = arith.constant 0 : index
    %33 = vector.load %arg8[%c0_48, %c1_49, %c0_50, %c9_51, %c0_52] : memref<2x2x3x16x64xf32, #tpu.memory_space<vmem>>, vector<2x1x3x1x64xf32>
    %34 = vector.shape_cast %33 : vector<2x1x3x1x64xf32> to vector<2x3x1x64xf32>
    %35 = arith.maximumf %32, %34 : vector<2x3x1x64xf32>
    %c0_53 = arith.constant 0 : index
    %c1_54 = arith.constant 1 : index
    %c0_55 = arith.constant 0 : index
    %c2_56 = arith.constant 2 : index
    %c0_57 = arith.constant 0 : index
    %36 = vector.load %arg8[%c0_53, %c1_54, %c0_55, %c2_56, %c0_57] : memref<2x2x3x16x64xf32, #tpu.memory_space<vmem>>, vector<2x1x3x1x64xf32>
    %37 = vector.shape_cast %36 : vector<2x1x3x1x64xf32> to vector<2x3x1x64xf32>
    %38 = arith.maximumf %35, %37 : vector<2x3x1x64xf32>
    %39 = vector.extract_strided_slice %24 {offsets = [0, 0, 0, 0], sizes = [2, 1, 1, 64], strides = [1, 1, 1, 1]} : vector<2x3x1x64xf32> to vector<2x1x1x64xf32>
    %40 = vector.extract_strided_slice %38 {offsets = [0, 0, 0, 0], sizes = [2, 1, 1, 64], strides = [1, 1, 1, 1]} : vector<2x3x1x64xf32> to vector<2x1x1x64xf32>
    %41 = arith.maximumf %39, %40 : vector<2x1x1x64xf32>
    %42 = vector.extract_strided_slice %24 {offsets = [0, 1, 0, 0], sizes = [2, 1, 1, 64], strides = [1, 1, 1, 1]} : vector<2x3x1x64xf32> to vector<2x1x1x64xf32>
    %43 = arith.maximumf %41, %42 : vector<2x1x1x64xf32>
    %44 = vector.extract_strided_slice %38 {offsets = [0, 1, 0, 0], sizes = [2, 1, 1, 64], strides = [1, 1, 1, 1]} : vector<2x3x1x64xf32> to vector<2x1x1x64xf32>
    %45 = arith.maximumf %43, %44 : vector<2x1x1x64xf32>
    %46 = vector.extract_strided_slice %24 {offsets = [0, 2, 0, 0], sizes = [2, 1, 1, 64], strides = [1, 1, 1, 1]} : vector<2x3x1x64xf32> to vector<2x1x1x64xf32>
    %47 = arith.maximumf %45, %46 : vector<2x1x1x64xf32>
    %48 = vector.extract_strided_slice %47 {offsets = [0, 0, 0, 0], sizes = [1, 1, 1, 64], strides = [1, 1, 1, 1]} : vector<2x1x1x64xf32> to vector<1x1x1x64xf32>
    %49 = vector.shape_cast %48 : vector<1x1x1x64xf32> to vector<1x64xf32>
    %c0_58 = arith.constant 0 : index
    %c0_59 = arith.constant 0 : index
    %50 = vector.load %arg9[%c0_58, %c0_59] : memref<2x64xf32, #tpu.memory_space<vmem>>, vector<1x64xf32>
    tpu.vector_store %arg9[%c0_58, %c0_59], %49 {strides = array<i32>} : memref<2x64xf32, #tpu.memory_space<vmem>>, vector<1x64xf32>,
    %51 = vector.extract_strided_slice %47 {offsets = [1, 0, 0, 0], sizes = [1, 1, 1, 64], strides = [1, 1, 1, 1]} : vector<2x1x1x64xf32> to vector<1x1x1x64xf32>
    %52 = vector.shape_cast %51 : vector<1x1x1x64xf32> to vector<1x64xf32>
    %c1_60 = arith.constant 1 : index
    %c0_61 = arith.constant 0 : index
    %53 = vector.load %arg9[%c1_60, %c0_61] : memref<2x64xf32, #tpu.memory_space<vmem>>, vector<1x64xf32>
    tpu.vector_store %arg9[%c1_60, %c0_61], %52 {strides = array<i32>} : memref<2x64xf32, #tpu.memory_space<vmem>>, vector<1x64xf32>,
    %c0_62 = arith.constant 0 : index
    %c0_63 = arith.constant 0 : index
    %54 = vector.load %arg9[%c0_62, %c0_63] : memref<2x64xf32, #tpu.memory_space<vmem>>, vector<2x64xf32>
    %55 = arith.truncf %54 : vector<2x64xf32> to vector<2x64xbf16>
    %c0_64 = arith.constant 0 : index
    %c0_65 = arith.constant 0 : index
    %56 = vector.load %arg3[%c0_64, %c0_65] : memref<64x128xbf16, #tpu.memory_space<vmem>>, vector<64x128xbf16>
    %cst_66 = arith.constant dense<0.000000e+00> : vector<2x128xf32>
    %57 = tpu.matmul %55, %56, %cst_66 {dimension_numbers = #tpu.dot_dimension_numbers<[1], [0], [0], [1], [0, 0, 1, 1], [], []>} : vector<2x64xbf16>, vector<64x128xbf16>, vector<2x128xf32> -> vector<2x128xf32>
    %c0_67 = arith.constant 0 : index
    %c0_68 = arith.constant 0 : index
    %58 = vector.load %arg4[%c0_67, %c0_68] : memref<1x128xf32, #tpu.memory_space<vmem>>, vector<1x128xf32>
    %59 = vector.broadcast %58 : vector<1x128xf32> to vector<2x128xf32>
    %60 = arith.addf %57, %59 : vector<2x128xf32>
    %cst_69 = arith.constant 0.000000e+00 : f32
    %61 = vector.broadcast %cst_69 : f32 to vector<2x128xf32>
    %62 = arith.maximumf %60, %61 : vector<2x128xf32>
    %63 = arith.truncf %62 : vector<2x128xf32> to vector<2x128xbf16>
    %c0_70 = arith.constant 0 : index
    %c0_71 = arith.constant 0 : index
    %64 = vector.load %arg5[%c0_70, %c0_71] : memref<128x2xbf16, #tpu.memory_space<vmem>>, vector<128x2xbf16>
    %cst_72 = arith.constant dense<0.000000e+00> : vector<2x2xf32>
    %65 = tpu.matmul %63, %64, %cst_72 {dimension_numbers = #tpu.dot_dimension_numbers<[1], [0], [0], [1], [0, 0, 1, 1], [], []>} : vector<2x128xbf16>, vector<128x2xbf16>, vector<2x2xf32> -> vector<2x2xf32>
    %c0_73 = arith.constant 0 : index
    %c0_74 = arith.constant 0 : index
    %66 = vector.load %arg6[%c0_73, %c0_74] : memref<1x2xf32, #tpu.memory_space<vmem>>, vector<1x2xf32>
    %67 = vector.broadcast %66 : vector<1x2xf32> to vector<2x2xf32>
    %68 = arith.addf %65, %67 : vector<2x2xf32>
    %c0_75 = arith.constant 0 : index
    %c0_76 = arith.constant 0 : index
    %69 = vector.load %arg7[%c0_75, %c0_76] : memref<2x2xf32, #tpu.memory_space<vmem>>, vector<2x2xf32>
    tpu.vector_store %arg7[%c0_75, %c0_76], %68 {strides = array<i32>} : memref<2x2xf32, #tpu.memory_space<vmem>>, vector<2x2xf32>,
    return
  }
}

</mosaic_0001>

<llo_original>
// kernel: forward.2
$region0: #{forward.2}
  #allocation0 [shape = 'u32[]', space=smem, size = 0x4, offset = 0x4, fixed_abs, tag = 'smem constant byte address 0x4 - core index']
  #allocation1 [shape = 'u32[144,128]{1,0:T(1,128)}', space=vmem, size = 0x12000, scoped, tag = 'internal scratch']
  #allocation2 [shape = 'f32[1,2,15,32,32]{4,3,2,1,0:T(8,128)}', space=vmem, size = 0x78000, scoped, tag = 'scratch operand']
  %s0 = inlined_call_operand.vmem [shape: bf16[2,960,128], index: 0, kind: input, shape index: {}]
  %s1 = inlined_call_operand.vmem [shape: bf16[128,32], index: 1, kind: input, shape index: {}]
  %s2 = inlined_call_operand.vmem [shape: f32[1,32], index: 2, kind: input, shape index: {}]
  %s3 = inlined_call_operand.vmem [shape: bf16[2,13,13,32], index: 3, kind: output, shape index: {}]
  %s4 = sld [smem:[#allocation0]]
  $region45: #{forward.2} parent=0
    _
  %s6 = ssub.s32 1, %s4
  %s7 = scalar_select 0, %s6, %s4
  loop: start=0, step=1, limit=4
  $region2: #{forward.2} parent=0 // loop_pre_header
    _
  $region3: #{forward.2} parent=0 // loop_header
    %s9 = sphi 0, %s13
    %p10 = scmp.ge.s32.totalorder %s9, 4
    %s19 = sphi 0, %s21
    %s22 = sphi 0, %s19
    %s23 = sphi 0, %s22
    %s39 = sphi 0, %s23
    %s43 = sphi 0, %s43
    %s45 = sphi 0, %s43
    %s46 = sphi 0, %s45
    %s60 = sphi 0, %s46
    %s64 = sphi 0, %s64
    %s66 = sphi 0, %s64
    %s67 = sphi 0, %s66
    %s81 = sphi 0, %s67
    %s87 = sphi 0, %s89
    %s90 = sphi 0, %s87
    %s91 = sphi 0, %s90
    %s107 = sphi 0, %s91
  $region4: #{forward.2} parent=0 // loop_header_branch
    %12 = sbr.rel (%p10) target = $region8
  $region5: #{forward.2} parent=0 // loop_body
    %s14 = ssub.s32 %s9, 1
    %s15 = ssub.s32 %s9, 2
    %s16 = sadd.s32 %s9, 1
    %s17 = ssub.s32 %s9, %s16
    %p18 = scmp.eq.s32.totalorder %s17, 0
    %s20 = sadd.s32 %s19, 1
    %s21 = scalar_select %p18, %s19, %s20
    %p24 = pneg %p18
    %p25 = scmp.eq.s32.totalorder %s9, 1
    %p26 = por %p24, %p25
    %p27 = scmp.ne.s32.totalorder %s19, %s22
    %p28 = scmp.eq.s32.totalorder %s9, 0
    %p29 = por %p27, %p28
    %p30 = scmp.ne.s32.totalorder %s19, %s22
    %p31 = scmp.eq.s32.totalorder %s14, 1
    %p32 = por %p30, %p31
    %p33 = scmp.ne.s32.totalorder %s22, %s23
    %p34 = scmp.eq.s32.totalorder %s14, 0
    %p35 = por %p33, %p34
    %p36 = scmp.ne.s32.totalorder %s22, %s23
    %p37 = scmp.eq.s32.totalorder %s15, 1
    %p38 = por %p36, %p37
    %p40 = scmp.ne.s32.totalorder %s23, %s39
    %p41 = scmp.eq.s32.totalorder %s15, 0
    %p42 = por %p40, %p41
    %s44 = sadd.s32 %s43, 1
    %p47 = scmp.eq.s32.totalorder %s9, 1
    %p48 = scmp.ne.s32.totalorder %s43, %s45
    %p49 = scmp.eq.s32.totalorder %s9, 0
    %p50 = por %p48, %p49
    %p51 = scmp.ne.s32.totalorder %s43, %s45
    %p52 = scmp.eq.s32.totalorder %s14, 1
    %p53 = por %p51, %p52
    %p54 = scmp.ne.s32.totalorder %s45, %s46
    %p55 = scmp.eq.s32.totalorder %s14, 0
    %p56 = por %p54, %p55
    %p57 = scmp.ne.s32.totalorder %s45, %s46
    %p58 = scmp.eq.s32.totalorder %s15, 1
    %p59 = por %p57, %p58
    %p61 = scmp.ne.s32.totalorder %s46, %s60
    %p62 = scmp.eq.s32.totalorder %s15, 0
    %p63 = por %p61, %p62
    %s65 = sadd.s32 %s64, 1
    %p68 = scmp.eq.s32.totalorder %s9, 1
    %p69 = scmp.ne.s32.totalorder %s64, %s66
    %p70 = scmp.eq.s32.totalorder %s9, 0
    %p71 = por %p69, %p70
    %p72 = scmp.ne.s32.totalorder %s64, %s66
    %p73 = scmp.eq.s32.totalorder %s14, 1
    %p74 = por %p72, %p73
    %p75 = scmp.ne.s32.totalorder %s66, %s67
    %p76 = scmp.eq.s32.totalorder %s14, 0
    %p77 = por %p75, %p76
    %p78 = scmp.ne.s32.totalorder %s66, %s67
    %p79 = scmp.eq.s32.totalorder %s15, 1
    %p80 = por %p78, %p79
    %p82 = scmp.ne.s32.totalorder %s67, %s81
    %p83 = scmp.eq.s32.totalorder %s15, 0
    %p84 = por %p82, %p83
    %s85 = ssub.s32 %s9, %s16
    %p86 = scmp.eq.s32.totalorder %s85, 0
    %s88 = sadd.s32 %s87, 1
    %s89 = scalar_select %p86, %s87, %s88
    %p92 = pneg %p86
    %p93 = scmp.eq.s32.totalorder %s9, 1
    %p94 = por %p92, %p93
    %p95 = scmp.ne.s32.totalorder %s87, %s90
    %p96 = scmp.eq.s32.totalorder %s9, 0
    %p97 = por %p95, %p96
    %p98 = scmp.ne.s32.totalorder %s87, %s90
    %p99 = scmp.eq.s32.totalorder %s14, 1
    %p100 = por %p98, %p99
    %p101 = scmp.ne.s32.totalorder %s90, %s91
    %p102 = scmp.eq.s32.totalorder %s14, 0
    %p103 = por %p101, %p102
    %p104 = scmp.ne.s32.totalorder %s90, %s91
    %p105 = scmp.eq.s32.totalorder %s15, 1
    %p106 = por %p104, %p105
    %p108 = scmp.ne.s32.totalorder %s91, %s107
    %p109 = scmp.eq.s32.totalorder %s15, 0
    %p110 = por %p108, %p109
    %p111 = scmp.le.s32.totalorder 1, %s9
    %p112 = scmp.lt.s32.totalorder %s9, 3
    %p113 = pnand %p111, %p112
    %p114 = pneg %p113
    // Predicated region
    $region9: #{forward.2} parent=5 // pred_check
      _
    $region10: #{forward.2} parent=5 // pred_check_branch
      %116 = sbr.rel (%p113) target = $region12
    $region11: #{forward.2} parent=5 // pred_region
      %s117 = ssub.s32 %s9, 1
      // Predicated region
      $region13: #{forward.2} parent=11 // pred_check
        %p118 = pneg %p56
      $region14: #{forward.2} parent=11 // pred_check_branch
        %120 = sbr.rel (%p118) target = $region16
      $region15: #{forward.2} parent=11 // pred_region
        _
      $region16: #{forward.2} parent=11 // pred_fallthru
        _
      // Predicated region
      $region17: #{forward.2} parent=11 // pred_check
        %p121 = pneg %p77
      $region18: #{forward.2} parent=11 // pred_check_branch
        %123 = sbr.rel (%p121) target = $region20
      $region19: #{forward.2} parent=11 // pred_region
        _
      $region20: #{forward.2} parent=11 // pred_fallthru
        _
    $region12: #{forward.2} parent=5 // pred_fallthru
      _
    %p124 = scmp.lt.s32.totalorder %s9, 2
    // Predicated region
    $region21: #{forward.2} parent=5 // pred_check
      %p125 = pneg %p124
    $region22: #{forward.2} parent=5 // pred_check_branch
      %127 = sbr.rel (%p125) target = $region24
    $region23: #{forward.2} parent=5 // pred_region
      // Predicated region
      $region25: #{forward.2} parent=23 // pred_check
        %p128 = pneg %p29
      $region26: #{forward.2} parent=23 // pred_check_branch
        %130 = sbr.rel (%p128) target = $region28
      $region27: #{forward.2} parent=23 // pred_region
        %p131 = scmp.lt.s32.totalorder %s9, 1
        %s132 = scalar_select %p131, %s9, 1
        %s133 = smul.addr %s132, 120
        %s134 = smul.addr %s133, 4
        %s135 = scalar_lea.vmem %s0, %s134
      $region28: #{forward.2} parent=23 // pred_fallthru
        _
    $region24: #{forward.2} parent=5 // pred_fallthru
      _
    %p136 = scmp.le.s32.totalorder 1, %s9
    %p137 = scmp.lt.s32.totalorder %s9, 3
    %p138 = pnand %p136, %p137
    %p139 = pneg %p138
    // Predicated region
    $region29: #{forward.2} parent=5 // pred_check
      _
    $region30: #{forward.2} parent=5 // pred_check_branch
      %141 = sbr.rel (%p138) target = $region32
    $region31: #{forward.2} parent=5 // pred_region
      %s142 = ssub.s32 %s9, 1
      %p143 = scmp.lt.s32.totalorder %s14, 1
      %s144 = scalar_select %p143, %s14, 1
      %s145 = smul.addr %s144, 120
      %s146 = smul.addr %s145, 4
      %s147 = scalar_lea.vmem %s0, %s146
      %p148 = pneg %p35
      %p149 = pneg %p32
      %p150 = pneg %p56
      %p151 = pneg %p53
      %p152 = pneg %p77
      %p153 = pneg %p74
      %p154 = pneg %p103
      %p155 = pneg %p100
      %p156 = scmp.lt.s32.totalorder %s14, 1
      %s157 = scalar_select %p156, %s14, 1
      %s158 = smul.addr %s157, 26
      %s159 = smul.addr %s158, 4
      %s160 = scalar_lea.vmem %s3, %s159
      %p161 = scmp.lt.s32.totalorder %s14, 1
      %s162 = scalar_select %p161, %s14, 1
      %s163 = smul.addr %s162, 120
      %s164 = smul.addr %s163, 4
      %s165 = scalar_lea.vmem %s0, %s164
      %p166 = scmp.lt.s32.totalorder %s14, 1
      %s167 = scalar_select %p166, %s14, 1
      %s168 = smul.addr %s167, 26
      %s169 = smul.addr %s168, 4
      %s170 = scalar_lea.vmem %s3, %s169
      %v172 = vld [vmem:[%s165] sm:$0xf]
      %v173 = vld [vmem:[%s165 + $0x4] sm:$0xf]
      %v174 = vld [vmem:[%s165 + $0x8] sm:$0xf]
      %v175 = vld [vmem:[%s165 + $0xc] sm:$0xf]
      %v176 = vld [vmem:[%s165 + $0x10] sm:$0xf]
      %v177 = vld [vmem:[%s165 + $0x14] sm:$0xf]
      %v178 = vld [vmem:[%s165 + $0x18] sm:$0xf]
      %v179 = vld [vmem:[%s165 + $0x1c] sm:$0xf]
      %v180 = vld [vmem:[%s165 + $0x20] sm:$0xf]
      %v181 = vld [vmem:[%s165 + $0x24] sm:$0xf]
      %v182 = vld [vmem:[%s165 + $0x28] sm:$0xf]
      %v183 = vld [vmem:[%s165 + $0x2c] sm:$0xf]
      %v184 = vld [vmem:[%s165 + $0x30] sm:$0xf]
      %v185 = vld [vmem:[%s165 + $0x34] sm:$0xf]
      %v186 = vld [vmem:[%s165 + $0x38] sm:$0xf]
      %v187 = vld [vmem:[%s165 + $0x3c] sm:$0xf]
      %v188 = vld [vmem:[%s165 + $0x40] sm:$0xf]
      %v189 = vld [vmem:[%s165 + $0x44] sm:$0xf]
      %v190 = vld [vmem:[%s165 + $0x48] sm:$0xf]
      %v191 = vld [vmem:[%s165 + $0x4c] sm:$0xf]
      %v192 = vld [vmem:[%s165 + $0x50] sm:$0xf]
      %v193 = vld [vmem:[%s165 + $0x54] sm:$0xf]
      %v194 = vld [vmem:[%s165 + $0x58] sm:$0xf]
      %v195 = vld [vmem:[%s165 + $0x5c] sm:$0xf]
      %v196 = vld [vmem:[%s165 + $0x60] sm:$0xf]
      %v197 = vld [vmem:[%s165 + $0x64] sm:$0xf]
      %v198 = vld [vmem:[%s165 + $0x68] sm:$0xf]
      %v199 = vld [vmem:[%s165 + $0x6c] sm:$0xf]
      %v200 = vld [vmem:[%s165 + $0x70] sm:$0xf]
      %v201 = vld [vmem:[%s165 + $0x74] sm:$0xf]
      %v202 = vld [vmem:[%s165 + $0x78] sm:$0xf]
      %v203 = vld [vmem:[%s165 + $0x7c] sm:$0xf]
      %v204 = vld [vmem:[%s165 + $0x80] sm:$0xf]
      %v205 = vld [vmem:[%s165 + $0x84] sm:$0xf]
      %v206 = vld [vmem:[%s165 + $0x88] sm:$0xf]
      %v207 = vld [vmem:[%s165 + $0x8c] sm:$0xf]
      %v208 = vld [vmem:[%s165 + $0x90] sm:$0xf]
      %v209 = vld [vmem:[%s165 + $0x94] sm:$0xf]
      %v210 = vld [vmem:[%s165 + $0x98] sm:$0xf]
      %v211 = vld [vmem:[%s165 + $0x9c] sm:$0xf]
      %v212 = vld [vmem:[%s165 + $0xa0] sm:$0xf]
      %v213 = vld [vmem:[%s165 + $0xa4] sm:$0xf]
      %v214 = vld [vmem:[%s165 + $0xa8] sm:$0xf]
      %v215 = vld [vmem:[%s165 + $0xac] sm:$0xf]
      %v216 = vld [vmem:[%s165 + $0xb0] sm:$0xf]
      %v217 = vld [vmem:[%s165 + $0xb4] sm:$0xf]
      %v218 = vld [vmem:[%s165 + $0xb8] sm:$0xf]
      %v219 = vld [vmem:[%s165 + $0xbc] sm:$0xf]
      %v220 = vld [vmem:[%s165 + $0xc0] sm:$0xf]
      %v221 = vld [vmem:[%s165 + $0xc4] sm:$0xf]
      %v222 = vld [vmem:[%s165 + $0xc8] sm:$0xf]
      %v223 = vld [vmem:[%s165 + $0xcc] sm:$0xf]
      %v224 = vld [vmem:[%s165 + $0xd0] sm:$0xf]
      %v225 = vld [vmem:[%s165 + $0xd4] sm:$0xf]
      %v226 = vld [vmem:[%s165 + $0xd8] sm:$0xf]
      %v227 = vld [vmem:[%s165 + $0xdc] sm:$0xf]
      %v228 = vld [vmem:[%s165 + $0xe0] sm:$0xf]
      %v229 = vld [vmem:[%s165 + $0xe4] sm:$0xf]
      %v230 = vld [vmem:[%s165 + $0xe8] sm:$0xf]
      %v231 = vld [vmem:[%s165 + $0xec] sm:$0xf]
      %v232 = vld [vmem:[%s165 + $0xf0] sm:$0xf]
      %v233 = vld [vmem:[%s165 + $0xf4] sm:$0xf]
      %v234 = vld [vmem:[%s165 + $0xf8] sm:$0xf]
      %v235 = vld [vmem:[%s165 + $0xfc] sm:$0xf]
      %v236 = vld [vmem:[%s165 + $0x100] sm:$0xf]
      %v237 = vld [vmem:[%s165 + $0x104] sm:$0xf]
      %v238 = vld [vmem:[%s165 + $0x108] sm:$0xf]
      %v239 = vld [vmem:[%s165 + $0x10c] sm:$0xf]
      %v240 = vld [vmem:[%s165 + $0x110] sm:$0xf]
      %v241 = vld [vmem:[%s165 + $0x114] sm:$0xf]
      %v242 = vld [vmem:[%s165 + $0x118] sm:$0xf]
      %v243 = vld [vmem:[%s165 + $0x11c] sm:$0xf]
      %v244 = vld [vmem:[%s165 + $0x120] sm:$0xf]
      %v245 = vld [vmem:[%s165 + $0x124] sm:$0xf]
      %v246 = vld [vmem:[%s165 + $0x128] sm:$0xf]
      %v247 = vld [vmem:[%s165 + $0x12c] sm:$0xf]
      %v248 = vld [vmem:[%s165 + $0x130] sm:$0xf]
      %v249 = vld [vmem:[%s165 + $0x134] sm:$0xf]
      %v250 = vld [vmem:[%s165 + $0x138] sm:$0xf]
      %v251 = vld [vmem:[%s165 + $0x13c] sm:$0xf]
      %v252 = vld [vmem:[%s165 + $0x140] sm:$0xf]
      %v253 = vld [vmem:[%s165 + $0x144] sm:$0xf]
      %v254 = vld [vmem:[%s165 + $0x148] sm:$0xf]
      %v255 = vld [vmem:[%s165 + $0x14c] sm:$0xf]
      %v256 = vld [vmem:[%s165 + $0x150] sm:$0xf]
      %v257 = vld [vmem:[%s165 + $0x154] sm:$0xf]
      %v258 = vld [vmem:[%s165 + $0x158] sm:$0xf]
      %v259 = vld [vmem:[%s165 + $0x15c] sm:$0xf]
      %v260 = vld [vmem:[%s165 + $0x160] sm:$0xf]
      %v261 = vld [vmem:[%s165 + $0x164] sm:$0xf]
      %v262 = vld [vmem:[%s165 + $0x168] sm:$0xf]
      %v263 = vld [vmem:[%s165 + $0x16c] sm:$0xf]
      %v264 = vld [vmem:[%s165 + $0x170] sm:$0xf]
      %v265 = vld [vmem:[%s165 + $0x174] sm:$0xf]
      %v266 = vld [vmem:[%s165 + $0x178] sm:$0xf]
      %v267 = vld [vmem:[%s165 + $0x17c] sm:$0xf]
      %v268 = vld [vmem:[%s165 + $0x180] sm:$0xf]
      %v269 = vld [vmem:[%s165 + $0x184] sm:$0xf]
      %v270 = vld [vmem:[%s165 + $0x188] sm:$0xf]
      %v271 = vld [vmem:[%s165 + $0x18c] sm:$0xf]
      %v272 = vld [vmem:[%s165 + $0x190] sm:$0xf]
      %v273 = vld [vmem:[%s165 + $0x194] sm:$0xf]
      %v274 = vld [vmem:[%s165 + $0x198] sm:$0xf]
      %v275 = vld [vmem:[%s165 + $0x19c] sm:$0xf]
      %v276 = vld [vmem:[%s165 + $0x1a0] sm:$0xf]
      %v277 = vld [vmem:[%s165 + $0x1a4] sm:$0xf]
      %v278 = vld [vmem:[%s165 + $0x1a8] sm:$0xf]
      %v279 = vld [vmem:[%s165 + $0x1ac] sm:$0xf]
      %v280 = vld [vmem:[%s165 + $0x1b0] sm:$0xf]
      %v281 = vld [vmem:[%s165 + $0x1b4] sm:$0xf]
      %v282 = vld [vmem:[%s165 + $0x1b8] sm:$0xf]
      %v283 = vld [vmem:[%s165 + $0x1bc] sm:$0xf]
      %v284 = vld [vmem:[%s165 + $0x1c0] sm:$0xf]
      %v285 = vld [vmem:[%s165 + $0x1c4] sm:$0xf]
      %v286 = vld [vmem:[%s165 + $0x1c8] sm:$0xf]
      %v287 = vld [vmem:[%s165 + $0x1cc] sm:$0xf]
      %v288 = vld [vmem:[%s165 + $0x1d0] sm:$0xf]
      %v289 = vld [vmem:[%s165 + $0x1d4] sm:$0xf]
      %v290 = vld [vmem:[%s165 + $0x1d8] sm:$0xf]
      %v291 = vld [vmem:[%s165 + $0x1dc] sm:$0xf]
      %v292 = vld [vmem:[%s1] sm:$0xf]
      %v293 = vld [vmem:[%s1 + $0x4] sm:$0xf]
      %v294 = vld [vmem:[%s1 + $0x8] sm:$0xf]
      %v295 = vld [vmem:[%s1 + $0xc] sm:$0xf]
      %v296 = vld [vmem:[%s1 + $0x10] sm:$0xf]
      %v297 = vld [vmem:[%s1 + $0x14] sm:$0xf]
      %v298 = vld [vmem:[%s1 + $0x18] sm:$0xf]
      %v299 = vld [vmem:[%s1 + $0x1c] sm:$0xf]
      %v300 = vld [vmem:[%s1 + $0x20] sm:$0xf]
      %v301 = vld [vmem:[%s1 + $0x24] sm:$0xf]
      %v302 = vld [vmem:[%s1 + $0x28] sm:$0xf]
      %v303 = vld [vmem:[%s1 + $0x2c] sm:$0xf]
      %v304 = vld [vmem:[%s1 + $0x30] sm:$0xf]
      %v305 = vld [vmem:[%s1 + $0x34] sm:$0xf]
      %v306 = vld [vmem:[%s1 + $0x38] sm:$0xf]
      %v307 = vld [vmem:[%s1 + $0x3c] sm:$0xf]
      %v308 = vld [vmem:[%s2] sm:$0x1]
      %v310 = vlaneseq
      %v311 = vshrl.u32 %v310, 7
      %v312 = vsub.s32 0, %v311
      %v313 = vrot.slane %v308, %v312
      %v435 = vunpack.c.l.b16 %v172
      %v436 = vunpack.c.l.b16 %v173
      %v437 = vunpack.c.l.b16 %v174
      %v438 = vunpack.c.l.b16 %v175
      %v439 = vunpack.c.l.b16 %v176
      %v440 = vunpack.c.l.b16 %v177
      %v441 = vunpack.c.l.b16 %v178
      %v442 = vunpack.c.l.b16 %v179
      %v443 = vunpack.c.l.b16 %v180
      %v444 = vunpack.c.l.b16 %v181
      %v445 = vunpack.c.l.b16 %v182
      %v446 = vunpack.c.l.b16 %v183
      %v447 = vunpack.c.l.b16 %v184
      %v448 = vunpack.c.l.b16 %v185
      %v449 = vunpack.c.l.b16 %v186
      %v450 = vunpack.c.l.b16 %v187
      %v451 = vunpack.c.l.b16 %v188
      %v452 = vunpack.c.l.b16 %v189
      %v453 = vunpack.c.l.b16 %v190
      %v454 = vunpack.c.l.b16 %v191
      %v455 = vunpack.c.l.b16 %v192
      %v456 = vunpack.c.l.b16 %v193
      %v457 = vunpack.c.l.b16 %v194
      %v458 = vunpack.c.l.b16 %v195
      %v459 = vunpack.c.l.b16 %v196
      %v460 = vunpack.c.l.b16 %v197
      %v461 = vunpack.c.l.b16 %v198
      %v462 = vunpack.c.l.b16 %v199
      %v463 = vunpack.c.l.b16 %v200
      %v464 = vunpack.c.l.b16 %v201
      %v465 = vunpack.c.l.b16 %v202
      %v466 = vunpack.c.l.b16 %v203
      %v467 = vunpack.c.l.b16 %v204
      %v468 = vunpack.c.l.b16 %v205
      %v469 = vunpack.c.l.b16 %v206
      %v470 = vunpack.c.l.b16 %v207
      %v471 = vunpack.c.l.b16 %v208
      %v472 = vunpack.c.l.b16 %v209
      %v473 = vunpack.c.l.b16 %v210
      %v474 = vunpack.c.l.b16 %v211
      %v475 = vunpack.c.l.b16 %v212
      %v476 = vunpack.c.l.b16 %v213
      %v477 = vunpack.c.l.b16 %v214
      %v478 = vunpack.c.l.b16 %v215
      %v479 = vunpack.c.l.b16 %v216
      %v480 = vunpack.c.l.b16 %v217
      %v481 = vunpack.c.l.b16 %v218
      %v482 = vunpack.c.l.b16 %v219
      %v483 = vunpack.c.l.b16 %v220
      %v484 = vunpack.c.l.b16 %v221
      %v485 = vunpack.c.l.b16 %v222
      %v486 = vunpack.c.l.b16 %v223
      %v487 = vunpack.c.l.b16 %v224
      %v488 = vunpack.c.l.b16 %v225
      %v489 = vunpack.c.l.b16 %v226
      %v490 = vunpack.c.l.b16 %v227
      %v491 = vunpack.c.l.b16 %v228
      %v492 = vunpack.c.l.b16 %v229
      %v493 = vunpack.c.l.b16 %v230
      %v494 = vunpack.c.l.b16 %v231
      %v495 = vunpack.c.l.b16 %v232
      %v496 = vunpack.c.l.b16 %v233
      %v497 = vunpack.c.l.b16 %v234
      %v498 = vunpack.c.l.b16 %v235
      %v499 = vunpack.c.l.b16 %v236
      %v500 = vunpack.c.l.b16 %v237
      %v501 = vunpack.c.l.b16 %v238
      %v502 = vunpack.c.l.b16 %v239
      %v503 = vunpack.c.l.b16 %v240
      %v504 = vunpack.c.l.b16 %v241
      %v505 = vunpack.c.l.b16 %v242
      %v506 = vunpack.c.l.b16 %v243
      %v507 = vunpack.c.l.b16 %v244
      %v508 = vunpack.c.l.b16 %v245
      %v509 = vunpack.c.l.b16 %v246
      %v510 = vunpack.c.l.b16 %v247
      %v511 = vunpack.c.l.b16 %v248
      %v512 = vunpack.c.l.b16 %v249
      %v513 = vunpack.c.l.b16 %v250
      %v514 = vunpack.c.l.b16 %v251
      %v515 = vunpack.c.l.b16 %v252
      %v516 = vunpack.c.l.b16 %v253
      %v517 = vunpack.c.l.b16 %v254
      %v518 = vunpack.c.l.b16 %v255
      %v519 = vunpack.c.l.b16 %v256
      %v520 = vunpack.c.l.b16 %v257
      %v521 = vunpack.c.l.b16 %v258
      %v522 = vunpack.c.l.b16 %v259
      %v523 = vunpack.c.l.b16 %v260
      %v524 = vunpack.c.l.b16 %v261
      %v525 = vunpack.c.l.b16 %v262
      %v526 = vunpack.c.l.b16 %v263
      %v527 = vunpack.c.l.b16 %v264
      %v528 = vunpack.c.l.b16 %v265
      %v529 = vunpack.c.l.b16 %v266
      %v530 = vunpack.c.l.b16 %v267
      %v531 = vunpack.c.l.b16 %v268
      %v532 = vunpack.c.l.b16 %v269
      %v533 = vunpack.c.l.b16 %v270
      %v534 = vunpack.c.l.b16 %v271
      %v535 = vunpack.c.l.b16 %v272
      %v536 = vunpack.c.l.b16 %v273
      %v537 = vunpack.c.l.b16 %v274
      %v538 = vunpack.c.l.b16 %v275
      %v539 = vunpack.c.l.b16 %v276
      %v540 = vunpack.c.l.b16 %v277
      %v541 = vunpack.c.l.b16 %v278
      %v542 = vunpack.c.l.b16 %v279
      %v543 = vunpack.c.l.b16 %v280
      %v544 = vunpack.c.l.b16 %v281
      %v545 = vunpack.c.l.b16 %v282
      %v546 = vunpack.c.l.b16 %v283
      %v547 = vunpack.c.l.b16 %v284
      %v548 = vunpack.c.l.b16 %v285
      %v549 = vunpack.c.l.b16 %v286
      %v550 = vunpack.c.l.b16 %v287
      %v551 = vunpack.c.l.b16 %v288
      %v552 = vunpack.c.l.b16 %v289
      %v553 = vunpack.c.l.b16 %v290
      %v554 = vunpack.c.l.b16 %v291
      %v555 = vpack.c.b16 %v436, %v435
      %v556 = vpack.c.b16 %v438, %v437
      %v557 = vpack.c.b16 %v440, %v439
      %v558 = vpack.c.b16 %v442, %v441
      %v559 = vpack.c.b16 %v444, %v443
      %v560 = vpack.c.b16 %v446, %v445
      %v561 = vpack.c.b16 %v448, %v447
      %v562 = vpack.c.b16 %v450, %v449
      %v563 = vpack.c.b16 %v452, %v451
      %v564 = vpack.c.b16 %v454, %v453
      %v565 = vpack.c.b16 %v456, %v455
      %v566 = vpack.c.b16 %v458, %v457
      %v567 = vpack.c.b16 %v460, %v459
      %v568 = vpack.c.b16 %v462, %v461
      %v569 = vpack.c.b16 %v464, %v463
      %v570 = vpack.c.b16 %v466, %v465
      %v571 = vpack.c.b16 %v468, %v467
      %v572 = vpack.c.b16 %v470, %v469
      %v573 = vpack.c.b16 %v472, %v471
      %v574 = vpack.c.b16 %v474, %v473
      %v575 = vpack.c.b16 %v476, %v475
      %v576 = vpack.c.b16 %v478, %v477
      %v577 = vpack.c.b16 %v480, %v479
      %v578 = vpack.c.b16 %v482, %v481
      %v579 = vpack.c.b16 %v484, %v483
      %v580 = vpack.c.b16 %v486, %v485
      %v581 = vpack.c.b16 %v488, %v487
      %v582 = vpack.c.b16 %v490, %v489
      %v583 = vpack.c.b16 %v492, %v491
      %v584 = vpack.c.b16 %v494, %v493
      %v585 = vpack.c.b16 %v496, %v495
      %v586 = vpack.c.b16 %v498, %v497
      %v587 = vpack.c.b16 %v500, %v499
      %v588 = vpack.c.b16 %v502, %v501
      %v589 = vpack.c.b16 %v504, %v503
      %v590 = vpack.c.b16 %v506, %v505
      %v591 = vpack.c.b16 %v508, %v507
      %v592 = vpack.c.b16 %v510, %v509
      %v593 = vpack.c.b16 %v512, %v511
      %v594 = vpack.c.b16 %v514, %v513
      %v595 = vpack.c.b16 %v516, %v515
      %v596 = vpack.c.b16 %v518, %v517
      %v597 = vpack.c.b16 %v520, %v519
      %v598 = vpack.c.b16 %v522, %v521
      %v599 = vpack.c.b16 %v524, %v523
      %v600 = vpack.c.b16 %v526, %v525
      %v601 = vpack.c.b16 %v528, %v527
      %v602 = vpack.c.b16 %v530, %v529
      %v603 = vpack.c.b16 %v532, %v531
      %v604 = vpack.c.b16 %v534, %v533
      %v605 = vpack.c.b16 %v536, %v535
      %v606 = vpack.c.b16 %v538, %v537
      %v607 = vpack.c.b16 %v540, %v539
      %v608 = vpack.c.b16 %v542, %v541
      %v609 = vpack.c.b16 %v544, %v543
      %v610 = vpack.c.b16 %v546, %v545
      %v611 = vpack.c.b16 %v548, %v547
      %v612 = vpack.c.b16 %v550, %v549
      %v613 = vpack.c.b16 %v552, %v551
      %v614 = vpack.c.b16 %v554, %v553
      %v691 = vunpack.c.l.b16 %v292
      %v692 = vunpack.c.l.b16 %v293
      %v693 = vunpack.c.l.b16 %v294
      %v694 = vunpack.c.l.b16 %v295
      %v695 = vunpack.c.l.b16 %v296
      %v696 = vunpack.c.l.b16 %v297
      %v697 = vunpack.c.l.b16 %v298
      %v698 = vunpack.c.l.b16 %v299
      %v699 = vunpack.c.l.b16 %v300
      %v700 = vunpack.c.l.b16 %v301
      %v701 = vunpack.c.l.b16 %v302
      %v702 = vunpack.c.l.b16 %v303
      %v703 = vunpack.c.l.b16 %v304
      %v704 = vunpack.c.l.b16 %v305
      %v705 = vunpack.c.l.b16 %v306
      %v706 = vunpack.c.l.b16 %v307
      %v707 = vpack.c.b16 %v692, %v691
      %v708 = vpack.c.b16 %v694, %v693
      %v709 = vpack.c.b16 %v696, %v695
      %v710 = vpack.c.b16 %v698, %v697
      %v711 = vpack.c.b16 %v700, %v699
      %v712 = vpack.c.b16 %v702, %v701
      %v713 = vpack.c.b16 %v704, %v703
      %v714 = vpack.c.b16 %v706, %v705
      %723 = vmatprep.subr.bf16.mxu0 0
      %724 = vmatpush1.bf16.msra.mxu0 %v707
      %725 = vmatprep.subr.bf16.mxu0 0
      %726 = vmatpush1.bf16.msra.mxu0 %v708
      %727 = vmatprep.subr.bf16.mxu0 0
      %728 = vmatpush1.bf16.msra.mxu0 %v709
      %729 = vmatprep.subr.bf16.mxu0 0
      %730 = vmatpush1.bf16.msra.mxu0 %v710
      %731 = vmatprep.subr.bf16.mxu0 0
      %732 = vmatpush1.bf16.msra.mxu0 %v711
      %733 = vmatprep.subr.bf16.mxu0 0
      %734 = vmatpush1.bf16.msra.mxu0 %v712
      %735 = vmatprep.subr.bf16.mxu0 0
      %736 = vmatpush1.bf16.msra.mxu0 %v713
      %737 = vmatprep.subr.bf16.mxu0 0
      %738 = vmatpush1.bf16.msra.mxu0 %v714
      %739 = vmatprep.subr.bf16.mxu0 0
      %740 = vmatpush1.bf16.msra.mxu0 0
      %741 = vmatprep.subr.bf16.mxu0 0
      %742 = vmatpush1.bf16.msra.mxu0 0
      %743 = vmatprep.subr.bf16.mxu0 0
      %744 = vmatpush1.bf16.msra.mxu0 0
      %745 = vmatprep.subr.bf16.mxu0 0
      %746 = vmatpush1.bf16.msra.mxu0 0
      %747 = vmatprep.subr.bf16.mxu0 0
      %748 = vmatpush1.bf16.msra.mxu0 0
      %749 = vmatprep.subr.bf16.mxu0 0
      %750 = vmatpush1.bf16.msra.mxu0 0
      %751 = vmatprep.subr.bf16.mxu0 0
      %752 = vmatpush1.bf16.msra.mxu0 0
      %753 = vmatprep.subr.bf16.mxu0 0
      %754 = vmatpush1.bf16.msra.mxu0 0
      %755 = vmatprep.mubr.bf16.mxu0 0
      %756 = vmatmul.mubr.bf16.gmra.mrb[0].mxu0 %v555
      %v757 = vpop.f32.mrb[0].mxu0
      %v758 = vadd.f32 %v313, %v757
      %v759 = vpop.f32.mrb[0].mxu0
      %v760 = vpop.f32.mrb[0].mxu0
      %v761 = vadd.f32 %v313, %v760
      %v762 = vpop.f32.mrb[0].mxu0
      %763 = vmatprep.mubr.bf16.mxu0 0
      %764 = vmatmul.mubr.bf16.gmra.mrb[0].mxu0 %v556
      %v765 = vpop.f32.mrb[0].mxu0
      %v766 = vadd.f32 %v313, %v765
      %v767 = vpop.f32.mrb[0].mxu0
      %v768 = vpop.f32.mrb[0].mxu0
      %v769 = vadd.f32 %v313, %v768
      %v770 = vpop.f32.mrb[0].mxu0
      %771 = vmatprep.mubr.bf16.mxu0 0
      %772 = vmatmul.mubr.bf16.gmra.mrb[0].mxu0 %v557
      %v773 = vpop.f32.mrb[0].mxu0
      %v774 = vadd.f32 %v313, %v773
      %v775 = vpop.f32.mrb[0].mxu0
      %v776 = vpop.f32.mrb[0].mxu0
      %v777 = vadd.f32 %v313, %v776
      %v778 = vpop.f32.mrb[0].mxu0
      %779 = vmatprep.mubr.bf16.mxu0 0
      %780 = vmatmul.mubr.bf16.gmra.mrb[0].mxu0 %v558
      %v781 = vpop.f32.mrb[0].mxu0
      %v782 = vadd.f32 %v313, %v781
      %v783 = vpop.f32.mrb[0].mxu0
      %v784 = vpop.f32.mrb[0].mxu0
      %v785 = vadd.f32 %v313, %v784
      %v786 = vpop.f32.mrb[0].mxu0
      %787 = vmatprep.mubr.bf16.mxu0 0
      %788 = vmatmul.mubr.bf16.gmra.mrb[0].mxu0 %v559
      %v789 = vpop.f32.mrb[0].mxu0
      %v790 = vadd.f32 %v313, %v789
      %v791 = vpop.f32.mrb[0].mxu0
      %v792 = vpop.f32.mrb[0].mxu0
      %v793 = vadd.f32 %v313, %v792
      %v794 = vpop.f32.mrb[0].mxu0
      %795 = vmatprep.mubr.bf16.mxu0 0
      %796 = vmatmul.mubr.bf16.gmra.mrb[0].mxu0 %v560
      %v797 = vpop.f32.mrb[0].mxu0
      %v798 = vadd.f32 %v313, %v797
      %v799 = vpop.f32.mrb[0].mxu0
      %v800 = vpop.f32.mrb[0].mxu0
      %v801 = vadd.f32 %v313, %v800
      %v802 = vpop.f32.mrb[0].mxu0
      %803 = vmatprep.mubr.bf16.mxu0 0
      %804 = vmatmul.mubr.bf16.gmra.mrb[0].mxu0 %v561
      %v805 = vpop.f32.mrb[0].mxu0
      %v806 = vadd.f32 %v313, %v805
      %v807 = vpop.f32.mrb[0].mxu0
      %v808 = vpop.f32.mrb[0].mxu0
      %v809 = vadd.f32 %v313, %v808
      %v810 = vpop.f32.mrb[0].mxu0
      %811 = vmatprep.mubr.bf16.mxu0 0
      %812 = vmatmul.mubr.bf16.gmra.mrb[0].mxu0 %v562
      %v813 = vpop.f32.mrb[0].mxu0
      %v814 = vadd.f32 %v313, %v813
      %v815 = vpop.f32.mrb[0].mxu0
      %v816 = vpop.f32.mrb[0].mxu0
      %v817 = vadd.f32 %v313, %v816
      %v818 = vpop.f32.mrb[0].mxu0
      %819 = vmatprep.mubr.bf16.mxu0 0
      %820 = vmatmul.mubr.bf16.gmra.mrb[0].mxu0 %v563
      %v821 = vpop.f32.mrb[0].mxu0
      %v822 = vadd.f32 %v313, %v821
      %v823 = vpop.f32.mrb[0].mxu0
      %v824 = vpop.f32.mrb[0].mxu0
      %v825 = vadd.f32 %v313, %v824
      %v826 = vpop.f32.mrb[0].mxu0
      %827 = vmatprep.mubr.bf16.mxu0 0
      %828 = vmatmul.mubr.bf16.gmra.mrb[0].mxu0 %v564
      %v829 = vpop.f32.mrb[0].mxu0
      %v830 = vadd.f32 %v313, %v829
      %v831 = vpop.f32.mrb[0].mxu0
      %v832 = vpop.f32.mrb[0].mxu0
      %v833 = vadd.f32 %v313, %v832
      %v834 = vpop.f32.mrb[0].mxu0
      %835 = vmatprep.mubr.bf16.mxu0 0
      %836 = vmatmul.mubr.bf16.gmra.mrb[0].mxu0 %v565
      %v837 = vpop.f32.mrb[0].mxu0
      %v838 = vadd.f32 %v313, %v837
      %v839 = vpop.f32.mrb[0].mxu0
      %v840 = vpop.f32.mrb[0].mxu0
      %v841 = vadd.f32 %v313, %v840
      %v842 = vpop.f32.mrb[0].mxu0
      %843 = vmatprep.mubr.bf16.mxu0 0
      %844 = vmatmul.mubr.bf16.gmra.mrb[0].mxu0 %v566
      %v845 = vpop.f32.mrb[0].mxu0
      %v846 = vadd.f32 %v313, %v845
      %v847 = vpop.f32.mrb[0].mxu0
      %v848 = vpop.f32.mrb[0].mxu0
      %v849 = vadd.f32 %v313, %v848
      %v850 = vpop.f32.mrb[0].mxu0
      %851 = vmatprep.mubr.bf16.mxu0 0
      %852 = vmatmul.mubr.bf16.gmra.mrb[0].mxu0 %v567
      %v853 = vpop.f32.mrb[0].mxu0
      %v854 = vadd.f32 %v313, %v853
      %v855 = vpop.f32.mrb[0].mxu0
      %v856 = vpop.f32.mrb[0].mxu0
      %v857 = vadd.f32 %v313, %v856
      %v858 = vpop.f32.mrb[0].mxu0
      %859 = vmatprep.mubr.bf16.mxu0 0
      %860 = vmatmul.mubr.bf16.gmra.mrb[0].mxu0 %v568
      %v861 = vpop.f32.mrb[0].mxu0
      %v862 = vadd.f32 %v313, %v861
      %v863 = vpop.f32.mrb[0].mxu0
      %v864 = vpop.f32.mrb[0].mxu0
      %v865 = vadd.f32 %v313, %v864
      %v866 = vpop.f32.mrb[0].mxu0
      %867 = vmatprep.mubr.bf16.mxu0 0
      %868 = vmatmul.mubr.bf16.gmra.mrb[0].mxu0 %v569
      %v869 = vpop.f32.mrb[0].mxu0
      %v870 = vadd.f32 %v313, %v869
      %v871 = vpop.f32.mrb[0].mxu0
      %v872 = vpop.f32.mrb[0].mxu0
      %v873 = vadd.f32 %v313, %v872
      %v874 = vpop.f32.mrb[0].mxu0
      %875 = vmatprep.mubr.bf16.mxu0 0
      %876 = vmatmul.mubr.bf16.gmra.mrb[0].mxu0 %v570
      %v877 = vpop.f32.mrb[0].mxu0
      %v878 = vadd.f32 %v313, %v877
      %v879 = vpop.f32.mrb[0].mxu0
      %v880 = vpop.f32.mrb[0].mxu0
      %v881 = vadd.f32 %v313, %v880
      %v882 = vpop.f32.mrb[0].mxu0
      %883 = vmatprep.mubr.bf16.mxu0 0
      %884 = vmatmul.mubr.bf16.gmra.mrb[0].mxu0 %v571
      %v885 = vpop.f32.mrb[0].mxu0
      %v886 = vadd.f32 %v313, %v885
      %v887 = vpop.f32.mrb[0].mxu0
      %v888 = vpop.f32.mrb[0].mxu0
      %v889 = vadd.f32 %v313, %v888
      %v890 = vpop.f32.mrb[0].mxu0
      %891 = vmatprep.mubr.bf16.mxu0 0
      %892 = vmatmul.mubr.bf16.gmra.mrb[0].mxu0 %v572
      %v893 = vpop.f32.mrb[0].mxu0
      %v894 = vadd.f32 %v313, %v893
      %v895 = vpop.f32.mrb[0].mxu0
      %v896 = vpop.f32.mrb[0].mxu0
      %v897 = vadd.f32 %v313, %v896
      %v898 = vpop.f32.mrb[0].mxu0
      %899 = vmatprep.mubr.bf16.mxu0 0
      %900 = vmatmul.mubr.bf16.gmra.mrb[0].mxu0 %v573
      %v901 = vpop.f32.mrb[0].mxu0
      %v902 = vadd.f32 %v313, %v901
      %v903 = vpop.f32.mrb[0].mxu0
      %v904 = vpop.f32.mrb[0].mxu0
      %v905 = vadd.f32 %v313, %v904
      %v906 = vpop.f32.mrb[0].mxu0
      %907 = vmatprep.mubr.bf16.mxu0 0
      %908 = vmatmul.mubr.bf16.gmra.mrb[0].mxu0 %v574
      %v909 = vpop.f32.mrb[0].mxu0
      %v910 = vadd.f32 %v313, %v909
      %v911 = vpop.f32.mrb[0].mxu0
      %v912 = vpop.f32.mrb[0].mxu0
      %v913 = vadd.f32 %v313, %v912
      %v914 = vpop.f32.mrb[0].mxu0
      %915 = vmatprep.mubr.bf16.mxu0 0
      %916 = vmatmul.mubr.bf16.gmra.mrb[0].mxu0 %v575
      %v917 = vpop.f32.mrb[0].mxu0
      %v918 = vadd.f32 %v313, %v917
      %v919 = vpop.f32.mrb[0].mxu0
      %v920 = vpop.f32.mrb[0].mxu0
      %v921 = vadd.f32 %v313, %v920
      %v922 = vpop.f32.mrb[0].mxu0
      %923 = vmatprep.mubr.bf16.mxu0 0
      %924 = vmatmul.mubr.bf16.gmra.mrb[0].mxu0 %v576
      %v925 = vpop.f32.mrb[0].mxu0
      %v926 = vadd.f32 %v313, %v925
      %v927 = vpop.f32.mrb[0].mxu0
      %v928 = vpop.f32.mrb[0].mxu0
      %v929 = vadd.f32 %v313, %v928
      %v930 = vpop.f32.mrb[0].mxu0
      %931 = vmatprep.mubr.bf16.mxu0 0
      %932 = vmatmul.mubr.bf16.gmra.mrb[0].mxu0 %v577
      %v933 = vpop.f32.mrb[0].mxu0
      %v934 = vadd.f32 %v313, %v933
      %v935 = vpop.f32.mrb[0].mxu0
      %v936 = vpop.f32.mrb[0].mxu0
      %v937 = vadd.f32 %v313, %v936
      %v938 = vpop.f32.mrb[0].mxu0
      %939 = vmatprep.mubr.bf16.mxu0 0
      %940 = vmatmul.mubr.bf16.gmra.mrb[0].mxu0 %v578
      %v941 = vpop.f32.mrb[0].mxu0
      %v942 = vadd.f32 %v313, %v941
      %v943 = vpop.f32.mrb[0].mxu0
      %v944 = vpop.f32.mrb[0].mxu0
      %v945 = vadd.f32 %v313, %v944
      %v946 = vpop.f32.mrb[0].mxu0
      %947 = vmatprep.mubr.bf16.mxu0 0
      %948 = vmatmul.mubr.bf16.gmra.mrb[0].mxu0 %v579
      %v949 = vpop.f32.mrb[0].mxu0
      %v950 = vadd.f32 %v313, %v949
      %v951 = vpop.f32.mrb[0].mxu0
      %v952 = vpop.f32.mrb[0].mxu0
      %v953 = vadd.f32 %v313, %v952
      %v954 = vpop.f32.mrb[0].mxu0
      %955 = vmatprep.mubr.bf16.mxu0 0
      %956 = vmatmul.mubr.bf16.gmra.mrb[0].mxu0 %v580
      %v957 = vpop.f32.mrb[0].mxu0
      %v958 = vadd.f32 %v313, %v957
      %v959 = vpop.f32.mrb[0].mxu0
      %v960 = vpop.f32.mrb[0].mxu0
      %v961 = vadd.f32 %v313, %v960
      %v962 = vpop.f32.mrb[0].mxu0
      %963 = vmatprep.mubr.bf16.mxu0 0
      %964 = vmatmul.mubr.bf16.gmra.mrb[0].mxu0 %v581
      %v965 = vpop.f32.mrb[0].mxu0
      %v966 = vadd.f32 %v313, %v965
      %v967 = vpop.f32.mrb[0].mxu0
      %v968 = vpop.f32.mrb[0].mxu0
      %v969 = vadd.f32 %v313, %v968
      %v970 = vpop.f32.mrb[0].mxu0
      %971 = vmatprep.mubr.bf16.mxu0 0
      %972 = vmatmul.mubr.bf16.gmra.mrb[0].mxu0 %v582
      %v973 = vpop.f32.mrb[0].mxu0
      %v974 = vadd.f32 %v313, %v973
      %v975 = vpop.f32.mrb[0].mxu0
      %v976 = vpop.f32.mrb[0].mxu0
      %v977 = vadd.f32 %v313, %v976
      %v978 = vpop.f32.mrb[0].mxu0
      %979 = vmatprep.mubr.bf16.mxu0 0
      %980 = vmatmul.mubr.bf16.gmra.mrb[0].mxu0 %v583
      %v981 = vpop.f32.mrb[0].mxu0
      %v982 = vadd.f32 %v313, %v981
      %v983 = vpop.f32.mrb[0].mxu0
      %v984 = vpop.f32.mrb[0].mxu0
      %v985 = vadd.f32 %v313, %v984
      %v986 = vpop.f32.mrb[0].mxu0
      %987 = vmatprep.mubr.bf16.mxu0 0
      %988 = vmatmul.mubr.bf16.gmra.mrb[0].mxu0 %v584
      %v989 = vpop.f32.mrb[0].mxu0
      %v990 = vadd.f32 %v313, %v989
      %v991 = vpop.f32.mrb[0].mxu0
      %v992 = vpop.f32.mrb[0].mxu0
      %v993 = vadd.f32 %v313, %v992
      %v994 = vpop.f32.mrb[0].mxu0
      %995 = vmatprep.mubr.bf16.mxu0 0
      %996 = vmatmul.mubr.bf16.gmra.mrb[0].mxu0 %v585
      %v997 = vpop.f32.mrb[0].mxu0
      %v998 = vadd.f32 %v313, %v997
      %v999 = vpop.f32.mrb[0].mxu0
      %v1000 = vpop.f32.mrb[0].mxu0
      %v1001 = vadd.f32 %v313, %v1000
      %v1002 = vpop.f32.mrb[0].mxu0
      %1003 = vmatprep.mubr.bf16.mxu0 0
      %1004 = vmatmul.mubr.bf16.gmra.mrb[0].mxu0 %v586
      %v1005 = vpop.f32.mrb[0].mxu0
      %v1006 = vadd.f32 %v313, %v1005
      %v1007 = vpop.f32.mrb[0].mxu0
      %v1008 = vpop.f32.mrb[0].mxu0
      %v1009 = vadd.f32 %v313, %v1008
      %v1010 = vpop.f32.mrb[0].mxu0
      %1011 = vmatprep.mubr.bf16.mxu0 0
      %1012 = vmatmul.mubr.bf16.gmra.mrb[0].mxu0 %v587
      %v1013 = vpop.f32.mrb[0].mxu0
      %v1014 = vadd.f32 %v313, %v1013
      %v1015 = vpop.f32.mrb[0].mxu0
      %v1016 = vpop.f32.mrb[0].mxu0
      %v1017 = vadd.f32 %v313, %v1016
      %v1018 = vpop.f32.mrb[0].mxu0
      %1019 = vmatprep.mubr.bf16.mxu0 0
      %1020 = vmatmul.mubr.bf16.gmra.mrb[0].mxu0 %v588
      %v1021 = vpop.f32.mrb[0].mxu0
      %v1022 = vadd.f32 %v313, %v1021
      %v1023 = vpop.f32.mrb[0].mxu0
      %v1024 = vpop.f32.mrb[0].mxu0
      %v1025 = vadd.f32 %v313, %v1024
      %v1026 = vpop.f32.mrb[0].mxu0
      %1027 = vmatprep.mubr.bf16.mxu0 0
      %1028 = vmatmul.mubr.bf16.gmra.mrb[0].mxu0 %v589
      %v1029 = vpop.f32.mrb[0].mxu0
      %v1030 = vadd.f32 %v313, %v1029
      %v1031 = vpop.f32.mrb[0].mxu0
      %v1032 = vpop.f32.mrb[0].mxu0
      %v1033 = vadd.f32 %v313, %v1032
      %v1034 = vpop.f32.mrb[0].mxu0
      %1035 = vmatprep.mubr.bf16.mxu0 0
      %1036 = vmatmul.mubr.bf16.gmra.mrb[0].mxu0 %v590
      %v1037 = vpop.f32.mrb[0].mxu0
      %v1038 = vadd.f32 %v313, %v1037
      %v1039 = vpop.f32.mrb[0].mxu0
      %v1040 = vpop.f32.mrb[0].mxu0
      %v1041 = vadd.f32 %v313, %v1040
      %v1042 = vpop.f32.mrb[0].mxu0
      %1043 = vmatprep.mubr.bf16.mxu0 0
      %1044 = vmatmul.mubr.bf16.gmra.mrb[0].mxu0 %v591
      %v1045 = vpop.f32.mrb[0].mxu0
      %v1046 = vadd.f32 %v313, %v1045
      %v1047 = vpop.f32.mrb[0].mxu0
      %v1048 = vpop.f32.mrb[0].mxu0
      %v1049 = vadd.f32 %v313, %v1048
      %v1050 = vpop.f32.mrb[0].mxu0
      %1051 = vmatprep.mubr.bf16.mxu0 0
      %1052 = vmatmul.mubr.bf16.gmra.mrb[0].mxu0 %v592
      %v1053 = vpop.f32.mrb[0].mxu0
      %v1054 = vadd.f32 %v313, %v1053
      %v1055 = vpop.f32.mrb[0].mxu0
      %v1056 = vpop.f32.mrb[0].mxu0
      %v1057 = vadd.f32 %v313, %v1056
      %v1058 = vpop.f32.mrb[0].mxu0
      %1059 = vmatprep.mubr.bf16.mxu0 0
      %1060 = vmatmul.mubr.bf16.gmra.mrb[0].mxu0 %v593
      %v1061 = vpop.f32.mrb[0].mxu0
      %v1062 = vadd.f32 %v313, %v1061
      %v1063 = vpop.f32.mrb[0].mxu0
      %v1064 = vpop.f32.mrb[0].mxu0
      %v1065 = vadd.f32 %v313, %v1064
      %v1066 = vpop.f32.mrb[0].mxu0
      %1067 = vmatprep.mubr.bf16.mxu0 0
      %1068 = vmatmul.mubr.bf16.gmra.mrb[0].mxu0 %v594
      %v1069 = vpop.f32.mrb[0].mxu0
      %v1070 = vadd.f32 %v313, %v1069
      %v1071 = vpop.f32.mrb[0].mxu0
      %v1072 = vpop.f32.mrb[0].mxu0
      %v1073 = vadd.f32 %v313, %v1072
      %v1074 = vpop.f32.mrb[0].mxu0
      %1075 = vmatprep.mubr.bf16.mxu0 0
      %1076 = vmatmul.mubr.bf16.gmra.mrb[0].mxu0 %v595
      %v1077 = vpop.f32.mrb[0].mxu0
      %v1078 = vadd.f32 %v313, %v1077
      %v1079 = vpop.f32.mrb[0].mxu0
      %v1080 = vpop.f32.mrb[0].mxu0
      %v1081 = vadd.f32 %v313, %v1080
      %v1082 = vpop.f32.mrb[0].mxu0
      %1083 = vmatprep.mubr.bf16.mxu0 0
      %1084 = vmatmul.mubr.bf16.gmra.mrb[0].mxu0 %v596
      %v1085 = vpop.f32.mrb[0].mxu0
      %v1086 = vadd.f32 %v313, %v1085
      %v1087 = vpop.f32.mrb[0].mxu0
      %v1088 = vpop.f32.mrb[0].mxu0
      %v1089 = vadd.f32 %v313, %v1088
      %v1090 = vpop.f32.mrb[0].mxu0
      %1091 = vmatprep.mubr.bf16.mxu0 0
      %1092 = vmatmul.mubr.bf16.gmra.mrb[0].mxu0 %v597
      %v1093 = vpop.f32.mrb[0].mxu0
      %v1094 = vadd.f32 %v313, %v1093
      %v1095 = vpop.f32.mrb[0].mxu0
      %v1096 = vpop.f32.mrb[0].mxu0
      %v1097 = vadd.f32 %v313, %v1096
      %v1098 = vpop.f32.mrb[0].mxu0
      %1099 = vmatprep.mubr.bf16.mxu0 0
      %1100 = vmatmul.mubr.bf16.gmra.mrb[0].mxu0 %v598
      %v1101 = vpop.f32.mrb[0].mxu0
      %v1102 = vadd.f32 %v313, %v1101
      %v1103 = vpop.f32.mrb[0].mxu0
      %v1104 = vpop.f32.mrb[0].mxu0
      %v1105 = vadd.f32 %v313, %v1104
      %v1106 = vpop.f32.mrb[0].mxu0
      %1107 = vmatprep.mubr.bf16.mxu0 0
      %1108 = vmatmul.mubr.bf16.gmra.mrb[0].mxu0 %v599
      %v1109 = vpop.f32.mrb[0].mxu0
      %v1110 = vadd.f32 %v313, %v1109
      %v1111 = vpop.f32.mrb[0].mxu0
      %v1112 = vpop.f32.mrb[0].mxu0
      %v1113 = vadd.f32 %v313, %v1112
      %v1114 = vpop.f32.mrb[0].mxu0
      %1115 = vmatprep.mubr.bf16.mxu0 0
      %1116 = vmatmul.mubr.bf16.gmra.mrb[0].mxu0 %v600
      %v1117 = vpop.f32.mrb[0].mxu0
      %v1118 = vadd.f32 %v313, %v1117
      %v1119 = vpop.f32.mrb[0].mxu0
      %v1120 = vpop.f32.mrb[0].mxu0
      %v1121 = vadd.f32 %v313, %v1120
      %v1122 = vpop.f32.mrb[0].mxu0
      %1123 = vmatprep.mubr.bf16.mxu0 0
      %1124 = vmatmul.mubr.bf16.gmra.mrb[0].mxu0 %v601
      %v1125 = vpop.f32.mrb[0].mxu0
      %v1126 = vadd.f32 %v313, %v1125
      %v1127 = vpop.f32.mrb[0].mxu0
      %v1128 = vpop.f32.mrb[0].mxu0
      %v1129 = vadd.f32 %v313, %v1128
      %v1130 = vpop.f32.mrb[0].mxu0
      %1131 = vmatprep.mubr.bf16.mxu0 0
      %1132 = vmatmul.mubr.bf16.gmra.mrb[0].mxu0 %v602
      %v1133 = vpop.f32.mrb[0].mxu0
      %v1134 = vadd.f32 %v313, %v1133
      %v1135 = vpop.f32.mrb[0].mxu0
      %v1136 = vpop.f32.mrb[0].mxu0
      %v1137 = vadd.f32 %v313, %v1136
      %v1138 = vpop.f32.mrb[0].mxu0
      %1139 = vmatprep.mubr.bf16.mxu0 0
      %1140 = vmatmul.mubr.bf16.gmra.mrb[0].mxu0 %v603
      %v1141 = vpop.f32.mrb[0].mxu0
      %v1142 = vadd.f32 %v313, %v1141
      %v1143 = vpop.f32.mrb[0].mxu0
      %v1144 = vpop.f32.mrb[0].mxu0
      %v1145 = vadd.f32 %v313, %v1144
      %v1146 = vpop.f32.mrb[0].mxu0
      %1147 = vmatprep.mubr.bf16.mxu0 0
      %1148 = vmatmul.mubr.bf16.gmra.mrb[0].mxu0 %v604
      %v1149 = vpop.f32.mrb[0].mxu0
      %v1150 = vadd.f32 %v313, %v1149
      %v1151 = vpop.f32.mrb[0].mxu0
      %v1152 = vpop.f32.mrb[0].mxu0
      %v1153 = vadd.f32 %v313, %v1152
      %v1154 = vpop.f32.mrb[0].mxu0
      %1155 = vmatprep.mubr.bf16.mxu0 0
      %1156 = vmatmul.mubr.bf16.gmra.mrb[0].mxu0 %v605
      %v1157 = vpop.f32.mrb[0].mxu0
      %v1158 = vadd.f32 %v313, %v1157
      %v1159 = vpop.f32.mrb[0].mxu0
      %v1160 = vpop.f32.mrb[0].mxu0
      %v1161 = vadd.f32 %v313, %v1160
      %v1162 = vpop.f32.mrb[0].mxu0
      %1163 = vmatprep.mubr.bf16.mxu0 0
      %1164 = vmatmul.mubr.bf16.gmra.mrb[0].mxu0 %v606
      %v1165 = vpop.f32.mrb[0].mxu0
      %v1166 = vadd.f32 %v313, %v1165
      %v1167 = vpop.f32.mrb[0].mxu0
      %v1168 = vpop.f32.mrb[0].mxu0
      %v1169 = vadd.f32 %v313, %v1168
      %v1170 = vpop.f32.mrb[0].mxu0
      %1171 = vmatprep.mubr.bf16.mxu0 0
      %1172 = vmatmul.mubr.bf16.gmra.mrb[0].mxu0 %v607
      %v1173 = vpop.f32.mrb[0].mxu0
      %v1174 = vadd.f32 %v313, %v1173
      %v1175 = vpop.f32.mrb[0].mxu0
      %v1176 = vpop.f32.mrb[0].mxu0
      %v1177 = vadd.f32 %v313, %v1176
      %v1178 = vpop.f32.mrb[0].mxu0
      %1179 = vmatprep.mubr.bf16.mxu0 0
      %1180 = vmatmul.mubr.bf16.gmra.mrb[0].mxu0 %v608
      %v1181 = vpop.f32.mrb[0].mxu0
      %v1182 = vadd.f32 %v313, %v1181
      %v1183 = vpop.f32.mrb[0].mxu0
      %v1184 = vpop.f32.mrb[0].mxu0
      %v1185 = vadd.f32 %v313, %v1184
      %v1186 = vpop.f32.mrb[0].mxu0
      %1187 = vmatprep.mubr.bf16.mxu0 0
      %1188 = vmatmul.mubr.bf16.gmra.mrb[0].mxu0 %v609
      %v1189 = vpop.f32.mrb[0].mxu0
      %v1190 = vadd.f32 %v313, %v1189
      %v1191 = vpop.f32.mrb[0].mxu0
      %v1192 = vpop.f32.mrb[0].mxu0
      %v1193 = vadd.f32 %v313, %v1192
      %v1194 = vpop.f32.mrb[0].mxu0
      %1195 = vmatprep.mubr.bf16.mxu0 0
      %1196 = vmatmul.mubr.bf16.gmra.mrb[0].mxu0 %v610
      %v1197 = vpop.f32.mrb[0].mxu0
      %v1198 = vadd.f32 %v313, %v1197
      %v1199 = vpop.f32.mrb[0].mxu0
      %v1200 = vpop.f32.mrb[0].mxu0
      %v1201 = vadd.f32 %v313, %v1200
      %v1202 = vpop.f32.mrb[0].mxu0
      %1203 = vmatprep.mubr.bf16.mxu0 0
      %1204 = vmatmul.mubr.bf16.gmra.mrb[0].mxu0 %v611
      %v1205 = vpop.f32.mrb[0].mxu0
      %v1206 = vadd.f32 %v313, %v1205
      %v1207 = vpop.f32.mrb[0].mxu0
      %v1208 = vpop.f32.mrb[0].mxu0
      %v1209 = vadd.f32 %v313, %v1208
      %v1210 = vpop.f32.mrb[0].mxu0
      %1211 = vmatprep.mubr.bf16.mxu0 0
      %1212 = vmatmul.mubr.bf16.gmra.mrb[0].mxu0 %v612
      %v1213 = vpop.f32.mrb[0].mxu0
      %v1214 = vadd.f32 %v313, %v1213
      %v1215 = vpop.f32.mrb[0].mxu0
      %v1216 = vpop.f32.mrb[0].mxu0
      %v1217 = vadd.f32 %v313, %v1216
      %v1218 = vpop.f32.mrb[0].mxu0
      %1219 = vmatprep.mubr.bf16.mxu0 0
      %1220 = vmatmul.mubr.bf16.gmra.mrb[0].mxu0 %v613
      %v1221 = vpop.f32.mrb[0].mxu0
      %v1222 = vadd.f32 %v313, %v1221
      %v1223 = vpop.f32.mrb[0].mxu0
      %v1224 = vpop.f32.mrb[0].mxu0
      %v1225 = vadd.f32 %v313, %v1224
      %v1226 = vpop.f32.mrb[0].mxu0
      %1227 = vmatprep.mubr.bf16.mxu0 0
      %1228 = vmatmul.mubr.bf16.gmra.mrb[0].mxu0 %v614
      %v1229 = vpop.f32.mrb[0].mxu0
      %v1230 = vadd.f32 %v313, %v1229
      %v1231 = vpop.f32.mrb[0].mxu0
      %v1232 = vpop.f32.mrb[0].mxu0
      %v1233 = vadd.f32 %v313, %v1232
      %v1234 = vpop.f32.mrb[0].mxu0
      %1235 = vdwg.mxu0
      %v1236 = vmax.f32 %v758, 0.0
      %v1237 = vmax.f32 %v761, 0.0
      %v1238 = vmax.f32 %v766, 0.0
      %v1239 = vmax.f32 %v769, 0.0
      %v1240 = vmax.f32 %v774, 0.0
      %v1241 = vmax.f32 %v777, 0.0
      %v1242 = vmax.f32 %v782, 0.0
      %v1243 = vmax.f32 %v785, 0.0
      %v1244 = vmax.f32 %v790, 0.0
      %v1245 = vmax.f32 %v793, 0.0
      %v1246 = vmax.f32 %v798, 0.0
      %v1247 = vmax.f32 %v801, 0.0
      %v1248 = vmax.f32 %v806, 0.0
      %v1249 = vmax.f32 %v809, 0.0
      %v1250 = vmax.f32 %v814, 0.0
      %v1251 = vmax.f32 %v817, 0.0
      %v1252 = vmax.f32 %v822, 0.0
      %v1253 = vmax.f32 %v825, 0.0
      %v1254 = vmax.f32 %v830, 0.0
      %v1255 = vmax.f32 %v833, 0.0
      %v1256 = vmax.f32 %v838, 0.0
      %v1257 = vmax.f32 %v841, 0.0
      %v1258 = vmax.f32 %v846, 0.0
      %v1259 = vmax.f32 %v849, 0.0
      %v1260 = vmax.f32 %v854, 0.0
      %v1261 = vmax.f32 %v857, 0.0
      %v1262 = vmax.f32 %v862, 0.0
      %v1263 = vmax.f32 %v865, 0.0
      %v1264 = vmax.f32 %v870, 0.0
      %v1265 = vmax.f32 %v873, 0.0
      %v1266 = vmax.f32 %v878, 0.0
      %v1267 = vmax.f32 %v881, 0.0
      %v1268 = vmax.f32 %v886, 0.0
      %v1269 = vmax.f32 %v889, 0.0
      %v1270 = vmax.f32 %v894, 0.0
      %v1271 = vmax.f32 %v897, 0.0
      %v1272 = vmax.f32 %v902, 0.0
      %v1273 = vmax.f32 %v905, 0.0
      %v1274 = vmax.f32 %v910, 0.0
      %v1275 = vmax.f32 %v913, 0.0
      %v1276 = vmax.f32 %v918, 0.0
      %v1277 = vmax.f32 %v921, 0.0
      %v1278 = vmax.f32 %v926, 0.0
      %v1279 = vmax.f32 %v929, 0.0
      %v1280 = vmax.f32 %v934, 0.0
      %v1281 = vmax.f32 %v937, 0.0
      %v1282 = vmax.f32 %v942, 0.0
      %v1283 = vmax.f32 %v945, 0.0
      %v1284 = vmax.f32 %v950, 0.0
      %v1285 = vmax.f32 %v953, 0.0
      %v1286 = vmax.f32 %v958, 0.0
      %v1287 = vmax.f32 %v961, 0.0
      %v1288 = vmax.f32 %v966, 0.0
      %v1289 = vmax.f32 %v969, 0.0
      %v1290 = vmax.f32 %v974, 0.0
      %v1291 = vmax.f32 %v977, 0.0
      %v1292 = vmax.f32 %v982, 0.0
      %v1293 = vmax.f32 %v985, 0.0
      %v1294 = vmax.f32 %v990, 0.0
      %v1295 = vmax.f32 %v993, 0.0
      %v1296 = vmax.f32 %v998, 0.0
      %v1297 = vmax.f32 %v1001, 0.0
      %v1298 = vmax.f32 %v1006, 0.0
      %v1299 = vmax.f32 %v1009, 0.0
      %v1300 = vmax.f32 %v1014, 0.0
      %v1301 = vmax.f32 %v1017, 0.0
      %v1302 = vmax.f32 %v1022, 0.0
      %v1303 = vmax.f32 %v1025, 0.0
      %v1304 = vmax.f32 %v1030, 0.0
      %v1305 = vmax.f32 %v1033, 0.0
      %v1306 = vmax.f32 %v1038, 0.0
      %v1307 = vmax.f32 %v1041, 0.0
      %v1308 = vmax.f32 %v1046, 0.0
      %v1309 = vmax.f32 %v1049, 0.0
      %v1310 = vmax.f32 %v1054, 0.0
      %v1311 = vmax.f32 %v1057, 0.0
      %v1312 = vmax.f32 %v1062, 0.0
      %v1313 = vmax.f32 %v1065, 0.0
      %v1314 = vmax.f32 %v1070, 0.0
      %v1315 = vmax.f32 %v1073, 0.0
      %v1316 = vmax.f32 %v1078, 0.0
      %v1317 = vmax.f32 %v1081, 0.0
      %v1318 = vmax.f32 %v1086, 0.0
      %v1319 = vmax.f32 %v1089, 0.0
      %v1320 = vmax.f32 %v1094, 0.0
      %v1321 = vmax.f32 %v1097, 0.0
      %v1322 = vmax.f32 %v1102, 0.0
      %v1323 = vmax.f32 %v1105, 0.0
      %v1324 = vmax.f32 %v1110, 0.0
      %v1325 = vmax.f32 %v1113, 0.0
      %v1326 = vmax.f32 %v1118, 0.0
      %v1327 = vmax.f32 %v1121, 0.0
      %v1328 = vmax.f32 %v1126, 0.0
      %v1329 = vmax.f32 %v1129, 0.0
      %v1330 = vmax.f32 %v1134, 0.0
      %v1331 = vmax.f32 %v1137, 0.0
      %v1332 = vmax.f32 %v1142, 0.0
      %v1333 = vmax.f32 %v1145, 0.0
      %v1334 = vmax.f32 %v1150, 0.0
      %v1335 = vmax.f32 %v1153, 0.0
      %v1336 = vmax.f32 %v1158, 0.0
      %v1337 = vmax.f32 %v1161, 0.0
      %v1338 = vmax.f32 %v1166, 0.0
      %v1339 = vmax.f32 %v1169, 0.0
      %v1340 = vmax.f32 %v1174, 0.0
      %v1341 = vmax.f32 %v1177, 0.0
      %v1342 = vmax.f32 %v1182, 0.0
      %v1343 = vmax.f32 %v1185, 0.0
      %v1344 = vmax.f32 %v1190, 0.0
      %v1345 = vmax.f32 %v1193, 0.0
      %v1346 = vmax.f32 %v1198, 0.0
      %v1347 = vmax.f32 %v1201, 0.0
      %v1348 = vmax.f32 %v1206, 0.0
      %v1349 = vmax.f32 %v1209, 0.0
      %v1350 = vmax.f32 %v1214, 0.0
      %v1351 = vmax.f32 %v1217, 0.0
      %v1352 = vmax.f32 %v1222, 0.0
      %v1353 = vmax.f32 %v1225, 0.0
      %v1354 = vmax.f32 %v1230, 0.0
      %v1355 = vmax.f32 %v1233, 0.0
      %vm1356 = vcmask 261120
      %1357 = vst.msk [vmem:[#allocation2] sm:$0xff] %vm1356, %v1236
      %1358 = vst.msk [vmem:[#allocation2 + $0x8] sm:$0xff] %vm1356, %v1237
      %1359 = vst.msk [vmem:[#allocation2 + $0x10] sm:$0xff] %vm1356, %v1238
      %1360 = vst.msk [vmem:[#allocation2 + $0x18] sm:$0xff] %vm1356, %v1239
      %1361 = vst.msk [vmem:[#allocation2 + $0x20] sm:$0xff] %vm1356, %v1240
      %1362 = vst.msk [vmem:[#allocation2 + $0x28] sm:$0xff] %vm1356, %v1241
      %1363 = vst.msk [vmem:[#allocation2 + $0x30] sm:$0xff] %vm1356, %v1242
      %1364 = vst.msk [vmem:[#allocation2 + $0x38] sm:$0xff] %vm1356, %v1243
      %1365 = vst.msk [vmem:[#allocation2 + $0x40] sm:$0xff] %vm1356, %v1244
      %1366 = vst.msk [vmem:[#allocation2 + $0x48] sm:$0xff] %vm1356, %v1245
      %1367 = vst.msk [vmem:[#allocation2 + $0x50] sm:$0xff] %vm1356, %v1246
      %1368 = vst.msk [vmem:[#allocation2 + $0x58] sm:$0xff] %vm1356, %v1247
      %1369 = vst.msk [vmem:[#allocation2 + $0x60] sm:$0xff] %vm1356, %v1248
      %1370 = vst.msk [vmem:[#allocation2 + $0x68] sm:$0xff] %vm1356, %v1249
      %1371 = vst.msk [vmem:[#allocation2 + $0x70] sm:$0xff] %vm1356, %v1250
      %1372 = vst.msk [vmem:[#allocation2 + $0x78] sm:$0xff] %vm1356, %v1251
      %1373 = vst.msk [vmem:[#allocation2 + $0x80] sm:$0xff] %vm1356, %v1252
      %1374 = vst.msk [vmem:[#allocation2 + $0x88] sm:$0xff] %vm1356, %v1253
      %1375 = vst.msk [vmem:[#allocation2 + $0x90] sm:$0xff] %vm1356, %v1254
      %1376 = vst.msk [vmem:[#allocation2 + $0x98] sm:$0xff] %vm1356, %v1255
      %1377 = vst.msk [vmem:[#allocation2 + $0xa0] sm:$0xff] %vm1356, %v1256
      %1378 = vst.msk [vmem:[#allocation2 + $0xa8] sm:$0xff] %vm1356, %v1257
      %1379 = vst.msk [vmem:[#allocation2 + $0xb0] sm:$0xff] %vm1356, %v1258
      %1380 = vst.msk [vmem:[#allocation2 + $0xb8] sm:$0xff] %vm1356, %v1259
      %1381 = vst.msk [vmem:[#allocation2 + $0xc0] sm:$0xff] %vm1356, %v1260
      %1382 = vst.msk [vmem:[#allocation2 + $0xc8] sm:$0xff] %vm1356, %v1261
      %1383 = vst.msk [vmem:[#allocation2 + $0xd0] sm:$0xff] %vm1356, %v1262
      %1384 = vst.msk [vmem:[#allocation2 + $0xd8] sm:$0xff] %vm1356, %v1263
      %1385 = vst.msk [vmem:[#allocation2 + $0xe0] sm:$0xff] %vm1356, %v1264
      %1386 = vst.msk [vmem:[#allocation2 + $0xe8] sm:$0xff] %vm1356, %v1265
      %1387 = vst.msk [vmem:[#allocation2 + $0xf0] sm:$0xff] %vm1356, %v1266
      %1388 = vst.msk [vmem:[#allocation2 + $0xf8] sm:$0xff] %vm1356, %v1267
      %1389 = vst.msk [vmem:[#allocation2 + $0x100] sm:$0xff] %vm1356, %v1268
      %1390 = vst.msk [vmem:[#allocation2 + $0x108] sm:$0xff] %vm1356, %v1269
      %1391 = vst.msk [vmem:[#allocation2 + $0x110] sm:$0xff] %vm1356, %v1270
      %1392 = vst.msk [vmem:[#allocation2 + $0x118] sm:$0xff] %vm1356, %v1271
      %1393 = vst.msk [vmem:[#allocation2 + $0x120] sm:$0xff] %vm1356, %v1272
      %1394 = vst.msk [vmem:[#allocation2 + $0x128] sm:$0xff] %vm1356, %v1273
      %1395 = vst.msk [vmem:[#allocation2 + $0x130] sm:$0xff] %vm1356, %v1274
      %1396 = vst.msk [vmem:[#allocation2 + $0x138] sm:$0xff] %vm1356, %v1275
      %1397 = vst.msk [vmem:[#allocation2 + $0x140] sm:$0xff] %vm1356, %v1276
      %1398 = vst.msk [vmem:[#allocation2 + $0x148] sm:$0xff] %vm1356, %v1277
      %1399 = vst.msk [vmem:[#allocation2 + $0x150] sm:$0xff] %vm1356, %v1278
      %1400 = vst.msk [vmem:[#allocation2 + $0x158] sm:$0xff] %vm1356, %v1279
      %1401 = vst.msk [vmem:[#allocation2 + $0x160] sm:$0xff] %vm1356, %v1280
      %1402 = vst.msk [vmem:[#allocation2 + $0x168] sm:$0xff] %vm1356, %v1281
      %1403 = vst.msk [vmem:[#allocation2 + $0x170] sm:$0xff] %vm1356, %v1282
      %1404 = vst.msk [vmem:[#allocation2 + $0x178] sm:$0xff] %vm1356, %v1283
      %1405 = vst.msk [vmem:[#allocation2 + $0x180] sm:$0xff] %vm1356, %v1284
      %1406 = vst.msk [vmem:[#allocation2 + $0x188] sm:$0xff] %vm1356, %v1285
      %1407 = vst.msk [vmem:[#allocation2 + $0x190] sm:$0xff] %vm1356, %v1286
      %1408 = vst.msk [vmem:[#allocation2 + $0x198] sm:$0xff] %vm1356, %v1287
      %1409 = vst.msk [vmem:[#allocation2 + $0x1a0] sm:$0xff] %vm1356, %v1288
      %1410 = vst.msk [vmem:[#allocation2 + $0x1a8] sm:$0xff] %vm1356, %v1289
      %1411 = vst.msk [vmem:[#allocation2 + $0x1b0] sm:$0xff] %vm1356, %v1290
      %1412 = vst.msk [vmem:[#allocation2 + $0x1b8] sm:$0xff] %vm1356, %v1291
      %1413 = vst.msk [vmem:[#allocation2 + $0x1c0] sm:$0xff] %vm1356, %v1292
      %1414 = vst.msk [vmem:[#allocation2 + $0x1c8] sm:$0xff] %vm1356, %v1293
      %1415 = vst.msk [vmem:[#allocation2 + $0x1d0] sm:$0xff] %vm1356, %v1294
      %1416 = vst.msk [vmem:[#allocation2 + $0x1d8] sm:$0xff] %vm1356, %v1295
      %1417 = vst.msk [vmem:[#allocation2 + $0x1e0] sm:$0xff] %vm1356, %v1296
      %1418 = vst.msk [vmem:[#allocation2 + $0x1e8] sm:$0xff] %vm1356, %v1297
      %1419 = vst.msk [vmem:[#allocation2 + $0x1f0] sm:$0xff] %vm1356, %v1298
      %1420 = vst.msk [vmem:[#allocation2 + $0x1f8] sm:$0xff] %vm1356, %v1299
      %1421 = vst.msk [vmem:[#allocation2 + $0x200] sm:$0xff] %vm1356, %v1300
      %1422 = vst.msk [vmem:[#allocation2 + $0x208] sm:$0xff] %vm1356, %v1301
      %1423 = vst.msk [vmem:[#allocation2 + $0x210] sm:$0xff] %vm1356, %v1302
      %1424 = vst.msk [vmem:[#allocation2 + $0x218] sm:$0xff] %vm1356, %v1303
      %1425 = vst.msk [vmem:[#allocation2 + $0x220] sm:$0xff] %vm1356, %v1304
      %1426 = vst.msk [vmem:[#allocation2 + $0x228] sm:$0xff] %vm1356, %v1305
      %1427 = vst.msk [vmem:[#allocation2 + $0x230] sm:$0xff] %vm1356, %v1306
      %1428 = vst.msk [vmem:[#allocation2 + $0x238] sm:$0xff] %vm1356, %v1307
      %1429 = vst.msk [vmem:[#allocation2 + $0x240] sm:$0xff] %vm1356, %v1308
      %1430 = vst.msk [vmem:[#allocation2 + $0x248] sm:$0xff] %vm1356, %v1309
      %1431 = vst.msk [vmem:[#allocation2 + $0x250] sm:$0xff] %vm1356, %v1310
      %1432 = vst.msk [vmem:[#allocation2 + $0x258] sm:$0xff] %vm1356, %v1311
      %1433 = vst.msk [vmem:[#allocation2 + $0x260] sm:$0xff] %vm1356, %v1312
      %1434 = vst.msk [vmem:[#allocation2 + $0x268] sm:$0xff] %vm1356, %v1313
      %1435 = vst.msk [vmem:[#allocation2 + $0x270] sm:$0xff] %vm1356, %v1314
      %1436 = vst.msk [vmem:[#allocation2 + $0x278] sm:$0xff] %vm1356, %v1315
      %1437 = vst.msk [vmem:[#allocation2 + $0x280] sm:$0xff] %vm1356, %v1316
      %1438 = vst.msk [vmem:[#allocation2 + $0x288] sm:$0xff] %vm1356, %v1317
      %1439 = vst.msk [vmem:[#allocation2 + $0x290] sm:$0xff] %vm1356, %v1318
      %1440 = vst.msk [vmem:[#allocation2 + $0x298] sm:$0xff] %vm1356, %v1319
      %1441 = vst.msk [vmem:[#allocation2 + $0x2a0] sm:$0xff] %vm1356, %v1320
      %1442 = vst.msk [vmem:[#allocation2 + $0x2a8] sm:$0xff] %vm1356, %v1321
      %1443 = vst.msk [vmem:[#allocation2 + $0x2b0] sm:$0xff] %vm1356, %v1322
      %1444 = vst.msk [vmem:[#allocation2 + $0x2b8] sm:$0xff] %vm1356, %v1323
      %1445 = vst.msk [vmem:[#allocation2 + $0x2c0] sm:$0xff] %vm1356, %v1324
      %1446 = vst.msk [vmem:[#allocation2 + $0x2c8] sm:$0xff] %vm1356, %v1325
      %1447 = vst.msk [vmem:[#allocation2 + $0x2d0] sm:$0xff] %vm1356, %v1326
      %1448 = vst.msk [vmem:[#allocation2 + $0x2d8] sm:$0xff] %vm1356, %v1327
      %1449 = vst.msk [vmem:[#allocation2 + $0x2e0] sm:$0xff] %vm1356, %v1328
      %1450 = vst.msk [vmem:[#allocation2 + $0x2e8] sm:$0xff] %vm1356, %v1329
      %1451 = vst.msk [vmem:[#allocation2 + $0x2f0] sm:$0xff] %vm1356, %v1330
      %1452 = vst.msk [vmem:[#allocation2 + $0x2f8] sm:$0xff] %vm1356, %v1331
      %1453 = vst.msk [vmem:[#allocation2 + $0x300] sm:$0xff] %vm1356, %v1332
      %1454 = vst.msk [vmem:[#allocation2 + $0x308] sm:$0xff] %vm1356, %v1333
      %1455 = vst.msk [vmem:[#allocation2 + $0x310] sm:$0xff] %vm1356, %v1334
      %1456 = vst.msk [vmem:[#allocation2 + $0x318] sm:$0xff] %vm1356, %v1335
      %1457 = vst.msk [vmem:[#allocation2 + $0x320] sm:$0xff] %vm1356, %v1336
      %1458 = vst.msk [vmem:[#allocation2 + $0x328] sm:$0xff] %vm1356, %v1337
      %1459 = vst.msk [vmem:[#allocation2 + $0x330] sm:$0xff] %vm1356, %v1338
      %1460 = vst.msk [vmem:[#allocation2 + $0x338] sm:$0xff] %vm1356, %v1339
      %1461 = vst.msk [vmem:[#allocation2 + $0x340] sm:$0xff] %vm1356, %v1340
      %1462 = vst.msk [vmem:[#allocation2 + $0x348] sm:$0xff] %vm1356, %v1341
      %1463 = vst.msk [vmem:[#allocation2 + $0x350] sm:$0xff] %vm1356, %v1342
      %1464 = vst.msk [vmem:[#allocation2 + $0x358] sm:$0xff] %vm1356, %v1343
      %1465 = vst.msk [vmem:[#allocation2 + $0x360] sm:$0xff] %vm1356, %v1344
      %1466 = vst.msk [vmem:[#allocation2 + $0x368] sm:$0xff] %vm1356, %v1345
      %1467 = vst.msk [vmem:[#allocation2 + $0x370] sm:$0xff] %vm1356, %v1346
      %1468 = vst.msk [vmem:[#allocation2 + $0x378] sm:$0xff] %vm1356, %v1347
      %1469 = vst.msk [vmem:[#allocation2 + $0x380] sm:$0xff] %vm1356, %v1348
      %1470 = vst.msk [vmem:[#allocation2 + $0x388] sm:$0xff] %vm1356, %v1349
      %1471 = vst.msk [vmem:[#allocation2 + $0x390] sm:$0xff] %vm1356, %v1350
      %1472 = vst.msk [vmem:[#allocation2 + $0x398] sm:$0xff] %vm1356, %v1351
      %1473 = vst.msk [vmem:[#allocation2 + $0x3a0] sm:$0xff] %vm1356, %v1352
      %1474 = vst.msk [vmem:[#allocation2 + $0x3a8] sm:$0xff] %vm1356, %v1353
      %1475 = vst.msk [vmem:[#allocation2 + $0x3b0] sm:$0xff] %vm1356, %v1354
      %1476 = vst.msk [vmem:[#allocation2 + $0x3b8] sm:$0xff] %vm1356, %v1355
      %v1477 = vld [vmem:[#allocation2] sm:$0xff]
      %v1478 = vld [vmem:[#allocation2 + $0x8] sm:$0x1f]
      %v1479 = vld [vmem:[#allocation2 + $0x20] sm:$0xff]
      %v1480 = vld [vmem:[#allocation2 + $0x28] sm:$0x1f]
      %v1481 = vld [vmem:[#allocation2 + $0x40] sm:$0xff]
      %v1482 = vld [vmem:[#allocation2 + $0x48] sm:$0x1f]
      %v1483 = vld [vmem:[#allocation2 + $0x60] sm:$0xff]
      %v1484 = vld [vmem:[#allocation2 + $0x68] sm:$0x1f]
      %v1485 = vld [vmem:[#allocation2 + $0x80] sm:$0xff]
      %v1486 = vld [vmem:[#allocation2 + $0x88] sm:$0x1f]
      %v1487 = vld [vmem:[#allocation2 + $0xa0] sm:$0xff]
      %v1488 = vld [vmem:[#allocation2 + $0xa8] sm:$0x1f]
      %v1489 = vld [vmem:[#allocation2 + $0xc0] sm:$0xff]
      %v1490 = vld [vmem:[#allocation2 + $0xc8] sm:$0x1f]
      %v1491 = vld [vmem:[#allocation2 + $0xe0] sm:$0xff]
      %v1492 = vld [vmem:[#allocation2 + $0xe8] sm:$0x1f]
      %v1493 = vld [vmem:[#allocation2 + $0x100] sm:$0xff]
      %v1494 = vld [vmem:[#allocation2 + $0x108] sm:$0x1f]
      %v1495 = vld [vmem:[#allocation2 + $0x120] sm:$0xff]
      %v1496 = vld [vmem:[#allocation2 + $0x128] sm:$0x1f]
      %v1497 = vld [vmem:[#allocation2 + $0x140] sm:$0xff]
      %v1498 = vld [vmem:[#allocation2 + $0x148] sm:$0x1f]
      %v1499 = vld [vmem:[#allocation2 + $0x160] sm:$0xff]
      %v1500 = vld [vmem:[#allocation2 + $0x168] sm:$0x1f]
      %v1501 = vld [vmem:[#allocation2 + $0x180] sm:$0xff]
      %v1502 = vld [vmem:[#allocation2 + $0x188] sm:$0x1f]
      %v1503 = vld [vmem:[#allocation2 + $0x1a0] sm:$0xff]
      %v1504 = vld [vmem:[#allocation2 + $0x1a8] sm:$0x1f]
      %v1505 = vld [vmem:[#allocation2 + $0x1c0] sm:$0xff]
      %v1506 = vld [vmem:[#allocation2 + $0x1c8] sm:$0x1f]
      %v1507 = vld [vmem:[#allocation2 + $0x10] sm:$0xff]
      %v1508 = vld [vmem:[#allocation2 + $0x18] sm:$0x1f]
      %v1509 = vld [vmem:[#allocation2 + $0x30] sm:$0xff]
      %v1510 = vld [vmem:[#allocation2 + $0x38] sm:$0x1f]
      %v1511 = vld [vmem:[#allocation2 + $0x50] sm:$0xff]
      %v1512 = vld [vmem:[#allocation2 + $0x58] sm:$0x1f]
      %v1513 = vld [vmem:[#allocation2 + $0x70] sm:$0xff]
      %v1514 = vld [vmem:[#allocation2 + $0x78] sm:$0x1f]
      %v1515 = vld [vmem:[#allocation2 + $0x90] sm:$0xff]
      %v1516 = vld [vmem:[#allocation2 + $0x98] sm:$0x1f]
      %v1517 = vld [vmem:[#allocation2 + $0xb0] sm:$0xff]
      %v1518 = vld [vmem:[#allocation2 + $0xb8] sm:$0x1f]
      %v1519 = vld [vmem:[#allocation2 + $0xd0] sm:$0xff]
      %v1520 = vld [vmem:[#allocation2 + $0xd8] sm:$0x1f]
      %v1521 = vld [vmem:[#allocation2 + $0xf0] sm:$0xff]
      %v1522 = vld [vmem:[#allocation2 + $0xf8] sm:$0x1f]
      %v1523 = vld [vmem:[#allocation2 + $0x110] sm:$0xff]
      %v1524 = vld [vmem:[#allocation2 + $0x118] sm:$0x1f]
      %v1525 = vld [vmem:[#allocation2 + $0x130] sm:$0xff]
      %v1526 = vld [vmem:[#allocation2 + $0x138] sm:$0x1f]
      %v1527 = vld [vmem:[#allocation2 + $0x150] sm:$0xff]
      %v1528 = vld [vmem:[#allocation2 + $0x158] sm:$0x1f]
      %v1529 = vld [vmem:[#allocation2 + $0x170] sm:$0xff]
      %v1530 = vld [vmem:[#allocation2 + $0x178] sm:$0x1f]
      %v1531 = vld [vmem:[#allocation2 + $0x190] sm:$0xff]
      %v1532 = vld [vmem:[#allocation2 + $0x198] sm:$0x1f]
      %v1533 = vld [vmem:[#allocation2 + $0x1b0] sm:$0xff]
      %v1534 = vld [vmem:[#allocation2 + $0x1b8] sm:$0x1f]
      %v1535 = vld [vmem:[#allocation2 + $0x1d0] sm:$0xff]
      %v1536 = vld [vmem:[#allocation2 + $0x1d8] sm:$0x1f]
      %v1537 = vmax.f32 %v1477, %v1507
      %v1538 = vmax.f32 %v1478, %v1508
      %v1539 = vmax.f32 %v1479, %v1509
      %v1540 = vmax.f32 %v1480, %v1510
      %v1541 = vmax.f32 %v1481, %v1511
      %v1542 = vmax.f32 %v1482, %v1512
      %v1543 = vmax.f32 %v1483, %v1513
      %v1544 = vmax.f32 %v1484, %v1514
      %v1545 = vmax.f32 %v1485, %v1515
      %v1546 = vmax.f32 %v1486, %v1516
      %v1547 = vmax.f32 %v1487, %v1517
      %v1548 = vmax.f32 %v1488, %v1518
      %v1549 = vmax.f32 %v1489, %v1519
      %v1550 = vmax.f32 %v1490, %v1520
      %v1551 = vmax.f32 %v1491, %v1521
      %v1552 = vmax.f32 %v1492, %v1522
      %v1553 = vmax.f32 %v1493, %v1523
      %v1554 = vmax.f32 %v1494, %v1524
      %v1555 = vmax.f32 %v1495, %v1525
      %v1556 = vmax.f32 %v1496, %v1526
      %v1557 = vmax.f32 %v1497, %v1527
      %v1558 = vmax.f32 %v1498, %v1528
      %v1559 = vmax.f32 %v1499, %v1529
      %v1560 = vmax.f32 %v1500, %v1530
      %v1561 = vmax.f32 %v1501, %v1531
      %v1562 = vmax.f32 %v1502, %v1532
      %v1563 = vmax.f32 %v1503, %v1533
      %v1564 = vmax.f32 %v1504, %v1534
      %v1565 = vmax.f32 %v1505, %v1535
      %v1566 = vmax.f32 %v1506, %v1536
      %v1567 = vld [vmem:[#allocation2 + $0x1] sm:$0xff]
      %v1568 = vld [vmem:[#allocation2 + $0x9] sm:$0x1f]
      %v1569 = vld [vmem:[#allocation2 + $0x21] sm:$0xff]
      %v1570 = vld [vmem:[#allocation2 + $0x29] sm:$0x1f]
      %v1571 = vld [vmem:[#allocation2 + $0x41] sm:$0xff]
      %v1572 = vld [vmem:[#allocation2 + $0x49] sm:$0x1f]
      %v1573 = vld [vmem:[#allocation2 + $0x61] sm:$0xff]
      %v1574 = vld [vmem:[#allocation2 + $0x69] sm:$0x1f]
      %v1575 = vld [vmem:[#allocation2 + $0x81] sm:$0xff]
      %v1576 = vld [vmem:[#allocation2 + $0x89] sm:$0x1f]
      %v1577 = vld [vmem:[#allocation2 + $0xa1] sm:$0xff]
      %v1578 = vld [vmem:[#allocation2 + $0xa9] sm:$0x1f]
      %v1579 = vld [vmem:[#allocation2 + $0xc1] sm:$0xff]
      %v1580 = vld [vmem:[#allocation2 + $0xc9] sm:$0x1f]
      %v1581 = vld [vmem:[#allocation2 + $0xe1] sm:$0xff]
      %v1582 = vld [vmem:[#allocation2 + $0xe9] sm:$0x1f]
      %v1583 = vld [vmem:[#allocation2 + $0x101] sm:$0xff]
      %v1584 = vld [vmem:[#allocation2 + $0x109] sm:$0x1f]
      %v1585 = vld [vmem:[#allocation2 + $0x121] sm:$0xff]
      %v1586 = vld [vmem:[#allocation2 + $0x129] sm:$0x1f]
      %v1587 = vld [vmem:[#allocation2 + $0x141] sm:$0xff]
      %v1588 = vld [vmem:[#allocation2 + $0x149] sm:$0x1f]
      %v1589 = vld [vmem:[#allocation2 + $0x161] sm:$0xff]
      %v1590 = vld [vmem:[#allocation2 + $0x169] sm:$0x1f]
      %v1591 = vld [vmem:[#allocation2 + $0x181] sm:$0xff]
      %v1592 = vld [vmem:[#allocation2 + $0x189] sm:$0x1f]
      %v1593 = vld [vmem:[#allocation2 + $0x1a1] sm:$0xff]
      %v1594 = vld [vmem:[#allocation2 + $0x1a9] sm:$0x1f]
      %v1595 = vld [vmem:[#allocation2 + $0x1c1] sm:$0xff]
      %v1596 = vld [vmem:[#allocation2 + $0x1c9] sm:$0x1f]
      %v1597 = vmax.f32 %v1537, %v1567
      %v1598 = vmax.f32 %v1538, %v1568
      %v1599 = vmax.f32 %v1539, %v1569
      %v1600 = vmax.f32 %v1540, %v1570
      %v1601 = vmax.f32 %v1541, %v1571
      %v1602 = vmax.f32 %v1542, %v1572
      %v1603 = vmax.f32 %v1543, %v1573
      %v1604 = vmax.f32 %v1544, %v1574
      %v1605 = vmax.f32 %v1545, %v1575
      %v1606 = vmax.f32 %v1546, %v1576
      %v1607 = vmax.f32 %v1547, %v1577
      %v1608 = vmax.f32 %v1548, %v1578
      %v1609 = vmax.f32 %v1549, %v1579
      %v1610 = vmax.f32 %v1550, %v1580
      %v1611 = vmax.f32 %v1551, %v1581
      %v1612 = vmax.f32 %v1552, %v1582
      %v1613 = vmax.f32 %v1553, %v1583
      %v1614 = vmax.f32 %v1554, %v1584
      %v1615 = vmax.f32 %v1555, %v1585
      %v1616 = vmax.f32 %v1556, %v1586
      %v1617 = vmax.f32 %v1557, %v1587
      %v1618 = vmax.f32 %v1558, %v1588
      %v1619 = vmax.f32 %v1559, %v1589
      %v1620 = vmax.f32 %v1560, %v1590
      %v1621 = vmax.f32 %v1561, %v1591
      %v1622 = vmax.f32 %v1562, %v1592
      %v1623 = vmax.f32 %v1563, %v1593
      %v1624 = vmax.f32 %v1564, %v1594
      %v1625 = vmax.f32 %v1565, %v1595
      %v1626 = vmax.f32 %v1566, %v1596
      %v1627 = vld [vmem:[#allocation2 + $0x11] sm:$0xff]
      %v1628 = vld [vmem:[#allocation2 + $0x19] sm:$0x1f]
      %v1629 = vld [vmem:[#allocation2 + $0x31] sm:$0xff]
      %v1630 = vld [vmem:[#allocation2 + $0x39] sm:$0x1f]
      %v1631 = vld [vmem:[#allocation2 + $0x51] sm:$0xff]
      %v1632 = vld [vmem:[#allocation2 + $0x59] sm:$0x1f]
      %v1633 = vld [vmem:[#allocation2 + $0x71] sm:$0xff]
      %v1634 = vld [vmem:[#allocation2 + $0x79] sm:$0x1f]
      %v1635 = vld [vmem:[#allocation2 + $0x91] sm:$0xff]
      %v1636 = vld [vmem:[#allocation2 + $0x99] sm:$0x1f]
      %v1637 = vld [vmem:[#allocation2 + $0xb1] sm:$0xff]
      %v1638 = vld [vmem:[#allocation2 + $0xb9] sm:$0x1f]
      %v1639 = vld [vmem:[#allocation2 + $0xd1] sm:$0xff]
      %v1640 = vld [vmem:[#allocation2 + $0xd9] sm:$0x1f]
      %v1641 = vld [vmem:[#allocation2 + $0xf1] sm:$0xff]
      %v1642 = vld [vmem:[#allocation2 + $0xf9] sm:$0x1f]
      %v1643 = vld [vmem:[#allocation2 + $0x111] sm:$0xff]
      %v1644 = vld [vmem:[#allocation2 + $0x119] sm:$0x1f]
      %v1645 = vld [vmem:[#allocation2 + $0x131] sm:$0xff]
      %v1646 = vld [vmem:[#allocation2 + $0x139] sm:$0x1f]
      %v1647 = vld [vmem:[#allocation2 + $0x151] sm:$0xff]
      %v1648 = vld [vmem:[#allocation2 + $0x159] sm:$0x1f]
      %v1649 = vld [vmem:[#allocation2 + $0x171] sm:$0xff]
      %v1650 = vld [vmem:[#allocation2 + $0x179] sm:$0x1f]
      %v1651 = vld [vmem:[#allocation2 + $0x191] sm:$0xff]
      %v1652 = vld [vmem:[#allocation2 + $0x199] sm:$0x1f]
      %v1653 = vld [vmem:[#allocation2 + $0x1b1] sm:$0xff]
      %v1654 = vld [vmem:[#allocation2 + $0x1b9] sm:$0x1f]
      %v1655 = vld [vmem:[#allocation2 + $0x1d1] sm:$0xff]
      %v1656 = vld [vmem:[#allocation2 + $0x1d9] sm:$0x1f]
      %v1657 = vmax.f32 %v1597, %v1627
      %v1658 = vmax.f32 %v1598, %v1628
      %v1659 = vmax.f32 %v1599, %v1629
      %v1660 = vmax.f32 %v1600, %v1630
      %v1661 = vmax.f32 %v1601, %v1631
      %v1662 = vmax.f32 %v1602, %v1632
      %v1663 = vmax.f32 %v1603, %v1633
      %v1664 = vmax.f32 %v1604, %v1634
      %v1665 = vmax.f32 %v1605, %v1635
      %v1666 = vmax.f32 %v1606, %v1636
      %v1667 = vmax.f32 %v1607, %v1637
      %v1668 = vmax.f32 %v1608, %v1638
      %v1669 = vmax.f32 %v1609, %v1639
      %v1670 = vmax.f32 %v1610, %v1640
      %v1671 = vmax.f32 %v1611, %v1641
      %v1672 = vmax.f32 %v1612, %v1642
      %v1673 = vmax.f32 %v1613, %v1643
      %v1674 = vmax.f32 %v1614, %v1644
      %v1675 = vmax.f32 %v1615, %v1645
      %v1676 = vmax.f32 %v1616, %v1646
      %v1677 = vmax.f32 %v1617, %v1647
      %v1678 = vmax.f32 %v1618, %v1648
      %v1679 = vmax.f32 %v1619, %v1649
      %v1680 = vmax.f32 %v1620, %v1650
      %v1681 = vmax.f32 %v1621, %v1651
      %v1682 = vmax.f32 %v1622, %v1652
      %v1683 = vmax.f32 %v1623, %v1653
      %v1684 = vmax.f32 %v1624, %v1654
      %v1685 = vmax.f32 %v1625, %v1655
      %v1686 = vmax.f32 %v1626, %v1656
      %v1687 = vld [vmem:[#allocation2 + $0x2] sm:$0xff]
      %v1688 = vld [vmem:[#allocation2 + $0xa] sm:$0x1f]
      %v1689 = vld [vmem:[#allocation2 + $0x22] sm:$0xff]
      %v1690 = vld [vmem:[#allocation2 + $0x2a] sm:$0x1f]
      %v1691 = vld [vmem:[#allocation2 + $0x42] sm:$0xff]
      %v1692 = vld [vmem:[#allocation2 + $0x4a] sm:$0x1f]
      %v1693 = vld [vmem:[#allocation2 + $0x62] sm:$0xff]
      %v1694 = vld [vmem:[#allocation2 + $0x6a] sm:$0x1f]
      %v1695 = vld [vmem:[#allocation2 + $0x82] sm:$0xff]
      %v1696 = vld [vmem:[#allocation2 + $0x8a] sm:$0x1f]
      %v1697 = vld [vmem:[#allocation2 + $0xa2] sm:$0xff]
      %v1698 = vld [vmem:[#allocation2 + $0xaa] sm:$0x1f]
      %v1699 = vld [vmem:[#allocation2 + $0xc2] sm:$0xff]
      %v1700 = vld [vmem:[#allocation2 + $0xca] sm:$0x1f]
      %v1701 = vld [vmem:[#allocation2 + $0xe2] sm:$0xff]
      %v1702 = vld [vmem:[#allocation2 + $0xea] sm:$0x1f]
      %v1703 = vld [vmem:[#allocation2 + $0x102] sm:$0xff]
      %v1704 = vld [vmem:[#allocation2 + $0x10a] sm:$0x1f]
      %v1705 = vld [vmem:[#allocation2 + $0x122] sm:$0xff]
      %v1706 = vld [vmem:[#allocation2 + $0x12a] sm:$0x1f]
      %v1707 = vld [vmem:[#allocation2 + $0x142] sm:$0xff]
      %v1708 = vld [vmem:[#allocation2 + $0x14a] sm:$0x1f]
      %v1709 = vld [vmem:[#allocation2 + $0x162] sm:$0xff]
      %v1710 = vld [vmem:[#allocation2 + $0x16a] sm:$0x1f]
      %v1711 = vld [vmem:[#allocation2 + $0x182] sm:$0xff]
      %v1712 = vld [vmem:[#allocation2 + $0x18a] sm:$0x1f]
      %v1713 = vld [vmem:[#allocation2 + $0x1a2] sm:$0xff]
      %v1714 = vld [vmem:[#allocation2 + $0x1aa] sm:$0x1f]
      %v1715 = vld [vmem:[#allocation2 + $0x1c2] sm:$0xff]
      %v1716 = vld [vmem:[#allocation2 + $0x1ca] sm:$0x1f]
      %v1717 = vmax.f32 %v1657, %v1687
      %v1718 = vmax.f32 %v1658, %v1688
      %v1719 = vmax.f32 %v1659, %v1689
      %v1720 = vmax.f32 %v1660, %v1690
      %v1721 = vmax.f32 %v1661, %v1691
      %v1722 = vmax.f32 %v1662, %v1692
      %v1723 = vmax.f32 %v1663, %v1693
      %v1724 = vmax.f32 %v1664, %v1694
      %v1725 = vmax.f32 %v1665, %v1695
      %v1726 = vmax.f32 %v1666, %v1696
      %v1727 = vmax.f32 %v1667, %v1697
      %v1728 = vmax.f32 %v1668, %v1698
      %v1729 = vmax.f32 %v1669, %v1699
      %v1730 = vmax.f32 %v1670, %v1700
      %v1731 = vmax.f32 %v1671, %v1701
      %v1732 = vmax.f32 %v1672, %v1702
      %v1733 = vmax.f32 %v1673, %v1703
      %v1734 = vmax.f32 %v1674, %v1704
      %v1735 = vmax.f32 %v1675, %v1705
      %v1736 = vmax.f32 %v1676, %v1706
      %v1737 = vmax.f32 %v1677, %v1707
      %v1738 = vmax.f32 %v1678, %v1708
      %v1739 = vmax.f32 %v1679, %v1709
      %v1740 = vmax.f32 %v1680, %v1710
      %v1741 = vmax.f32 %v1681, %v1711
      %v1742 = vmax.f32 %v1682, %v1712
      %v1743 = vmax.f32 %v1683, %v1713
      %v1744 = vmax.f32 %v1684, %v1714
      %v1745 = vmax.f32 %v1685, %v1715
      %v1746 = vmax.f32 %v1686, %v1716
      %s1747 = scalar_lea.vmem [#allocation2], 480
      %v1748 = vld [vmem:[%s1747] sm:$0xff]
      %v1749 = vld [vmem:[%s1747 + $0x8] sm:$0x1f]
      %v1750 = vld [vmem:[%s1747 + $0x20] sm:$0xff]
      %v1751 = vld [vmem:[%s1747 + $0x28] sm:$0x1f]
      %v1752 = vld [vmem:[%s1747 + $0x40] sm:$0xff]
      %v1753 = vld [vmem:[%s1747 + $0x48] sm:$0x1f]
      %v1754 = vld [vmem:[%s1747 + $0x60] sm:$0xff]
      %v1755 = vld [vmem:[%s1747 + $0x68] sm:$0x1f]
      %v1756 = vld [vmem:[%s1747 + $0x80] sm:$0xff]
      %v1757 = vld [vmem:[%s1747 + $0x88] sm:$0x1f]
      %v1758 = vld [vmem:[%s1747 + $0xa0] sm:$0xff]
      %v1759 = vld [vmem:[%s1747 + $0xa8] sm:$0x1f]
      %v1760 = vld [vmem:[%s1747 + $0xc0] sm:$0xff]
      %v1761 = vld [vmem:[%s1747 + $0xc8] sm:$0x1f]
      %v1762 = vld [vmem:[%s1747 + $0xe0] sm:$0xff]
      %v1763 = vld [vmem:[%s1747 + $0xe8] sm:$0x1f]
      %v1764 = vld [vmem:[%s1747 + $0x100] sm:$0xff]
      %v1765 = vld [vmem:[%s1747 + $0x108] sm:$0x1f]
      %v1766 = vld [vmem:[%s1747 + $0x120] sm:$0xff]
      %v1767 = vld [vmem:[%s1747 + $0x128] sm:$0x1f]
      %v1768 = vld [vmem:[%s1747 + $0x140] sm:$0xff]
      %v1769 = vld [vmem:[%s1747 + $0x148] sm:$0x1f]
      %v1770 = vld [vmem:[%s1747 + $0x160] sm:$0xff]
      %v1771 = vld [vmem:[%s1747 + $0x168] sm:$0x1f]
      %v1772 = vld [vmem:[%s1747 + $0x180] sm:$0xff]
      %v1773 = vld [vmem:[%s1747 + $0x188] sm:$0x1f]
      %v1774 = vld [vmem:[%s1747 + $0x1a0] sm:$0xff]
      %v1775 = vld [vmem:[%s1747 + $0x1a8] sm:$0x1f]
      %v1776 = vld [vmem:[%s1747 + $0x10] sm:$0xff]
      %v1777 = vld [vmem:[%s1747 + $0x18] sm:$0x1f]
      %v1778 = vld [vmem:[%s1747 + $0x30] sm:$0xff]
      %v1779 = vld [vmem:[%s1747 + $0x38] sm:$0x1f]
      %v1780 = vld [vmem:[%s1747 + $0x50] sm:$0xff]
      %v1781 = vld [vmem:[%s1747 + $0x58] sm:$0x1f]
      %v1782 = vld [vmem:[%s1747 + $0x70] sm:$0xff]
      %v1783 = vld [vmem:[%s1747 + $0x78] sm:$0x1f]
      %v1784 = vld [vmem:[%s1747 + $0x90] sm:$0xff]
      %v1785 = vld [vmem:[%s1747 + $0x98] sm:$0x1f]
      %v1786 = vld [vmem:[%s1747 + $0xb0] sm:$0xff]
      %v1787 = vld [vmem:[%s1747 + $0xb8] sm:$0x1f]
      %v1788 = vld [vmem:[%s1747 + $0xd0] sm:$0xff]
      %v1789 = vld [vmem:[%s1747 + $0xd8] sm:$0x1f]
      %v1790 = vld [vmem:[%s1747 + $0xf0] sm:$0xff]
      %v1791 = vld [vmem:[%s1747 + $0xf8] sm:$0x1f]
      %v1792 = vld [vmem:[%s1747 + $0x110] sm:$0xff]
      %v1793 = vld [vmem:[%s1747 + $0x118] sm:$0x1f]
      %v1794 = vld [vmem:[%s1747 + $0x130] sm:$0xff]
      %v1795 = vld [vmem:[%s1747 + $0x138] sm:$0x1f]
      %v1796 = vld [vmem:[%s1747 + $0x150] sm:$0xff]
      %v1797 = vld [vmem:[%s1747 + $0x158] sm:$0x1f]
      %v1798 = vld [vmem:[%s1747 + $0x170] sm:$0xff]
      %v1799 = vld [vmem:[%s1747 + $0x178] sm:$0x1f]
      %v1800 = vld [vmem:[%s1747 + $0x190] sm:$0xff]
      %v1801 = vld [vmem:[%s1747 + $0x198] sm:$0x1f]
      %v1802 = vld [vmem:[%s1747 + $0x1b0] sm:$0xff]
      %v1803 = vld [vmem:[%s1747 + $0x1b8] sm:$0x1f]
      %v1804 = vmax.f32 %v1748, %v1776
      %v1805 = vmax.f32 %v1749, %v1777
      %v1806 = vmax.f32 %v1750, %v1778
      %v1807 = vmax.f32 %v1751, %v1779
      %v1808 = vmax.f32 %v1752, %v1780
      %v1809 = vmax.f32 %v1753, %v1781
      %v1810 = vmax.f32 %v1754, %v1782
      %v1811 = vmax.f32 %v1755, %v1783
      %v1812 = vmax.f32 %v1756, %v1784
      %v1813 = vmax.f32 %v1757, %v1785
      %v1814 = vmax.f32 %v1758, %v1786
      %v1815 = vmax.f32 %v1759, %v1787
      %v1816 = vmax.f32 %v1760, %v1788
      %v1817 = vmax.f32 %v1761, %v1789
      %v1818 = vmax.f32 %v1762, %v1790
      %v1819 = vmax.f32 %v1763, %v1791
      %v1820 = vmax.f32 %v1764, %v1792
      %v1821 = vmax.f32 %v1765, %v1793
      %v1822 = vmax.f32 %v1766, %v1794
      %v1823 = vmax.f32 %v1767, %v1795
      %v1824 = vmax.f32 %v1768, %v1796
      %v1825 = vmax.f32 %v1769, %v1797
      %v1826 = vmax.f32 %v1770, %v1798
      %v1827 = vmax.f32 %v1771, %v1799
      %v1828 = vmax.f32 %v1772, %v1800
      %v1829 = vmax.f32 %v1773, %v1801
      %v1830 = vmax.f32 %v1774, %v1802
      %v1831 = vmax.f32 %v1775, %v1803
      %v1832 = vld [vmem:[%s1747 + $0x1] sm:$0xff]
      %v1833 = vld [vmem:[%s1747 + $0x9] sm:$0x1f]
      %v1834 = vld [vmem:[%s1747 + $0x21] sm:$0xff]
      %v1835 = vld [vmem:[%s1747 + $0x29] sm:$0x1f]
      %v1836 = vld [vmem:[%s1747 + $0x41] sm:$0xff]
      %v1837 = vld [vmem:[%s1747 + $0x49] sm:$0x1f]
      %v1838 = vld [vmem:[%s1747 + $0x61] sm:$0xff]
      %v1839 = vld [vmem:[%s1747 + $0x69] sm:$0x1f]
      %v1840 = vld [vmem:[%s1747 + $0x81] sm:$0xff]
      %v1841 = vld [vmem:[%s1747 + $0x89] sm:$0x1f]
      %v1842 = vld [vmem:[%s1747 + $0xa1] sm:$0xff]
      %v1843 = vld [vmem:[%s1747 + $0xa9] sm:$0x1f]
      %v1844 = vld [vmem:[%s1747 + $0xc1] sm:$0xff]
      %v1845 = vld [vmem:[%s1747 + $0xc9] sm:$0x1f]
      %v1846 = vld [vmem:[%s1747 + $0xe1] sm:$0xff]
      %v1847 = vld [vmem:[%s1747 + $0xe9] sm:$0x1f]
      %v1848 = vld [vmem:[%s1747 + $0x101] sm:$0xff]
      %v1849 = vld [vmem:[%s1747 + $0x109] sm:$0x1f]
      %v1850 = vld [vmem:[%s1747 + $0x121] sm:$0xff]
      %v1851 = vld [vmem:[%s1747 + $0x129] sm:$0x1f]
      %v1852 = vld [vmem:[%s1747 + $0x141] sm:$0xff]
      %v1853 = vld [vmem:[%s1747 + $0x149] sm:$0x1f]
      %v1854 = vld [vmem:[%s1747 + $0x161] sm:$0xff]
      %v1855 = vld [vmem:[%s1747 + $0x169] sm:$0x1f]
      %v1856 = vld [vmem:[%s1747 + $0x181] sm:$0xff]
      %v1857 = vld [vmem:[%s1747 + $0x189] sm:$0x1f]
      %v1858 = vld [vmem:[%s1747 + $0x1a1] sm:$0xff]
      %v1859 = vld [vmem:[%s1747 + $0x1a9] sm:$0x1f]
      %v1860 = vmax.f32 %v1804, %v1832
      %v1861 = vmax.f32 %v1805, %v1833
      %v1862 = vmax.f32 %v1806, %v1834
      %v1863 = vmax.f32 %v1807, %v1835
      %v1864 = vmax.f32 %v1808, %v1836
      %v1865 = vmax.f32 %v1809, %v1837
      %v1866 = vmax.f32 %v1810, %v1838
      %v1867 = vmax.f32 %v1811, %v1839
      %v1868 = vmax.f32 %v1812, %v1840
      %v1869 = vmax.f32 %v1813, %v1841
      %v1870 = vmax.f32 %v1814, %v1842
      %v1871 = vmax.f32 %v1815, %v1843
      %v1872 = vmax.f32 %v1816, %v1844
      %v1873 = vmax.f32 %v1817, %v1845
      %v1874 = vmax.f32 %v1818, %v1846
      %v1875 = vmax.f32 %v1819, %v1847
      %v1876 = vmax.f32 %v1820, %v1848
      %v1877 = vmax.f32 %v1821, %v1849
      %v1878 = vmax.f32 %v1822, %v1850
      %v1879 = vmax.f32 %v1823, %v1851
      %v1880 = vmax.f32 %v1824, %v1852
      %v1881 = vmax.f32 %v1825, %v1853
      %v1882 = vmax.f32 %v1826, %v1854
      %v1883 = vmax.f32 %v1827, %v1855
      %v1884 = vmax.f32 %v1828, %v1856
      %v1885 = vmax.f32 %v1829, %v1857
      %v1886 = vmax.f32 %v1830, %v1858
      %v1887 = vmax.f32 %v1831, %v1859
      %v1888 = vld [vmem:[%s1747 + $0x11] sm:$0xff]
      %v1889 = vld [vmem:[%s1747 + $0x19] sm:$0x1f]
      %v1890 = vld [vmem:[%s1747 + $0x31] sm:$0xff]
      %v1891 = vld [vmem:[%s1747 + $0x39] sm:$0x1f]
      %v1892 = vld [vmem:[%s1747 + $0x51] sm:$0xff]
      %v1893 = vld [vmem:[%s1747 + $0x59] sm:$0x1f]
      %v1894 = vld [vmem:[%s1747 + $0x71] sm:$0xff]
      %v1895 = vld [vmem:[%s1747 + $0x79] sm:$0x1f]
      %v1896 = vld [vmem:[%s1747 + $0x91] sm:$0xff]
      %v1897 = vld [vmem:[%s1747 + $0x99] sm:$0x1f]
      %v1898 = vld [vmem:[%s1747 + $0xb1] sm:$0xff]
      %v1899 = vld [vmem:[%s1747 + $0xb9] sm:$0x1f]
      %v1900 = vld [vmem:[%s1747 + $0xd1] sm:$0xff]
      %v1901 = vld [vmem:[%s1747 + $0xd9] sm:$0x1f]
      %v1902 = vld [vmem:[%s1747 + $0xf1] sm:$0xff]
      %v1903 = vld [vmem:[%s1747 + $0xf9] sm:$0x1f]
      %v1904 = vld [vmem:[%s1747 + $0x111] sm:$0xff]
      %v1905 = vld [vmem:[%s1747 + $0x119] sm:$0x1f]
      %v1906 = vld [vmem:[%s1747 + $0x131] sm:$0xff]
      %v1907 = vld [vmem:[%s1747 + $0x139] sm:$0x1f]
      %v1908 = vld [vmem:[%s1747 + $0x151] sm:$0xff]
      %v1909 = vld [vmem:[%s1747 + $0x159] sm:$0x1f]
      %v1910 = vld [vmem:[%s1747 + $0x171] sm:$0xff]
      %v1911 = vld [vmem:[%s1747 + $0x179] sm:$0x1f]
      %v1912 = vld [vmem:[%s1747 + $0x191] sm:$0xff]
      %v1913 = vld [vmem:[%s1747 + $0x199] sm:$0x1f]
      %v1914 = vld [vmem:[%s1747 + $0x1b1] sm:$0xff]
      %v1915 = vld [vmem:[%s1747 + $0x1b9] sm:$0x1f]
      %v1916 = vmax.f32 %v1860, %v1888
      %v1917 = vmax.f32 %v1861, %v1889
      %v1918 = vmax.f32 %v1862, %v1890
      %v1919 = vmax.f32 %v1863, %v1891
      %v1920 = vmax.f32 %v1864, %v1892
      %v1921 = vmax.f32 %v1865, %v1893
      %v1922 = vmax.f32 %v1866, %v1894
      %v1923 = vmax.f32 %v1867, %v1895
      %v1924 = vmax.f32 %v1868, %v1896
      %v1925 = vmax.f32 %v1869, %v1897
      %v1926 = vmax.f32 %v1870, %v1898
      %v1927 = vmax.f32 %v1871, %v1899
      %v1928 = vmax.f32 %v1872, %v1900
      %v1929 = vmax.f32 %v1873, %v1901
      %v1930 = vmax.f32 %v1874, %v1902
      %v1931 = vmax.f32 %v1875, %v1903
      %v1932 = vmax.f32 %v1876, %v1904
      %v1933 = vmax.f32 %v1877, %v1905
      %v1934 = vmax.f32 %v1878, %v1906
      %v1935 = vmax.f32 %v1879, %v1907
      %v1936 = vmax.f32 %v1880, %v1908
      %v1937 = vmax.f32 %v1881, %v1909
      %v1938 = vmax.f32 %v1882, %v1910
      %v1939 = vmax.f32 %v1883, %v1911
      %v1940 = vmax.f32 %v1884, %v1912
      %v1941 = vmax.f32 %v1885, %v1913
      %v1942 = vmax.f32 %v1886, %v1914
      %v1943 = vmax.f32 %v1887, %v1915
      %v1944 = vld [vmem:[%s1747 + $0x2] sm:$0xff]
      %v1945 = vld [vmem:[%s1747 + $0xa] sm:$0x1f]
      %v1946 = vld [vmem:[%s1747 + $0x22] sm:$0xff]
      %v1947 = vld [vmem:[%s1747 + $0x2a] sm:$0x1f]
      %v1948 = vld [vmem:[%s1747 + $0x42] sm:$0xff]
      %v1949 = vld [vmem:[%s1747 + $0x4a] sm:$0x1f]
      %v1950 = vld [vmem:[%s1747 + $0x62] sm:$0xff]
      %v1951 = vld [vmem:[%s1747 + $0x6a] sm:$0x1f]
      %v1952 = vld [vmem:[%s1747 + $0x82] sm:$0xff]
      %v1953 = vld [vmem:[%s1747 + $0x8a] sm:$0x1f]
      %v1954 = vld [vmem:[%s1747 + $0xa2] sm:$0xff]
      %v1955 = vld [vmem:[%s1747 + $0xaa] sm:$0x1f]
      %v1956 = vld [vmem:[%s1747 + $0xc2] sm:$0xff]
      %v1957 = vld [vmem:[%s1747 + $0xca] sm:$0x1f]
      %v1958 = vld [vmem:[%s1747 + $0xe2] sm:$0xff]
      %v1959 = vld [vmem:[%s1747 + $0xea] sm:$0x1f]
      %v1960 = vld [vmem:[%s1747 + $0x102] sm:$0xff]
      %v1961 = vld [vmem:[%s1747 + $0x10a] sm:$0x1f]
      %v1962 = vld [vmem:[%s1747 + $0x122] sm:$0xff]
      %v1963 = vld [vmem:[%s1747 + $0x12a] sm:$0x1f]
      %v1964 = vld [vmem:[%s1747 + $0x142] sm:$0xff]
      %v1965 = vld [vmem:[%s1747 + $0x14a] sm:$0x1f]
      %v1966 = vld [vmem:[%s1747 + $0x162] sm:$0xff]
      %v1967 = vld [vmem:[%s1747 + $0x16a] sm:$0x1f]
      %v1968 = vld [vmem:[%s1747 + $0x182] sm:$0xff]
      %v1969 = vld [vmem:[%s1747 + $0x18a] sm:$0x1f]
      %v1970 = vld [vmem:[%s1747 + $0x1a2] sm:$0xff]
      %v1971 = vld [vmem:[%s1747 + $0x1aa] sm:$0x1f]
      %v1972 = vmax.f32 %v1916, %v1944
      %v1973 = vmax.f32 %v1917, %v1945
      %v1974 = vmax.f32 %v1918, %v1946
      %v1975 = vmax.f32 %v1919, %v1947
      %v1976 = vmax.f32 %v1920, %v1948
      %v1977 = vmax.f32 %v1921, %v1949
      %v1978 = vmax.f32 %v1922, %v1950
      %v1979 = vmax.f32 %v1923, %v1951
      %v1980 = vmax.f32 %v1924, %v1952
      %v1981 = vmax.f32 %v1925, %v1953
      %v1982 = vmax.f32 %v1926, %v1954
      %v1983 = vmax.f32 %v1927, %v1955
      %v1984 = vmax.f32 %v1928, %v1956
      %v1985 = vmax.f32 %v1929, %v1957
      %v1986 = vmax.f32 %v1930, %v1958
      %v1987 = vmax.f32 %v1931, %v1959
      %v1988 = vmax.f32 %v1932, %v1960
      %v1989 = vmax.f32 %v1933, %v1961
      %v1990 = vmax.f32 %v1934, %v1962
      %v1991 = vmax.f32 %v1935, %v1963
      %v1992 = vmax.f32 %v1936, %v1964
      %v1993 = vmax.f32 %v1937, %v1965
      %v1994 = vmax.f32 %v1938, %v1966
      %v1995 = vmax.f32 %v1939, %v1967
      %v1996 = vmax.f32 %v1940, %v1968
      %v1997 = vmax.f32 %v1941, %v1969
      %v1998 = vmax.f32 %v1942, %v1970
      %v1999 = vmax.f32 %v1943, %v1971
      %v2000 = vmax.f32 %v1717, %v1972
      %v2001 = vmax.f32 %v1718, %v1973
      %v2002 = vmax.f32 %v1719, %v1974
      %v2003 = vmax.f32 %v1720, %v1975
      %v2004 = vmax.f32 %v1721, %v1976
      %v2005 = vmax.f32 %v1722, %v1977
      %v2006 = vmax.f32 %v1723, %v1978
      %v2007 = vmax.f32 %v1724, %v1979
      %v2008 = vmax.f32 %v1725, %v1980
      %v2009 = vmax.f32 %v1726, %v1981
      %v2010 = vmax.f32 %v1727, %v1982
      %v2011 = vmax.f32 %v1728, %v1983
      %v2012 = vmax.f32 %v1729, %v1984
      %v2013 = vmax.f32 %v1730, %v1985
      %v2014 = vmax.f32 %v1731, %v1986
      %v2015 = vmax.f32 %v1732, %v1987
      %v2016 = vmax.f32 %v1733, %v1988
      %v2017 = vmax.f32 %v1734, %v1989
      %v2018 = vmax.f32 %v1735, %v1990
      %v2019 = vmax.f32 %v1736, %v1991
      %v2020 = vmax.f32 %v1737, %v1992
      %v2021 = vmax.f32 %v1738, %v1993
      %v2022 = vmax.f32 %v1739, %v1994
      %v2023 = vmax.f32 %v1740, %v1995
      %v2024 = vmax.f32 %v1741, %v1996
      %v2025 = vmax.f32 %v1742, %v1997
      %v2026 = vmax.f32 %v2000, %v1719
      %v2027 = vmax.f32 %v2001, %v1720
      %v2028 = vmax.f32 %v2002, %v1721
      %v2029 = vmax.f32 %v2003, %v1722
      %v2030 = vmax.f32 %v2004, %v1723
      %v2031 = vmax.f32 %v2005, %v1724
      %v2032 = vmax.f32 %v2006, %v1725
      %v2033 = vmax.f32 %v2007, %v1726
      %v2034 = vmax.f32 %v2008, %v1727
      %v2035 = vmax.f32 %v2009, %v1728
      %v2036 = vmax.f32 %v2010, %v1729
      %v2037 = vmax.f32 %v2011, %v1730
      %v2038 = vmax.f32 %v2012, %v1731
      %v2039 = vmax.f32 %v2013, %v1732
      %v2040 = vmax.f32 %v2014, %v1733
      %v2041 = vmax.f32 %v2015, %v1734
      %v2042 = vmax.f32 %v2016, %v1735
      %v2043 = vmax.f32 %v2017, %v1736
      %v2044 = vmax.f32 %v2018, %v1737
      %v2045 = vmax.f32 %v2019, %v1738
      %v2046 = vmax.f32 %v2020, %v1739
      %v2047 = vmax.f32 %v2021, %v1740
      %v2048 = vmax.f32 %v2022, %v1741
      %v2049 = vmax.f32 %v2023, %v1742
      %v2050 = vmax.f32 %v2024, %v1743
      %v2051 = vmax.f32 %v2025, %v1744
      %v2052 = vmax.f32 %v2026, %v1974
      %v2053 = vmax.f32 %v2027, %v1975
      %v2054 = vmax.f32 %v2028, %v1976
      %v2055 = vmax.f32 %v2029, %v1977
      %v2056 = vmax.f32 %v2030, %v1978
      %v2057 = vmax.f32 %v2031, %v1979
      %v2058 = vmax.f32 %v2032, %v1980
      %v2059 = vmax.f32 %v2033, %v1981
      %v2060 = vmax.f32 %v2034, %v1982
      %v2061 = vmax.f32 %v2035, %v1983
      %v2062 = vmax.f32 %v2036, %v1984
      %v2063 = vmax.f32 %v2037, %v1985
      %v2064 = vmax.f32 %v2038, %v1986
      %v2065 = vmax.f32 %v2039, %v1987
      %v2066 = vmax.f32 %v2040, %v1988
      %v2067 = vmax.f32 %v2041, %v1989
      %v2068 = vmax.f32 %v2042, %v1990
      %v2069 = vmax.f32 %v2043, %v1991
      %v2070 = vmax.f32 %v2044, %v1992
      %v2071 = vmax.f32 %v2045, %v1993
      %v2072 = vmax.f32 %v2046, %v1994
      %v2073 = vmax.f32 %v2047, %v1995
      %v2074 = vmax.f32 %v2048, %v1996
      %v2075 = vmax.f32 %v2049, %v1997
      %v2076 = vmax.f32 %v2050, %v1998
      %v2077 = vmax.f32 %v2051, %v1999
      %v2078 = vmax.f32 %v2052, %v1721
      %v2079 = vmax.f32 %v2053, %v1722
      %v2080 = vmax.f32 %v2054, %v1723
      %v2081 = vmax.f32 %v2055, %v1724
      %v2082 = vmax.f32 %v2056, %v1725
      %v2083 = vmax.f32 %v2057, %v1726
      %v2084 = vmax.f32 %v2058, %v1727
      %v2085 = vmax.f32 %v2059, %v1728
      %v2086 = vmax.f32 %v2060, %v1729
      %v2087 = vmax.f32 %v2061, %v1730
      %v2088 = vmax.f32 %v2062, %v1731
      %v2089 = vmax.f32 %v2063, %v1732
      %v2090 = vmax.f32 %v2064, %v1733
      %v2091 = vmax.f32 %v2065, %v1734
      %v2092 = vmax.f32 %v2066, %v1735
      %v2093 = vmax.f32 %v2067, %v1736
      %v2094 = vmax.f32 %v2068, %v1737
      %v2095 = vmax.f32 %v2069, %v1738
      %v2096 = vmax.f32 %v2070, %v1739
      %v2097 = vmax.f32 %v2071, %v1740
      %v2098 = vmax.f32 %v2072, %v1741
      %v2099 = vmax.f32 %v2073, %v1742
      %v2100 = vmax.f32 %v2074, %v1743
      %v2101 = vmax.f32 %v2075, %v1744
      %v2102 = vmax.f32 %v2076, %v1745
      %v2103 = vmax.f32 %v2077, %v1746
      %v2104 = vpack.c.bf16 %v2079, %v2078
      %v2105 = vpack.c.bf16 %v2081, %v2080
      %v2106 = vpack.c.bf16 %v2083, %v2082
      %v2107 = vpack.c.bf16 %v2085, %v2084
      %v2108 = vpack.c.bf16 %v2087, %v2086
      %v2109 = vpack.c.bf16 %v2089, %v2088
      %v2110 = vpack.c.bf16 %v2091, %v2090
      %v2111 = vpack.c.bf16 %v2093, %v2092
      %v2112 = vpack.c.bf16 %v2095, %v2094
      %v2113 = vpack.c.bf16 %v2097, %v2096
      %v2114 = vpack.c.bf16 %v2099, %v2098
      %v2115 = vpack.c.bf16 %v2101, %v2100
      %v2116 = vpack.c.bf16 %v2103, %v2102
      %v2130 = vunpack.c.l.b16 %v2104
      %v2131 = vunpack.c.h.b16 %v2104
      %v2132 = vunpack.c.l.b16 %v2105
      %v2133 = vunpack.c.h.b16 %v2105
      %v2134 = vunpack.c.l.b16 %v2106
      %v2135 = vunpack.c.h.b16 %v2106
      %v2136 = vunpack.c.l.b16 %v2107
      %v2137 = vunpack.c.h.b16 %v2107
      %v2138 = vunpack.c.l.b16 %v2108
      %v2139 = vunpack.c.h.b16 %v2108
      %v2140 = vunpack.c.l.b16 %v2109
      %v2141 = vunpack.c.h.b16 %v2109
      %v2142 = vunpack.c.l.b16 %v2110
      %v2143 = vunpack.c.h.b16 %v2110
      %v2144 = vunpack.c.l.b16 %v2111
      %v2145 = vunpack.c.h.b16 %v2111
      %v2146 = vunpack.c.l.b16 %v2112
      %v2147 = vunpack.c.h.b16 %v2112
      %v2148 = vunpack.c.l.b16 %v2113
      %v2149 = vunpack.c.h.b16 %v2113
      %v2150 = vunpack.c.l.b16 %v2114
      %v2151 = vunpack.c.h.b16 %v2114
      %v2152 = vunpack.c.l.b16 %v2115
      %v2153 = vunpack.c.h.b16 %v2115
      %v2154 = vunpack.c.l.b16 %v2116
      %v2155 = vunpack.c.h.b16 %v2116
      %v2156 = vpack.c.b16 %v2130, %v2130
      %v2157 = vpack.c.b16 %v2131, %v2131
      %v2158 = vpack.c.b16 %v2132, %v2132
      %v2159 = vpack.c.b16 %v2133, %v2133
      %v2160 = vpack.c.b16 %v2134, %v2134
      %v2161 = vpack.c.b16 %v2135, %v2135
      %v2162 = vpack.c.b16 %v2136, %v2136
      %v2163 = vpack.c.b16 %v2137, %v2137
      %v2164 = vpack.c.b16 %v2138, %v2138
      %v2165 = vpack.c.b16 %v2139, %v2139
      %v2166 = vpack.c.b16 %v2140, %v2140
      %v2167 = vpack.c.b16 %v2141, %v2141
      %v2168 = vpack.c.b16 %v2142, %v2142
      %v2169 = vpack.c.b16 %v2143, %v2143
      %v2170 = vpack.c.b16 %v2144, %v2144
      %v2171 = vpack.c.b16 %v2145, %v2145
      %v2172 = vpack.c.b16 %v2146, %v2146
      %v2173 = vpack.c.b16 %v2147, %v2147
      %v2174 = vpack.c.b16 %v2148, %v2148
      %v2175 = vpack.c.b16 %v2149, %v2149
      %v2176 = vpack.c.b16 %v2150, %v2150
      %v2177 = vpack.c.b16 %v2151, %v2151
      %v2178 = vpack.c.b16 %v2152, %v2152
      %v2179 = vpack.c.b16 %v2153, %v2153
      %v2180 = vpack.c.b16 %v2154, %v2154
      %v2181 = vpack.c.b16 %v2155, %v2155
      %vm2208 = vcmask 257024
      %2209 = vst.msk [vmem:[%s170] sm:$0xf] %vm2208, %v2156
      %vm2210 = vcmask 256000
      %vm2211 = vsmask.f32 2304
      %vm2212 = vmand %vm2210, %vm2211
      %v2213 = vld [vmem:[%s170 + $0x4] sm:$0x7]
      %v2214 = vsel %vm2212, %v2157, %v2213
      %2215 = vst [vmem:[%s170 + $0x4] sm:$0x7] %v2214
      %2216 = vst.msk [vmem:[%s170 + $0x8] sm:$0xf] %vm2208, %v2158
      %v2217 = vld [vmem:[%s170 + $0xc] sm:$0x7]
      %v2218 = vsel %vm2212, %v2159, %v2217
      %2219 = vst [vmem:[%s170 + $0xc] sm:$0x7] %v2218
      %2220 = vst.msk [vmem:[%s170 + $0x10] sm:$0xf] %vm2208, %v2160
      %v2221 = vld [vmem:[%s170 + $0x14] sm:$0x7]
      %v2222 = vsel %vm2212, %v2161, %v2221
      %2223 = vst [vmem:[%s170 + $0x14] sm:$0x7] %v2222
      %2224 = vst.msk [vmem:[%s170 + $0x18] sm:$0xf] %vm2208, %v2162
      %v2225 = vld [vmem:[%s170 + $0x1c] sm:$0x7]
      %v2226 = vsel %vm2212, %v2163, %v2225
      %2227 = vst [vmem:[%s170 + $0x1c] sm:$0x7] %v2226
      %2228 = vst.msk [vmem:[%s170 + $0x20] sm:$0xf] %vm2208, %v2164
      %v2229 = vld [vmem:[%s170 + $0x24] sm:$0x7]
      %v2230 = vsel %vm2212, %v2165, %v2229
      %2231 = vst [vmem:[%s170 + $0x24] sm:$0x7] %v2230
      %2232 = vst.msk [vmem:[%s170 + $0x28] sm:$0xf] %vm2208, %v2166
      %v2233 = vld [vmem:[%s170 + $0x2c] sm:$0x7]
      %v2234 = vsel %vm2212, %v2167, %v2233
      %2235 = vst [vmem:[%s170 + $0x2c] sm:$0x7] %v2234
      %2236 = vst.msk [vmem:[%s170 + $0x30] sm:$0xf] %vm2208, %v2168
      %v2237 = vld [vmem:[%s170 + $0x34] sm:$0x7]
      %v2238 = vsel %vm2212, %v2169, %v2237
      %2239 = vst [vmem:[%s170 + $0x34] sm:$0x7] %v2238
      %2240 = vst.msk [vmem:[%s170 + $0x38] sm:$0xf] %vm2208, %v2170
      %v2241 = vld [vmem:[%s170 + $0x3c] sm:$0x7]
      %v2242 = vsel %vm2212, %v2171, %v2241
      %2243 = vst [vmem:[%s170 + $0x3c] sm:$0x7] %v2242
      %2244 = vst.msk [vmem:[%s170 + $0x40] sm:$0xf] %vm2208, %v2172
      %v2245 = vld [vmem:[%s170 + $0x44] sm:$0x7]
      %v2246 = vsel %vm2212, %v2173, %v2245
      %2247 = vst [vmem:[%s170 + $0x44] sm:$0x7] %v2246
      %2248 = vst.msk [vmem:[%s170 + $0x48] sm:$0xf] %vm2208, %v2174
      %v2249 = vld [vmem:[%s170 + $0x4c] sm:$0x7]
      %v2250 = vsel %vm2212, %v2175, %v2249
      %2251 = vst [vmem:[%s170 + $0x4c] sm:$0x7] %v2250
      %2252 = vst.msk [vmem:[%s170 + $0x50] sm:$0xf] %vm2208, %v2176
      %v2253 = vld [vmem:[%s170 + $0x54] sm:$0x7]
      %v2254 = vsel %vm2212, %v2177, %v2253
      %2255 = vst [vmem:[%s170 + $0x54] sm:$0x7] %v2254
      %2256 = vst.msk [vmem:[%s170 + $0x58] sm:$0xf] %vm2208, %v2178
      %v2257 = vld [vmem:[%s170 + $0x5c] sm:$0x7]
      %v2258 = vsel %vm2212, %v2179, %v2257
      %2259 = vst [vmem:[%s170 + $0x5c] sm:$0x7] %v2258
      %2260 = vst.msk [vmem:[%s170 + $0x60] sm:$0xf] %vm2208, %v2180
      %v2261 = vld [vmem:[%s170 + $0x64] sm:$0x7]
      %v2262 = vsel %vm2212, %v2181, %v2261
      %2263 = vst [vmem:[%s170 + $0x64] sm:$0x7] %v2262
      %p2264 = scmp.lt.s32.totalorder %s14, 1
      %s2265 = scalar_select %p2264, %s14, 1
      %s2266 = smul.addr %s2265, 26
      %s2267 = smul.addr %s2266, 4
      %s2268 = scalar_lea.vmem %s3, %s2267
      // Predicated region
      $region33: #{forward.2} parent=31 // pred_check
        %p2269 = pneg %p100
      $region34: #{forward.2} parent=31 // pred_check_branch
        %2271 = sbr.rel (%p2269) target = $region36
      $region35: #{forward.2} parent=31 // pred_region
        _
      $region36: #{forward.2} parent=31 // pred_fallthru
        _
    $region32: #{forward.2} parent=5 // pred_fallthru
      _
    %p2272 = scmp.le.s32.totalorder 2, %s9
    // Predicated region
    $region37: #{forward.2} parent=5 // pred_check
      %p2273 = pneg %p2272
    $region38: #{forward.2} parent=5 // pred_check_branch
      %2275 = sbr.rel (%p2273) target = $region40
    $region39: #{forward.2} parent=5 // pred_region
      %s2276 = ssub.s32 %s9, 2
      // Predicated region
      $region41: #{forward.2} parent=39 // pred_check
        %p2277 = pneg %p106
      $region42: #{forward.2} parent=39 // pred_check_branch
        %2279 = sbr.rel (%p2277) target = $region44
      $region43: #{forward.2} parent=39 // pred_region
        %p2280 = scmp.lt.s32.totalorder %s15, 1
        %s2281 = scalar_select %p2280, %s15, 1
        %s2282 = smul.addr %s2281, 26
        %s2283 = smul.addr %s2282, 4
        %s2284 = scalar_lea.vmem %s3, %s2283
      $region44: #{forward.2} parent=39 // pred_fallthru
        _
    $region40: #{forward.2} parent=5 // pred_fallthru
      _
  $region6: #{forward.2} parent=0 // loop_footer
    %s13 = sadd.s32 1, %s9
  $region7: #{forward.2} parent=0 // loop_footer_branch
    %8 = sbr.rel target = $region3
  $region8: #{forward.2} parent=0 // loop_exit
    _

// kernel: forward.3
$region0: #{forward.3}
  #allocation0 [shape = 'u32[]', space=smem, size = 0x4, offset = 0x4, fixed_abs, tag = 'smem constant byte address 0x4 - core index']
  #allocation1 [shape = 'u32[144,128]{1,0:T(1,128)}', space=vmem, size = 0x12000, scoped, tag = 'internal scratch']
  #allocation2 [shape = 'f32[2,2,3,16,64]{4,3,2,1,0:T(8,128)}', space=vmem, size = 0x18000, scoped, tag = 'scratch operand']
  #allocation3 [shape = 'f32[2,64]{1,0:T(2,128)}', space=vmem, size = 0x400, scoped, tag = 'scratch operand']
  %s0 = inlined_call_operand.vmem [shape: bf16[2,96,896], index: 0, kind: input, shape index: {}]
  %s1 = inlined_call_operand.vmem [shape: bf16[896,64], index: 1, kind: input, shape index: {}]
  %s2 = inlined_call_operand.vmem [shape: f32[1,64], index: 2, kind: input, shape index: {}]
  %s3 = inlined_call_operand.vmem [shape: bf16[64,128], index: 3, kind: input, shape index: {}]
  %s4 = inlined_call_operand.vmem [shape: f32[1,128], index: 4, kind: input, shape index: {}]
  %s5 = inlined_call_operand.vmem [shape: bf16[128,2], index: 5, kind: input, shape index: {}]
  %s6 = inlined_call_operand.vmem [shape: f32[1,2], index: 6, kind: input, shape index: {}]
  %s7 = inlined_call_operand.hbm [shape: f32[2,2], index: 7, kind: output, shape index: {}]
  %s8 = sld [smem:[#allocation0]]
  $region38: #{forward.3} parent=0
    _
  %s10 = ssub.s32 1, %s8
  %s11 = scalar_select 0, %s10, %s8
  $region1: #{forward.3} parent=0
    #allocation4 [shape = 'u8[1024]{0}', space=vmem, size = 0x400, scoped, tag = 'output window, operand 0, single buffered']
    #allocation5 [shape = 's32[1]{0}', space=sflag, size = 0x4, scoped, tag = 'scoped memory for forward.3']
    %12 = vsyncpa [#allocation5], 0
    // Predicated region
    $region2: #{forward.3} parent=1 // pred_check
      _
    $region3: #{forward.3} parent=1 // pred_check_branch
      %14 = sbr.rel (0) target = $region5
    $region4: #{forward.3} parent=1 // pred_region
      _
    $region5: #{forward.3} parent=1 // pred_fallthru
      _
    // Predicated region
    $region6: #{forward.3} parent=1 // pred_check
      _
    $region7: #{forward.3} parent=1 // pred_check_branch
      %16 = sbr.rel (0) target = $region9
    $region8: #{forward.3} parent=1 // pred_region
      _
    $region9: #{forward.3} parent=1 // pred_fallthru
      _
    // Predicated region
    $region10: #{forward.3} parent=1 // pred_check
      _
    $region11: #{forward.3} parent=1 // pred_check_branch
      %18 = sbr.rel (0) target = $region13
    $region12: #{forward.3} parent=1 // pred_region
      _
    $region13: #{forward.3} parent=1 // pred_fallthru
      _
    // Predicated region
    $region14: #{forward.3} parent=1 // pred_check
      _
    $region15: #{forward.3} parent=1 // pred_check_branch
      %20 = sbr.rel (0) target = $region17
    $region16: #{forward.3} parent=1 // pred_region
      _
    $region17: #{forward.3} parent=1 // pred_fallthru
      _
    // Predicated region
    $region18: #{forward.3} parent=1 // pred_check
      _
    $region19: #{forward.3} parent=1 // pred_check_branch
      %22 = sbr.rel (0) target = $region21
    $region20: #{forward.3} parent=1 // pred_region
      _
    $region21: #{forward.3} parent=1 // pred_fallthru
      _
    // Predicated region
    $region22: #{forward.3} parent=1 // pred_check
      _
    $region23: #{forward.3} parent=1 // pred_check_branch
      %24 = sbr.rel (0) target = $region25
    $region24: #{forward.3} parent=1 // pred_region
      _
    $region25: #{forward.3} parent=1 // pred_fallthru
      _
    // Predicated region
    $region26: #{forward.3} parent=1 // pred_check
      _
    $region27: #{forward.3} parent=1 // pred_check_branch
      %26 = sbr.rel (0) target = $region29
    $region28: #{forward.3} parent=1 // pred_region
      _
    $region29: #{forward.3} parent=1 // pred_fallthru
      _
    %v28 = vld [vmem:[%s0] sm:$0xff]
    %v29 = vld [vmem:[%s0 + $0x8] sm:$0xff]
    %v30 = vld [vmem:[%s0 + $0x10] sm:$0xff]
    %v31 = vld [vmem:[%s0 + $0x18] sm:$0xf]
    %v32 = vld [vmem:[%s0 + $0x1c] sm:$0xff]
    %v33 = vld [vmem:[%s0 + $0x24] sm:$0xff]
    %v34 = vld [vmem:[%s0 + $0x2c] sm:$0xff]
    %v35 = vld [vmem:[%s0 + $0x34] sm:$0xf]
    %v36 = vld [vmem:[%s0 + $0x38] sm:$0xff]
    %v37 = vld [vmem:[%s0 + $0x40] sm:$0xff]
    %v38 = vld [vmem:[%s0 + $0x48] sm:$0xff]
    %v39 = vld [vmem:[%s0 + $0x50] sm:$0xf]
    %v40 = vld [vmem:[%s0 + $0x54] sm:$0xff]
    %v41 = vld [vmem:[%s0 + $0x5c] sm:$0xff]
    %v42 = vld [vmem:[%s0 + $0x64] sm:$0xff]
    %v43 = vld [vmem:[%s0 + $0x6c] sm:$0xf]
    %v44 = vld [vmem:[%s0 + $0x70] sm:$0xff]
    %v45 = vld [vmem:[%s0 + $0x78] sm:$0xff]
    %v46 = vld [vmem:[%s0 + $0x80] sm:$0xff]
    %v47 = vld [vmem:[%s0 + $0x88] sm:$0xf]
    %v48 = vld [vmem:[%s0 + $0x8c] sm:$0xff]
    %v49 = vld [vmem:[%s0 + $0x94] sm:$0xff]
    %v50 = vld [vmem:[%s0 + $0x9c] sm:$0xff]
    %v51 = vld [vmem:[%s0 + $0xa4] sm:$0xf]
    %v52 = vld [vmem:[%s0 + $0xa8] sm:$0xff]
    %v53 = vld [vmem:[%s0 + $0xb0] sm:$0xff]
    %v54 = vld [vmem:[%s0 + $0xb8] sm:$0xff]
    %v55 = vld [vmem:[%s0 + $0xc0] sm:$0xf]
    %v56 = vld [vmem:[%s0 + $0xc4] sm:$0xff]
    %v57 = vld [vmem:[%s0 + $0xcc] sm:$0xff]
    %v58 = vld [vmem:[%s0 + $0xd4] sm:$0xff]
    %v59 = vld [vmem:[%s0 + $0xdc] sm:$0xf]
    %v60 = vld [vmem:[%s0 + $0xe0] sm:$0xff]
    %v61 = vld [vmem:[%s0 + $0xe8] sm:$0xff]
    %v62 = vld [vmem:[%s0 + $0xf0] sm:$0xff]
    %v63 = vld [vmem:[%s0 + $0xf8] sm:$0xf]
    %v64 = vld [vmem:[%s0 + $0xfc] sm:$0xff]
    %v65 = vld [vmem:[%s0 + $0x104] sm:$0xff]
    %v66 = vld [vmem:[%s0 + $0x10c] sm:$0xff]
    %v67 = vld [vmem:[%s0 + $0x114] sm:$0xf]
    %v68 = vld [vmem:[%s0 + $0x118] sm:$0xff]
    %v69 = vld [vmem:[%s0 + $0x120] sm:$0xff]
    %v70 = vld [vmem:[%s0 + $0x128] sm:$0xff]
    %v71 = vld [vmem:[%s0 + $0x130] sm:$0xf]
    %v72 = vld [vmem:[%s0 + $0x134] sm:$0xff]
    %v73 = vld [vmem:[%s0 + $0x13c] sm:$0xff]
    %v74 = vld [vmem:[%s0 + $0x144] sm:$0xff]
    %v75 = vld [vmem:[%s0 + $0x14c] sm:$0xf]
    %v76 = vld [vmem:[%s0 + $0x150] sm:$0xff]
    %v77 = vld [vmem:[%s0 + $0x158] sm:$0xff]
    %v78 = vld [vmem:[%s0 + $0x160] sm:$0xff]
    %v79 = vld [vmem:[%s0 + $0x168] sm:$0xf]
    %v80 = vld [vmem:[%s0 + $0x16c] sm:$0xff]
    %v81 = vld [vmem:[%s0 + $0x174] sm:$0xff]
    %v82 = vld [vmem:[%s0 + $0x17c] sm:$0xff]
    %v83 = vld [vmem:[%s0 + $0x184] sm:$0xf]
    %v84 = vld [vmem:[%s0 + $0x188] sm:$0xff]
    %v85 = vld [vmem:[%s0 + $0x190] sm:$0xff]
    %v86 = vld [vmem:[%s0 + $0x198] sm:$0xff]
    %v87 = vld [vmem:[%s0 + $0x1a0] sm:$0xf]
    %v88 = vld [vmem:[%s0 + $0x1a4] sm:$0xff]
    %v89 = vld [vmem:[%s0 + $0x1ac] sm:$0xff]
    %v90 = vld [vmem:[%s0 + $0x1b4] sm:$0xff]
    %v91 = vld [vmem:[%s0 + $0x1bc] sm:$0xf]
    %v92 = vld [vmem:[%s0 + $0x1c0] sm:$0xff]
    %v93 = vld [vmem:[%s0 + $0x1c8] sm:$0xff]
    %v94 = vld [vmem:[%s0 + $0x1d0] sm:$0xff]
    %v95 = vld [vmem:[%s0 + $0x1d8] sm:$0xf]
    %v96 = vld [vmem:[%s0 + $0x1dc] sm:$0xff]
    %v97 = vld [vmem:[%s0 + $0x1e4] sm:$0xff]
    %v98 = vld [vmem:[%s0 + $0x1ec] sm:$0xff]
    %v99 = vld [vmem:[%s0 + $0x1f4] sm:$0xf]
    %v100 = vld [vmem:[%s0 + $0x1f8] sm:$0xff]
    %v101 = vld [vmem:[%s0 + $0x200] sm:$0xff]
    %v102 = vld [vmem:[%s0 + $0x208] sm:$0xff]
    %v103 = vld [vmem:[%s0 + $0x210] sm:$0xf]
    %v104 = vld [vmem:[%s0 + $0x214] sm:$0xff]
    %v105 = vld [vmem:[%s0 + $0x21c] sm:$0xff]
    %v106 = vld [vmem:[%s0 + $0x224] sm:$0xff]
    %v107 = vld [vmem:[%s0 + $0x22c] sm:$0xf]
    %v108 = vld [vmem:[%s0 + $0x230] sm:$0xff]
    %v109 = vld [vmem:[%s0 + $0x238] sm:$0xff]
    %v110 = vld [vmem:[%s0 + $0x240] sm:$0xff]
    %v111 = vld [vmem:[%s0 + $0x248] sm:$0xf]
    %v112 = vld [vmem:[%s0 + $0x24c] sm:$0xff]
    %v113 = vld [vmem:[%s0 + $0x254] sm:$0xff]
    %v114 = vld [vmem:[%s0 + $0x25c] sm:$0xff]
    %v115 = vld [vmem:[%s0 + $0x264] sm:$0xf]
    %v116 = vld [vmem:[%s0 + $0x268] sm:$0xff]
    %v117 = vld [vmem:[%s0 + $0x270] sm:$0xff]
    %v118 = vld [vmem:[%s0 + $0x278] sm:$0xff]
    %v119 = vld [vmem:[%s0 + $0x280] sm:$0xf]
    %v120 = vld [vmem:[%s0 + $0x284] sm:$0xff]
    %v121 = vld [vmem:[%s0 + $0x28c] sm:$0xff]
    %v122 = vld [vmem:[%s0 + $0x294] sm:$0xff]
    %v123 = vld [vmem:[%s0 + $0x29c] sm:$0xf]
    %v124 = vld [vmem:[%s1] sm:$0xf]
    %v125 = vld [vmem:[%s1 + $0x4] sm:$0xf]
    %v126 = vld [vmem:[%s1 + $0x8] sm:$0xf]
    %v127 = vld [vmem:[%s1 + $0xc] sm:$0xf]
    %v128 = vld [vmem:[%s1 + $0x10] sm:$0xf]
    %v129 = vld [vmem:[%s1 + $0x14] sm:$0xf]
    %v130 = vld [vmem:[%s1 + $0x18] sm:$0xf]
    %v131 = vld [vmem:[%s1 + $0x1c] sm:$0xf]
    %v132 = vld [vmem:[%s1 + $0x20] sm:$0xf]
    %v133 = vld [vmem:[%s1 + $0x24] sm:$0xf]
    %v134 = vld [vmem:[%s1 + $0x28] sm:$0xf]
    %v135 = vld [vmem:[%s1 + $0x2c] sm:$0xf]
    %v136 = vld [vmem:[%s1 + $0x30] sm:$0xf]
    %v137 = vld [vmem:[%s1 + $0x34] sm:$0xf]
    %v138 = vld [vmem:[%s1 + $0x38] sm:$0xf]
    %v139 = vld [vmem:[%s1 + $0x3c] sm:$0xf]
    %v140 = vld [vmem:[%s1 + $0x40] sm:$0xf]
    %v141 = vld [vmem:[%s1 + $0x44] sm:$0xf]
    %v142 = vld [vmem:[%s1 + $0x48] sm:$0xf]
    %v143 = vld [vmem:[%s1 + $0x4c] sm:$0xf]
    %v144 = vld [vmem:[%s1 + $0x50] sm:$0xf]
    %v145 = vld [vmem:[%s1 + $0x54] sm:$0xf]
    %v146 = vld [vmem:[%s1 + $0x58] sm:$0xf]
    %v147 = vld [vmem:[%s1 + $0x5c] sm:$0xf]
    %v148 = vld [vmem:[%s1 + $0x60] sm:$0xf]
    %v149 = vld [vmem:[%s1 + $0x64] sm:$0xf]
    %v150 = vld [vmem:[%s1 + $0x68] sm:$0xf]
    %v151 = vld [vmem:[%s1 + $0x6c] sm:$0xf]
    %v152 = vld [vmem:[%s1 + $0x70] sm:$0xf]
    %v153 = vld [vmem:[%s1 + $0x74] sm:$0xf]
    %v154 = vld [vmem:[%s1 + $0x78] sm:$0xf]
    %v155 = vld [vmem:[%s1 + $0x7c] sm:$0xf]
    %v156 = vld [vmem:[%s1 + $0x80] sm:$0xf]
    %v157 = vld [vmem:[%s1 + $0x84] sm:$0xf]
    %v158 = vld [vmem:[%s1 + $0x88] sm:$0xf]
    %v159 = vld [vmem:[%s1 + $0x8c] sm:$0xf]
    %v160 = vld [vmem:[%s1 + $0x90] sm:$0xf]
    %v161 = vld [vmem:[%s1 + $0x94] sm:$0xf]
    %v162 = vld [vmem:[%s1 + $0x98] sm:$0xf]
    %v163 = vld [vmem:[%s1 + $0x9c] sm:$0xf]
    %v164 = vld [vmem:[%s1 + $0xa0] sm:$0xf]
    %v165 = vld [vmem:[%s1 + $0xa4] sm:$0xf]
    %v166 = vld [vmem:[%s1 + $0xa8] sm:$0xf]
    %v167 = vld [vmem:[%s1 + $0xac] sm:$0xf]
    %v168 = vld [vmem:[%s1 + $0xb0] sm:$0xf]
    %v169 = vld [vmem:[%s1 + $0xb4] sm:$0xf]
    %v170 = vld [vmem:[%s1 + $0xb8] sm:$0xf]
    %v171 = vld [vmem:[%s1 + $0xbc] sm:$0xf]
    %v172 = vld [vmem:[%s1 + $0xc0] sm:$0xf]
    %v173 = vld [vmem:[%s1 + $0xc4] sm:$0xf]
    %v174 = vld [vmem:[%s1 + $0xc8] sm:$0xf]
    %v175 = vld [vmem:[%s1 + $0xcc] sm:$0xf]
    %v176 = vld [vmem:[%s1 + $0xd0] sm:$0xf]
    %v177 = vld [vmem:[%s1 + $0xd4] sm:$0xf]
    %v178 = vld [vmem:[%s1 + $0xd8] sm:$0xf]
    %v179 = vld [vmem:[%s1 + $0xdc] sm:$0xf]
    %v180 = vld [vmem:[%s1 + $0xe0] sm:$0xf]
    %v181 = vld [vmem:[%s1 + $0xe4] sm:$0xf]
    %v182 = vld [vmem:[%s1 + $0xe8] sm:$0xf]
    %v183 = vld [vmem:[%s1 + $0xec] sm:$0xf]
    %v184 = vld [vmem:[%s1 + $0xf0] sm:$0xf]
    %v185 = vld [vmem:[%s1 + $0xf4] sm:$0xf]
    %v186 = vld [vmem:[%s1 + $0xf8] sm:$0xf]
    %v187 = vld [vmem:[%s1 + $0xfc] sm:$0xf]
    %v188 = vld [vmem:[%s1 + $0x100] sm:$0xf]
    %v189 = vld [vmem:[%s1 + $0x104] sm:$0xf]
    %v190 = vld [vmem:[%s1 + $0x108] sm:$0xf]
    %v191 = vld [vmem:[%s1 + $0x10c] sm:$0xf]
    %v192 = vld [vmem:[%s1 + $0x110] sm:$0xf]
    %v193 = vld [vmem:[%s1 + $0x114] sm:$0xf]
    %v194 = vld [vmem:[%s1 + $0x118] sm:$0xf]
    %v195 = vld [vmem:[%s1 + $0x11c] sm:$0xf]
    %v196 = vld [vmem:[%s1 + $0x120] sm:$0xf]
    %v197 = vld [vmem:[%s1 + $0x124] sm:$0xf]
    %v198 = vld [vmem:[%s1 + $0x128] sm:$0xf]
    %v199 = vld [vmem:[%s1 + $0x12c] sm:$0xf]
    %v200 = vld [vmem:[%s1 + $0x130] sm:$0xf]
    %v201 = vld [vmem:[%s1 + $0x134] sm:$0xf]
    %v202 = vld [vmem:[%s1 + $0x138] sm:$0xf]
    %v203 = vld [vmem:[%s1 + $0x13c] sm:$0xf]
    %v204 = vld [vmem:[%s1 + $0x140] sm:$0xf]
    %v205 = vld [vmem:[%s1 + $0x144] sm:$0xf]
    %v206 = vld [vmem:[%s1 + $0x148] sm:$0xf]
    %v207 = vld [vmem:[%s1 + $0x14c] sm:$0xf]
    %v208 = vld [vmem:[%s1 + $0x150] sm:$0xf]
    %v209 = vld [vmem:[%s1 + $0x154] sm:$0xf]
    %v210 = vld [vmem:[%s1 + $0x158] sm:$0xf]
    %v211 = vld [vmem:[%s1 + $0x15c] sm:$0xf]
    %v212 = vld [vmem:[%s1 + $0x160] sm:$0xf]
    %v213 = vld [vmem:[%s1 + $0x164] sm:$0xf]
    %v214 = vld [vmem:[%s1 + $0x168] sm:$0xf]
    %v215 = vld [vmem:[%s1 + $0x16c] sm:$0xf]
    %v216 = vld [vmem:[%s1 + $0x170] sm:$0xf]
    %v217 = vld [vmem:[%s1 + $0x174] sm:$0xf]
    %v218 = vld [vmem:[%s1 + $0x178] sm:$0xf]
    %v219 = vld [vmem:[%s1 + $0x17c] sm:$0xf]
    %v220 = vld [vmem:[%s1 + $0x180] sm:$0xf]
    %v221 = vld [vmem:[%s1 + $0x184] sm:$0xf]
    %v222 = vld [vmem:[%s1 + $0x188] sm:$0xf]
    %v223 = vld [vmem:[%s1 + $0x18c] sm:$0xf]
    %v224 = vld [vmem:[%s1 + $0x190] sm:$0xf]
    %v225 = vld [vmem:[%s1 + $0x194] sm:$0xf]
    %v226 = vld [vmem:[%s1 + $0x198] sm:$0xf]
    %v227 = vld [vmem:[%s1 + $0x19c] sm:$0xf]
    %v228 = vld [vmem:[%s1 + $0x1a0] sm:$0xf]
    %v229 = vld [vmem:[%s1 + $0x1a4] sm:$0xf]
    %v230 = vld [vmem:[%s1 + $0x1a8] sm:$0xf]
    %v231 = vld [vmem:[%s1 + $0x1ac] sm:$0xf]
    %v232 = vld [vmem:[%s1 + $0x1b0] sm:$0xf]
    %v233 = vld [vmem:[%s1 + $0x1b4] sm:$0xf]
    %v234 = vld [vmem:[%s1 + $0x1b8] sm:$0xf]
    %v235 = vld [vmem:[%s1 + $0x1bc] sm:$0xf]
    %v236 = vld [vmem:[%s2] sm:$0x1]
    %v238 = vlaneseq
    %v239 = vshrl.u32 %v238, 7
    %v240 = vsub.s32 0, %v239
    %v241 = vrot.slane %v236, %v240
    %v339 = vunpack.c.l.b16 %v28
    %v340 = vunpack.c.h.b16 %v28
    %v341 = vunpack.c.l.b16 %v29
    %v342 = vunpack.c.h.b16 %v29
    %v343 = vunpack.c.l.b16 %v30
    %v344 = vunpack.c.h.b16 %v30
    %v345 = vunpack.c.l.b16 %v31
    %v346 = vunpack.c.l.b16 %v32
    %v347 = vunpack.c.h.b16 %v32
    %v348 = vunpack.c.l.b16 %v33
    %v349 = vunpack.c.h.b16 %v33
    %v350 = vunpack.c.l.b16 %v34
    %v351 = vunpack.c.h.b16 %v34
    %v352 = vunpack.c.l.b16 %v35
    %v353 = vunpack.c.l.b16 %v36
    %v354 = vunpack.c.h.b16 %v36
    %v355 = vunpack.c.l.b16 %v37
    %v356 = vunpack.c.h.b16 %v37
    %v357 = vunpack.c.l.b16 %v38
    %v358 = vunpack.c.h.b16 %v38
    %v359 = vunpack.c.l.b16 %v39
    %v360 = vunpack.c.l.b16 %v40
    %v361 = vunpack.c.h.b16 %v40
    %v362 = vunpack.c.l.b16 %v41
    %v363 = vunpack.c.h.b16 %v41
    %v364 = vunpack.c.l.b16 %v42
    %v365 = vunpack.c.h.b16 %v42
    %v366 = vunpack.c.l.b16 %v43
    %v367 = vunpack.c.l.b16 %v44
    %v368 = vunpack.c.h.b16 %v44
    %v369 = vunpack.c.l.b16 %v45
    %v370 = vunpack.c.h.b16 %v45
    %v371 = vunpack.c.l.b16 %v46
    %v372 = vunpack.c.h.b16 %v46
    %v373 = vunpack.c.l.b16 %v47
    %v374 = vunpack.c.l.b16 %v48
    %v375 = vunpack.c.h.b16 %v48
    %v376 = vunpack.c.l.b16 %v49
    %v377 = vunpack.c.h.b16 %v49
    %v378 = vunpack.c.l.b16 %v50
    %v379 = vunpack.c.h.b16 %v50
    %v380 = vunpack.c.l.b16 %v51
    %v381 = vunpack.c.l.b16 %v52
    %v382 = vunpack.c.h.b16 %v52
    %v383 = vunpack.c.l.b16 %v53
    %v384 = vunpack.c.h.b16 %v53
    %v385 = vunpack.c.l.b16 %v54
    %v386 = vunpack.c.h.b16 %v54
    %v387 = vunpack.c.l.b16 %v55
    %v388 = vunpack.c.l.b16 %v56
    %v389 = vunpack.c.h.b16 %v56
    %v390 = vunpack.c.l.b16 %v57
    %v391 = vunpack.c.h.b16 %v57
    %v392 = vunpack.c.l.b16 %v58
    %v393 = vunpack.c.h.b16 %v58
    %v394 = vunpack.c.l.b16 %v59
    %v395 = vunpack.c.l.b16 %v60
    %v396 = vunpack.c.h.b16 %v60
    %v397 = vunpack.c.l.b16 %v61
    %v398 = vunpack.c.h.b16 %v61
    %v399 = vunpack.c.l.b16 %v62
    %v400 = vunpack.c.h.b16 %v62
    %v401 = vunpack.c.l.b16 %v63
    %v402 = vunpack.c.l.b16 %v64
    %v403 = vunpack.c.h.b16 %v64
    %v404 = vunpack.c.l.b16 %v65
    %v405 = vunpack.c.h.b16 %v65
    %v406 = vunpack.c.l.b16 %v66
    %v407 = vunpack.c.h.b16 %v66
    %v408 = vunpack.c.l.b16 %v67
    %v409 = vunpack.c.l.b16 %v68
    %v410 = vunpack.c.h.b16 %v68
    %v411 = vunpack.c.l.b16 %v69
    %v412 = vunpack.c.h.b16 %v69
    %v413 = vunpack.c.l.b16 %v70
    %v414 = vunpack.c.h.b16 %v70
    %v415 = vunpack.c.l.b16 %v71
    %v416 = vunpack.c.l.b16 %v72
    %v417 = vunpack.c.h.b16 %v72
    %v418 = vunpack.c.l.b16 %v73
    %v419 = vunpack.c.h.b16 %v73
    %v420 = vunpack.c.l.b16 %v74
    %v421 = vunpack.c.h.b16 %v74
    %v422 = vunpack.c.l.b16 %v75
    %v423 = vunpack.c.l.b16 %v76
    %v424 = vunpack.c.h.b16 %v76
    %v425 = vunpack.c.l.b16 %v77
    %v426 = vunpack.c.h.b16 %v77
    %v427 = vunpack.c.l.b16 %v78
    %v428 = vunpack.c.h.b16 %v78
    %v429 = vunpack.c.l.b16 %v79
    %v430 = vunpack.c.l.b16 %v80
    %v431 = vunpack.c.h.b16 %v80
    %v432 = vunpack.c.l.b16 %v81
    %v433 = vunpack.c.h.b16 %v81
    %v434 = vunpack.c.l.b16 %v82
    %v435 = vunpack.c.h.b16 %v82
    %v436 = vunpack.c.l.b16 %v83
    %v437 = vunpack.c.l.b16 %v84
    %v438 = vunpack.c.h.b16 %v84
    %v439 = vunpack.c.l.b16 %v85
    %v440 = vunpack.c.h.b16 %v85
    %v441 = vunpack.c.l.b16 %v86
    %v442 = vunpack.c.h.b16 %v86
    %v443 = vunpack.c.l.b16 %v87
    %v444 = vunpack.c.l.b16 %v88
    %v445 = vunpack.c.h.b16 %v88
    %v446 = vunpack.c.l.b16 %v89
    %v447 = vunpack.c.h.b16 %v89
    %v448 = vunpack.c.l.b16 %v90
    %v449 = vunpack.c.h.b16 %v90
    %v450 = vunpack.c.l.b16 %v91
    %v451 = vunpack.c.l.b16 %v92
    %v452 = vunpack.c.h.b16 %v92
    %v453 = vunpack.c.l.b16 %v93
    %v454 = vunpack.c.h.b16 %v93
    %v455 = vunpack.c.l.b16 %v94
    %v456 = vunpack.c.h.b16 %v94
    %v457 = vunpack.c.l.b16 %v95
    %v458 = vunpack.c.l.b16 %v96
    %v459 = vunpack.c.h.b16 %v96
    %v460 = vunpack.c.l.b16 %v97
    %v461 = vunpack.c.h.b16 %v97
    %v462 = vunpack.c.l.b16 %v98
    %v463 = vunpack.c.h.b16 %v98
    %v464 = vunpack.c.l.b16 %v99
    %v465 = vunpack.c.l.b16 %v100
    %v466 = vunpack.c.h.b16 %v100
    %v467 = vunpack.c.l.b16 %v101
    %v468 = vunpack.c.h.b16 %v101
    %v469 = vunpack.c.l.b16 %v102
    %v470 = vunpack.c.h.b16 %v102
    %v471 = vunpack.c.l.b16 %v103
    %v472 = vunpack.c.l.b16 %v104
    %v473 = vunpack.c.h.b16 %v104
    %v474 = vunpack.c.l.b16 %v105
    %v475 = vunpack.c.h.b16 %v105
    %v476 = vunpack.c.l.b16 %v106
    %v477 = vunpack.c.h.b16 %v106
    %v478 = vunpack.c.l.b16 %v107
    %v479 = vunpack.c.l.b16 %v108
    %v480 = vunpack.c.h.b16 %v108
    %v481 = vunpack.c.l.b16 %v109
    %v482 = vunpack.c.h.b16 %v109
    %v483 = vunpack.c.l.b16 %v110
    %v484 = vunpack.c.h.b16 %v110
    %v485 = vunpack.c.l.b16 %v111
    %v486 = vunpack.c.l.b16 %v112
    %v487 = vunpack.c.h.b16 %v112
    %v488 = vunpack.c.l.b16 %v113
    %v489 = vunpack.c.h.b16 %v113
    %v490 = vunpack.c.l.b16 %v114
    %v491 = vunpack.c.h.b16 %v114
    %v492 = vunpack.c.l.b16 %v115
    %v493 = vunpack.c.l.b16 %v116
    %v494 = vunpack.c.h.b16 %v116
    %v495 = vunpack.c.l.b16 %v117
    %v496 = vunpack.c.h.b16 %v117
    %v497 = vunpack.c.l.b16 %v118
    %v498 = vunpack.c.h.b16 %v118
    %v499 = vunpack.c.l.b16 %v119
    %v500 = vunpack.c.l.b16 %v120
    %v501 = vunpack.c.h.b16 %v120
    %v502 = vunpack.c.l.b16 %v121
    %v503 = vunpack.c.h.b16 %v121
    %v504 = vunpack.c.l.b16 %v122
    %v505 = vunpack.c.h.b16 %v122
    %v506 = vunpack.c.l.b16 %v123
    %v507 = vpack.c.b16 %v346, %v339
    %v508 = vpack.c.b16 %v347, %v340
    %v509 = vpack.c.b16 %v348, %v341
    %v510 = vpack.c.b16 %v349, %v342
    %v511 = vpack.c.b16 %v350, %v343
    %v512 = vpack.c.b16 %v351, %v344
    %v513 = vpack.c.b16 %v352, %v345
    %v514 = vpack.c.b16 %v360, %v353
    %v515 = vpack.c.b16 %v361, %v354
    %v516 = vpack.c.b16 %v362, %v355
    %v517 = vpack.c.b16 %v363, %v356
    %v518 = vpack.c.b16 %v364, %v357
    %v519 = vpack.c.b16 %v365, %v358
    %v520 = vpack.c.b16 %v366, %v359
    %v521 = vpack.c.b16 %v374, %v367
    %v522 = vpack.c.b16 %v375, %v368
    %v523 = vpack.c.b16 %v376, %v369
    %v524 = vpack.c.b16 %v377, %v370
    %v525 = vpack.c.b16 %v378, %v371
    %v526 = vpack.c.b16 %v379, %v372
    %v527 = vpack.c.b16 %v380, %v373
    %v528 = vpack.c.b16 %v388, %v381
    %v529 = vpack.c.b16 %v389, %v382
    %v530 = vpack.c.b16 %v390, %v383
    %v531 = vpack.c.b16 %v391, %v384
    %v532 = vpack.c.b16 %v392, %v385
    %v533 = vpack.c.b16 %v393, %v386
    %v534 = vpack.c.b16 %v394, %v387
    %v535 = vpack.c.b16 %v402, %v395
    %v536 = vpack.c.b16 %v403, %v396
    %v537 = vpack.c.b16 %v404, %v397
    %v538 = vpack.c.b16 %v405, %v398
    %v539 = vpack.c.b16 %v406, %v399
    %v540 = vpack.c.b16 %v407, %v400
    %v541 = vpack.c.b16 %v408, %v401
    %v542 = vpack.c.b16 %v416, %v409
    %v543 = vpack.c.b16 %v417, %v410
    %v544 = vpack.c.b16 %v418, %v411
    %v545 = vpack.c.b16 %v419, %v412
    %v546 = vpack.c.b16 %v420, %v413
    %v547 = vpack.c.b16 %v421, %v414
    %v548 = vpack.c.b16 %v422, %v415
    %v549 = vpack.c.b16 %v430, %v423
    %v550 = vpack.c.b16 %v431, %v424
    %v551 = vpack.c.b16 %v432, %v425
    %v552 = vpack.c.b16 %v433, %v426
    %v553 = vpack.c.b16 %v434, %v427
    %v554 = vpack.c.b16 %v435, %v428
    %v555 = vpack.c.b16 %v436, %v429
    %v556 = vpack.c.b16 %v444, %v437
    %v557 = vpack.c.b16 %v445, %v438
    %v558 = vpack.c.b16 %v446, %v439
    %v559 = vpack.c.b16 %v447, %v440
    %v560 = vpack.c.b16 %v448, %v441
    %v561 = vpack.c.b16 %v449, %v442
    %v562 = vpack.c.b16 %v450, %v443
    %v563 = vpack.c.b16 %v458, %v451
    %v564 = vpack.c.b16 %v459, %v452
    %v565 = vpack.c.b16 %v460, %v453
    %v566 = vpack.c.b16 %v461, %v454
    %v567 = vpack.c.b16 %v462, %v455
    %v568 = vpack.c.b16 %v463, %v456
    %v569 = vpack.c.b16 %v464, %v457
    %v570 = vpack.c.b16 %v472, %v465
    %v571 = vpack.c.b16 %v473, %v466
    %v572 = vpack.c.b16 %v474, %v467
    %v573 = vpack.c.b16 %v475, %v468
    %v574 = vpack.c.b16 %v476, %v469
    %v575 = vpack.c.b16 %v477, %v470
    %v576 = vpack.c.b16 %v478, %v471
    %v577 = vpack.c.b16 %v486, %v479
    %v578 = vpack.c.b16 %v487, %v480
    %v579 = vpack.c.b16 %v488, %v481
    %v580 = vpack.c.b16 %v489, %v482
    %v581 = vpack.c.b16 %v490, %v483
    %v582 = vpack.c.b16 %v491, %v484
    %v583 = vpack.c.b16 %v492, %v485
    %v584 = vpack.c.b16 %v500, %v493
    %v585 = vpack.c.b16 %v501, %v494
    %v586 = vpack.c.b16 %v502, %v495
    %v587 = vpack.c.b16 %v503, %v496
    %v588 = vpack.c.b16 %v504, %v497
    %v589 = vpack.c.b16 %v505, %v498
    %v590 = vpack.c.b16 %v506, %v499
    %v787 = vunpack.c.l.b16 %v124
    %v788 = vunpack.c.l.b16 %v125
    %v789 = vunpack.c.l.b16 %v126
    %v790 = vunpack.c.l.b16 %v127
    %v791 = vunpack.c.l.b16 %v128
    %v792 = vunpack.c.l.b16 %v129
    %v793 = vunpack.c.l.b16 %v130
    %v794 = vunpack.c.l.b16 %v131
    %v795 = vunpack.c.l.b16 %v132
    %v796 = vunpack.c.l.b16 %v133
    %v797 = vunpack.c.l.b16 %v134
    %v798 = vunpack.c.l.b16 %v135
    %v799 = vunpack.c.l.b16 %v136
    %v800 = vunpack.c.l.b16 %v137
    %v801 = vunpack.c.l.b16 %v138
    %v802 = vunpack.c.l.b16 %v139
    %v803 = vunpack.c.l.b16 %v140
    %v804 = vunpack.c.l.b16 %v141
    %v805 = vunpack.c.l.b16 %v142
    %v806 = vunpack.c.l.b16 %v143
    %v807 = vunpack.c.l.b16 %v144
    %v808 = vunpack.c.l.b16 %v145
    %v809 = vunpack.c.l.b16 %v146
    %v810 = vunpack.c.l.b16 %v147
    %v811 = vunpack.c.l.b16 %v148
    %v812 = vunpack.c.l.b16 %v149
    %v813 = vunpack.c.l.b16 %v150
    %v814 = vunpack.c.l.b16 %v151
    %v815 = vunpack.c.l.b16 %v152
    %v816 = vunpack.c.l.b16 %v153
    %v817 = vunpack.c.l.b16 %v154
    %v818 = vunpack.c.l.b16 %v155
    %v819 = vunpack.c.l.b16 %v156
    %v820 = vunpack.c.l.b16 %v157
    %v821 = vunpack.c.l.b16 %v158
    %v822 = vunpack.c.l.b16 %v159
    %v823 = vunpack.c.l.b16 %v160
    %v824 = vunpack.c.l.b16 %v161
    %v825 = vunpack.c.l.b16 %v162
    %v826 = vunpack.c.l.b16 %v163
    %v827 = vunpack.c.l.b16 %v164
    %v828 = vunpack.c.l.b16 %v165
    %v829 = vunpack.c.l.b16 %v166
    %v830 = vunpack.c.l.b16 %v167
    %v831 = vunpack.c.l.b16 %v168
    %v832 = vunpack.c.l.b16 %v169
    %v833 = vunpack.c.l.b16 %v170
    %v834 = vunpack.c.l.b16 %v171
    %v835 = vunpack.c.l.b16 %v172
    %v836 = vunpack.c.l.b16 %v173
    %v837 = vunpack.c.l.b16 %v174
    %v838 = vunpack.c.l.b16 %v175
    %v839 = vunpack.c.l.b16 %v176
    %v840 = vunpack.c.l.b16 %v177
    %v841 = vunpack.c.l.b16 %v178
    %v842 = vunpack.c.l.b16 %v179
    %v843 = vunpack.c.l.b16 %v180
    %v844 = vunpack.c.l.b16 %v181
    %v845 = vunpack.c.l.b16 %v182
    %v846 = vunpack.c.l.b16 %v183
    %v847 = vunpack.c.l.b16 %v184
    %v848 = vunpack.c.l.b16 %v185
    %v849 = vunpack.c.l.b16 %v186
    %v850 = vunpack.c.l.b16 %v187
    %v851 = vunpack.c.l.b16 %v188
    %v852 = vunpack.c.l.b16 %v189
    %v853 = vunpack.c.l.b16 %v190
    %v854 = vunpack.c.l.b16 %v191
    %v855 = vunpack.c.l.b16 %v192
    %v856 = vunpack.c.l.b16 %v193
    %v857 = vunpack.c.l.b16 %v194
    %v858 = vunpack.c.l.b16 %v195
    %v859 = vunpack.c.l.b16 %v196
    %v860 = vunpack.c.l.b16 %v197
    %v861 = vunpack.c.l.b16 %v198
    %v862 = vunpack.c.l.b16 %v199
    %v863 = vunpack.c.l.b16 %v200
    %v864 = vunpack.c.l.b16 %v201
    %v865 = vunpack.c.l.b16 %v202
    %v866 = vunpack.c.l.b16 %v203
    %v867 = vunpack.c.l.b16 %v204
    %v868 = vunpack.c.l.b16 %v205
    %v869 = vunpack.c.l.b16 %v206
    %v870 = vunpack.c.l.b16 %v207
    %v871 = vunpack.c.l.b16 %v208
    %v872 = vunpack.c.l.b16 %v209
    %v873 = vunpack.c.l.b16 %v210
    %v874 = vunpack.c.l.b16 %v211
    %v875 = vunpack.c.l.b16 %v212
    %v876 = vunpack.c.l.b16 %v213
    %v877 = vunpack.c.l.b16 %v214
    %v878 = vunpack.c.l.b16 %v215
    %v879 = vunpack.c.l.b16 %v216
    %v880 = vunpack.c.l.b16 %v217
    %v881 = vunpack.c.l.b16 %v218
    %v882 = vunpack.c.l.b16 %v219
    %v883 = vunpack.c.l.b16 %v220
    %v884 = vunpack.c.l.b16 %v221
    %v885 = vunpack.c.l.b16 %v222
    %v886 = vunpack.c.l.b16 %v223
    %v887 = vunpack.c.l.b16 %v224
    %v888 = vunpack.c.l.b16 %v225
    %v889 = vunpack.c.l.b16 %v226
    %v890 = vunpack.c.l.b16 %v227
    %v891 = vunpack.c.l.b16 %v228
    %v892 = vunpack.c.l.b16 %v229
    %v893 = vunpack.c.l.b16 %v230
    %v894 = vunpack.c.l.b16 %v231
    %v895 = vunpack.c.l.b16 %v232
    %v896 = vunpack.c.l.b16 %v233
    %v897 = vunpack.c.l.b16 %v234
    %v898 = vunpack.c.l.b16 %v235
    %v899 = vpack.c.b16 %v788, %v787
    %v900 = vpack.c.b16 %v790, %v789
    %v901 = vpack.c.b16 %v792, %v791
    %v902 = vpack.c.b16 %v794, %v793
    %v903 = vpack.c.b16 %v796, %v795
    %v904 = vpack.c.b16 %v798, %v797
    %v905 = vpack.c.b16 %v800, %v799
    %v906 = vpack.c.b16 %v802, %v801
    %v907 = vpack.c.b16 %v804, %v803
    %v908 = vpack.c.b16 %v806, %v805
    %v909 = vpack.c.b16 %v808, %v807
    %v910 = vpack.c.b16 %v810, %v809
    %v911 = vpack.c.b16 %v812, %v811
    %v912 = vpack.c.b16 %v814, %v813
    %v913 = vpack.c.b16 %v816, %v815
    %v914 = vpack.c.b16 %v818, %v817
    %v915 = vpack.c.b16 %v820, %v819
    %v916 = vpack.c.b16 %v822, %v821
    %v917 = vpack.c.b16 %v824, %v823
    %v918 = vpack.c.b16 %v826, %v825
    %v919 = vpack.c.b16 %v828, %v827
    %v920 = vpack.c.b16 %v830, %v829
    %v921 = vpack.c.b16 %v832, %v831
    %v922 = vpack.c.b16 %v834, %v833
    %v923 = vpack.c.b16 %v836, %v835
    %v924 = vpack.c.b16 %v838, %v837
    %v925 = vpack.c.b16 %v840, %v839
    %v926 = vpack.c.b16 %v842, %v841
    %v927 = vpack.c.b16 %v844, %v843
    %v928 = vpack.c.b16 %v846, %v845
    %v929 = vpack.c.b16 %v848, %v847
    %v930 = vpack.c.b16 %v850, %v849
    %v931 = vpack.c.b16 %v852, %v851
    %v932 = vpack.c.b16 %v854, %v853
    %v933 = vpack.c.b16 %v856, %v855
    %v934 = vpack.c.b16 %v858, %v857
    %v935 = vpack.c.b16 %v860, %v859
    %v936 = vpack.c.b16 %v862, %v861
    %v937 = vpack.c.b16 %v864, %v863
    %v938 = vpack.c.b16 %v866, %v865
    %v939 = vpack.c.b16 %v868, %v867
    %v940 = vpack.c.b16 %v870, %v869
    %v941 = vpack.c.b16 %v872, %v871
    %v942 = vpack.c.b16 %v874, %v873
    %v943 = vpack.c.b16 %v876, %v875
    %v944 = vpack.c.b16 %v878, %v877
    %v945 = vpack.c.b16 %v880, %v879
    %v946 = vpack.c.b16 %v882, %v881
    %v947 = vpack.c.b16 %v884, %v883
    %v948 = vpack.c.b16 %v886, %v885
    %v949 = vpack.c.b16 %v888, %v887
    %v950 = vpack.c.b16 %v890, %v889
    %v951 = vpack.c.b16 %v892, %v891
    %v952 = vpack.c.b16 %v894, %v893
    %v953 = vpack.c.b16 %v896, %v895
    %v954 = vpack.c.b16 %v898, %v897
    %1011 = vmatprep.subr.bf16.mxu0 0
    %1012 = vmatpush1.bf16.msra.mxu0 %v899
    %1013 = vmatprep.subr.bf16.mxu0 0
    %1014 = vmatpush1.bf16.msra.mxu0 %v900
    %1015 = vmatprep.subr.bf16.mxu0 0
    %1016 = vmatpush1.bf16.msra.mxu0 %v901
    %1017 = vmatprep.subr.bf16.mxu0 0
    %1018 = vmatpush1.bf16.msra.mxu0 %v902
    %1019 = vmatprep.subr.bf16.mxu0 0
    %1020 = vmatpush1.bf16.msra.mxu0 %v903
    %1021 = vmatprep.subr.bf16.mxu0 0
    %1022 = vmatpush1.bf16.msra.mxu0 %v904
    %1023 = vmatprep.subr.bf16.mxu0 0
    %1024 = vmatpush1.bf16.msra.mxu0 %v905
    %1025 = vmatprep.subr.bf16.mxu0 0
    %1026 = vmatpush1.bf16.msra.mxu0 %v906
    %1027 = vmatprep.subr.bf16.mxu0 0
    %1028 = vmatpush1.bf16.msra.mxu0 %v907
    %1029 = vmatprep.subr.bf16.mxu0 0
    %1030 = vmatpush1.bf16.msra.mxu0 %v908
    %1031 = vmatprep.subr.bf16.mxu0 0
    %1032 = vmatpush1.bf16.msra.mxu0 %v909
    %1033 = vmatprep.subr.bf16.mxu0 0
    %1034 = vmatpush1.bf16.msra.mxu0 %v910
    %1035 = vmatprep.subr.bf16.mxu0 0
    %1036 = vmatpush1.bf16.msra.mxu0 %v911
    %1037 = vmatprep.subr.bf16.mxu0 0
    %1038 = vmatpush1.bf16.msra.mxu0 %v912
    %1039 = vmatprep.subr.bf16.mxu0 0
    %1040 = vmatpush1.bf16.msra.mxu0 %v913
    %1041 = vmatprep.subr.bf16.mxu0 0
    %1042 = vmatpush1.bf16.msra.mxu0 %v914
    %1043 = vmatprep.mubr.bf16.mxu0 %v508
    %1044 = vmatmul.mubr.bf16.gmra.mrb[0].mxu0 %v507
    %v1045 = vpop.f32.mrb[0].mxu0
    %v1046 = vadd.f32 %v241, %v1045
    %v1047 = vpop.f32.mrb[0].mxu0
    %v1048 = vpop.f32.mrb[0].mxu0
    %v1049 = vadd.f32 %v241, %v1048
    %v1050 = vpop.f32.mrb[0].mxu0
    %1051 = vmatprep.mubr.bf16.mxu0 %v515
    %1052 = vmatmul.mubr.bf16.gmra.mrb[0].mxu0 %v514
    %v1053 = vpop.f32.mrb[0].mxu0
    %v1054 = vadd.f32 %v241, %v1053
    %v1055 = vpop.f32.mrb[0].mxu0
    %v1056 = vpop.f32.mrb[0].mxu0
    %v1057 = vadd.f32 %v241, %v1056
    %v1058 = vpop.f32.mrb[0].mxu0
    %1059 = vmatprep.mubr.bf16.mxu0 %v522
    %1060 = vmatmul.mubr.bf16.gmra.mrb[0].mxu0 %v521
    %v1061 = vpop.f32.mrb[0].mxu0
    %v1062 = vadd.f32 %v241, %v1061
    %v1063 = vpop.f32.mrb[0].mxu0
    %v1064 = vpop.f32.mrb[0].mxu0
    %v1065 = vadd.f32 %v241, %v1064
    %v1066 = vpop.f32.mrb[0].mxu0
    %1067 = vmatprep.mubr.bf16.mxu0 %v529
    %1068 = vmatmul.mubr.bf16.gmra.mrb[0].mxu0 %v528
    %v1069 = vpop.f32.mrb[0].mxu0
    %v1070 = vadd.f32 %v241, %v1069
    %v1071 = vpop.f32.mrb[0].mxu0
    %v1072 = vpop.f32.mrb[0].mxu0
    %v1073 = vadd.f32 %v241, %v1072
    %v1074 = vpop.f32.mrb[0].mxu0
    %1075 = vmatprep.mubr.bf16.mxu0 %v536
    %1076 = vmatmul.mubr.bf16.gmra.mrb[0].mxu0 %v535
    %v1077 = vpop.f32.mrb[0].mxu0
    %v1078 = vadd.f32 %v241, %v1077
    %v1079 = vpop.f32.mrb[0].mxu0
    %v1080 = vpop.f32.mrb[0].mxu0
    %v1081 = vadd.f32 %v241, %v1080
    %v1082 = vpop.f32.mrb[0].mxu0
    %1083 = vmatprep.mubr.bf16.mxu0 %v543
    %1084 = vmatmul.mubr.bf16.gmra.mrb[0].mxu0 %v542
    %v1085 = vpop.f32.mrb[0].mxu0
    %v1086 = vadd.f32 %v241, %v1085
    %v1087 = vpop.f32.mrb[0].mxu0
    %v1088 = vpop.f32.mrb[0].mxu0
    %v1089 = vadd.f32 %v241, %v1088
    %v1090 = vpop.f32.mrb[0].mxu0
    %1091 = vmatprep.mubr.bf16.mxu0 %v550
    %1092 = vmatmul.mubr.bf16.gmra.mrb[0].mxu0 %v549
    %v1093 = vpop.f32.mrb[0].mxu0
    %v1094 = vadd.f32 %v241, %v1093
    %v1095 = vpop.f32.mrb[0].mxu0
    %v1096 = vpop.f32.mrb[0].mxu0
    %v1097 = vadd.f32 %v241, %v1096
    %v1098 = vpop.f32.mrb[0].mxu0
    %1099 = vmatprep.mubr.bf16.mxu0 %v557
    %1100 = vmatmul.mubr.bf16.gmra.mrb[0].mxu0 %v556
    %v1101 = vpop.f32.mrb[0].mxu0
    %v1102 = vadd.f32 %v241, %v1101
    %v1103 = vpop.f32.mrb[0].mxu0
    %v1104 = vpop.f32.mrb[0].mxu0
    %v1105 = vadd.f32 %v241, %v1104
    %v1106 = vpop.f32.mrb[0].mxu0
    %1107 = vmatprep.mubr.bf16.mxu0 %v564
    %1108 = vmatmul.mubr.bf16.gmra.mrb[0].mxu0 %v563
    %v1109 = vpop.f32.mrb[0].mxu0
    %v1110 = vadd.f32 %v241, %v1109
    %v1111 = vpop.f32.mrb[0].mxu0
    %v1112 = vpop.f32.mrb[0].mxu0
    %v1113 = vadd.f32 %v241, %v1112
    %v1114 = vpop.f32.mrb[0].mxu0
    %1115 = vmatprep.mubr.bf16.mxu0 %v571
    %1116 = vmatmul.mubr.bf16.gmra.mrb[0].mxu0 %v570
    %v1117 = vpop.f32.mrb[0].mxu0
    %v1118 = vadd.f32 %v241, %v1117
    %v1119 = vpop.f32.mrb[0].mxu0
    %v1120 = vpop.f32.mrb[0].mxu0
    %v1121 = vadd.f32 %v241, %v1120
    %v1122 = vpop.f32.mrb[0].mxu0
    %1123 = vmatprep.mubr.bf16.mxu0 %v578
    %1124 = vmatmul.mubr.bf16.gmra.mrb[0].mxu0 %v577
    %v1125 = vpop.f32.mrb[0].mxu0
    %v1126 = vadd.f32 %v241, %v1125
    %v1127 = vpop.f32.mrb[0].mxu0
    %v1128 = vpop.f32.mrb[0].mxu0
    %v1129 = vadd.f32 %v241, %v1128
    %v1130 = vpop.f32.mrb[0].mxu0
    %1131 = vmatprep.mubr.bf16.mxu0 %v585
    %1132 = vmatmul.mubr.bf16.gmra.mrb[0].mxu0 %v584
    %v1133 = vpop.f32.mrb[0].mxu0
    %v1134 = vadd.f32 %v241, %v1133
    %v1135 = vpop.f32.mrb[0].mxu0
    %v1136 = vpop.f32.mrb[0].mxu0
    %v1137 = vadd.f32 %v241, %v1136
    %v1138 = vpop.f32.mrb[0].mxu0
    %1139 = vdwg.mxu0
    %1140 = vmatprep.subr.bf16.mxu0 0
    %1141 = vmatpush1.bf16.msra.mxu0 %v915
    %1142 = vmatprep.subr.bf16.mxu0 0
    %1143 = vmatpush1.bf16.msra.mxu0 %v916
    %1144 = vmatprep.subr.bf16.mxu0 0
    %1145 = vmatpush1.bf16.msra.mxu0 %v917
    %1146 = vmatprep.subr.bf16.mxu0 0
    %1147 = vmatpush1.bf16.msra.mxu0 %v918
    %1148 = vmatprep.subr.bf16.mxu0 0
    %1149 = vmatpush1.bf16.msra.mxu0 %v919
    %1150 = vmatprep.subr.bf16.mxu0 0
    %1151 = vmatpush1.bf16.msra.mxu0 %v920
    %1152 = vmatprep.subr.bf16.mxu0 0
    %1153 = vmatpush1.bf16.msra.mxu0 %v921
    %1154 = vmatprep.subr.bf16.mxu0 0
    %1155 = vmatpush1.bf16.msra.mxu0 %v922
    %1156 = vmatprep.subr.bf16.mxu0 0
    %1157 = vmatpush1.bf16.msra.mxu0 %v923
    %1158 = vmatprep.subr.bf16.mxu0 0
    %1159 = vmatpush1.bf16.msra.mxu0 %v924
    %1160 = vmatprep.subr.bf16.mxu0 0
    %1161 = vmatpush1.bf16.msra.mxu0 %v925
    %1162 = vmatprep.subr.bf16.mxu0 0
    %1163 = vmatpush1.bf16.msra.mxu0 %v926
    %1164 = vmatprep.subr.bf16.mxu0 0
    %1165 = vmatpush1.bf16.msra.mxu0 %v927
    %1166 = vmatprep.subr.bf16.mxu0 0
    %1167 = vmatpush1.bf16.msra.mxu0 %v928
    %1168 = vmatprep.subr.bf16.mxu0 0
    %1169 = vmatpush1.bf16.msra.mxu0 %v929
    %1170 = vmatprep.subr.bf16.mxu0 0
    %1171 = vmatpush1.bf16.msra.mxu0 %v930
    %1172 = vmatprep.mubr.bf16.mxu0 %v510
    %1173 = vmatmul.mubr.bf16.gmra.mrb[0].mxu0 %v509
    %v1174 = vpop.f32.mrb[0].mxu0
    %v1175 = vadd.f32 %v1046, %v1174
    %v1176 = vpop.f32.mrb[0].mxu0
    %v1177 = vpop.f32.mrb[0].mxu0
    %v1178 = vadd.f32 %v1049, %v1177
    %v1179 = vpop.f32.mrb[0].mxu0
    %1180 = vmatprep.mubr.bf16.mxu0 %v517
    %1181 = vmatmul.mubr.bf16.gmra.mrb[0].mxu0 %v516
    %v1182 = vpop.f32.mrb[0].mxu0
    %v1183 = vadd.f32 %v1054, %v1182
    %v1184 = vpop.f32.mrb[0].mxu0
    %v1185 = vpop.f32.mrb[0].mxu0
    %v1186 = vadd.f32 %v1057, %v1185
    %v1187 = vpop.f32.mrb[0].mxu0
    %1188 = vmatprep.mubr.bf16.mxu0 %v524
    %1189 = vmatmul.mubr.bf16.gmra.mrb[0].mxu0 %v523
    %v1190 = vpop.f32.mrb[0].mxu0
    %v1191 = vadd.f32 %v1062, %v1190
    %v1192 = vpop.f32.mrb[0].mxu0
    %v1193 = vpop.f32.mrb[0].mxu0
    %v1194 = vadd.f32 %v1065, %v1193
    %v1195 = vpop.f32.mrb[0].mxu0
    %1196 = vmatprep.mubr.bf16.mxu0 %v531
    %1197 = vmatmul.mubr.bf16.gmra.mrb[0].mxu0 %v530
    %v1198 = vpop.f32.mrb[0].mxu0
    %v1199 = vadd.f32 %v1070, %v1198
    %v1200 = vpop.f32.mrb[0].mxu0
    %v1201 = vpop.f32.mrb[0].mxu0
    %v1202 = vadd.f32 %v1073, %v1201
    %v1203 = vpop.f32.mrb[0].mxu0
    %1204 = vmatprep.mubr.bf16.mxu0 %v538
    %1205 = vmatmul.mubr.bf16.gmra.mrb[0].mxu0 %v537
    %v1206 = vpop.f32.mrb[0].mxu0
    %v1207 = vadd.f32 %v1078, %v1206
    %v1208 = vpop.f32.mrb[0].mxu0
    %v1209 = vpop.f32.mrb[0].mxu0
    %v1210 = vadd.f32 %v1081, %v1209
    %v1211 = vpop.f32.mrb[0].mxu0
    %1212 = vmatprep.mubr.bf16.mxu0 %v545
    %1213 = vmatmul.mubr.bf16.gmra.mrb[0].mxu0 %v544
    %v1214 = vpop.f32.mrb[0].mxu0
    %v1215 = vadd.f32 %v1086, %v1214
    %v1216 = vpop.f32.mrb[0].mxu0
    %v1217 = vpop.f32.mrb[0].mxu0
    %v1218 = vadd.f32 %v1089, %v1217
    %v1219 = vpop.f32.mrb[0].mxu0
    %1220 = vmatprep.mubr.bf16.mxu0 %v552
    %1221 = vmatmul.mubr.bf16.gmra.mrb[0].mxu0 %v551
    %v1222 = vpop.f32.mrb[0].mxu0
    %v1223 = vadd.f32 %v1094, %v1222
    %v1224 = vpop.f32.mrb[0].mxu0
    %v1225 = vpop.f32.mrb[0].mxu0
    %v1226 = vadd.f32 %v1097, %v1225
    %v1227 = vpop.f32.mrb[0].mxu0
    %1228 = vmatprep.mubr.bf16.mxu0 %v559
    %1229 = vmatmul.mubr.bf16.gmra.mrb[0].mxu0 %v558
    %v1230 = vpop.f32.mrb[0].mxu0
    %v1231 = vadd.f32 %v1102, %v1230
    %v1232 = vpop.f32.mrb[0].mxu0
    %v1233 = vpop.f32.mrb[0].mxu0
    %v1234 = vadd.f32 %v1105, %v1233
    %v1235 = vpop.f32.mrb[0].mxu0
    %1236 = vmatprep.mubr.bf16.mxu0 %v566
    %1237 = vmatmul.mubr.bf16.gmra.mrb[0].mxu0 %v565
    %v1238 = vpop.f32.mrb[0].mxu0
    %v1239 = vadd.f32 %v1110, %v1238
    %v1240 = vpop.f32.mrb[0].mxu0
    %v1241 = vpop.f32.mrb[0].mxu0
    %v1242 = vadd.f32 %v1113, %v1241
    %v1243 = vpop.f32.mrb[0].mxu0
    %1244 = vmatprep.mubr.bf16.mxu0 %v573
    %1245 = vmatmul.mubr.bf16.gmra.mrb[0].mxu0 %v572
    %v1246 = vpop.f32.mrb[0].mxu0
    %v1247 = vadd.f32 %v1118, %v1246
    %v1248 = vpop.f32.mrb[0].mxu0
    %v1249 = vpop.f32.mrb[0].mxu0
    %v1250 = vadd.f32 %v1121, %v1249
    %v1251 = vpop.f32.mrb[0].mxu0
    %1252 = vmatprep.mubr.bf16.mxu0 %v580
    %1253 = vmatmul.mubr.bf16.gmra.mrb[0].mxu0 %v579
    %v1254 = vpop.f32.mrb[0].mxu0
    %v1255 = vadd.f32 %v1126, %v1254
    %v1256 = vpop.f32.mrb[0].mxu0
    %v1257 = vpop.f32.mrb[0].mxu0
    %v1258 = vadd.f32 %v1129, %v1257
    %v1259 = vpop.f32.mrb[0].mxu0
    %1260 = vmatprep.mubr.bf16.mxu0 %v587
    %1261 = vmatmul.mubr.bf16.gmra.mrb[0].mxu0 %v586
    %v1262 = vpop.f32.mrb[0].mxu0
    %v1263 = vadd.f32 %v1134, %v1262
    %v1264 = vpop.f32.mrb[0].mxu0
    %v1265 = vpop.f32.mrb[0].mxu0
    %v1266 = vadd.f32 %v1137, %v1265
    %v1267 = vpop.f32.mrb[0].mxu0
    %1268 = vdwg.mxu0
    %1269 = vmatprep.subr.bf16.mxu0 0
    %1270 = vmatpush1.bf16.msra.mxu0 %v931
    %1271 = vmatprep.subr.bf16.mxu0 0
    %1272 = vmatpush1.bf16.msra.mxu0 %v932
    %1273 = vmatprep.subr.bf16.mxu0 0
    %1274 = vmatpush1.bf16.msra.mxu0 %v933
    %1275 = vmatprep.subr.bf16.mxu0 0
    %1276 = vmatpush1.bf16.msra.mxu0 %v934
    %1277 = vmatprep.subr.bf16.mxu0 0
    %1278 = vmatpush1.bf16.msra.mxu0 %v935
    %1279 = vmatprep.subr.bf16.mxu0 0
    %1280 = vmatpush1.bf16.msra.mxu0 %v936
    %1281 = vmatprep.subr.bf16.mxu0 0
    %1282 = vmatpush1.bf16.msra.mxu0 %v937
    %1283 = vmatprep.subr.bf16.mxu0 0
    %1284 = vmatpush1.bf16.msra.mxu0 %v938
    %1285 = vmatprep.subr.bf16.mxu0 0
    %1286 = vmatpush1.bf16.msra.mxu0 %v939
    %1287 = vmatprep.subr.bf16.mxu0 0
    %1288 = vmatpush1.bf16.msra.mxu0 %v940
    %1289 = vmatprep.subr.bf16.mxu0 0
    %1290 = vmatpush1.bf16.msra.mxu0 %v941
    %1291 = vmatprep.subr.bf16.mxu0 0
    %1292 = vmatpush1.bf16.msra.mxu0 %v942
    %1293 = vmatprep.subr.bf16.mxu0 0
    %1294 = vmatpush1.bf16.msra.mxu0 %v943
    %1295 = vmatprep.subr.bf16.mxu0 0
    %1296 = vmatpush1.bf16.msra.mxu0 %v944
    %1297 = vmatprep.subr.bf16.mxu0 0
    %1298 = vmatpush1.bf16.msra.mxu0 %v945
    %1299 = vmatprep.subr.bf16.mxu0 0
    %1300 = vmatpush1.bf16.msra.mxu0 %v946
    %1301 = vmatprep.mubr.bf16.mxu0 %v512
    %1302 = vmatmul.mubr.bf16.gmra.mrb[0].mxu0 %v511
    %v1303 = vpop.f32.mrb[0].mxu0
    %v1304 = vadd.f32 %v1175, %v1303
    %v1305 = vpop.f32.mrb[0].mxu0
    %v1306 = vpop.f32.mrb[0].mxu0
    %v1307 = vadd.f32 %v1178, %v1306
    %v1308 = vpop.f32.mrb[0].mxu0
    %1309 = vmatprep.mubr.bf16.mxu0 %v519
    %1310 = vmatmul.mubr.bf16.gmra.mrb[0].mxu0 %v518
    %v1311 = vpop.f32.mrb[0].mxu0
    %v1312 = vadd.f32 %v1183, %v1311
    %v1313 = vpop.f32.mrb[0].mxu0
    %v1314 = vpop.f32.mrb[0].mxu0
    %v1315 = vadd.f32 %v1186, %v1314
    %v1316 = vpop.f32.mrb[0].mxu0
    %1317 = vmatprep.mubr.bf16.mxu0 %v526
    %1318 = vmatmul.mubr.bf16.gmra.mrb[0].mxu0 %v525
    %v1319 = vpop.f32.mrb[0].mxu0
    %v1320 = vadd.f32 %v1191, %v1319
    %v1321 = vpop.f32.mrb[0].mxu0
    %v1322 = vpop.f32.mrb[0].mxu0
    %v1323 = vadd.f32 %v1194, %v1322
    %v1324 = vpop.f32.mrb[0].mxu0
    %1325 = vmatprep.mubr.bf16.mxu0 %v533
    %1326 = vmatmul.mubr.bf16.gmra.mrb[0].mxu0 %v532
    %v1327 = vpop.f32.mrb[0].mxu0
    %v1328 = vadd.f32 %v1199, %v1327
    %v1329 = vpop.f32.mrb[0].mxu0
    %v1330 = vpop.f32.mrb[0].mxu0
    %v1331 = vadd.f32 %v1202, %v1330
    %v1332 = vpop.f32.mrb[0].mxu0
    %1333 = vmatprep.mubr.bf16.mxu0 %v540
    %1334 = vmatmul.mubr.bf16.gmra.mrb[0].mxu0 %v539
    %v1335 = vpop.f32.mrb[0].mxu0
    %v1336 = vadd.f32 %v1207, %v1335
    %v1337 = vpop.f32.mrb[0].mxu0
    %v1338 = vpop.f32.mrb[0].mxu0
    %v1339 = vadd.f32 %v1210, %v1338
    %v1340 = vpop.f32.mrb[0].mxu0
    %1341 = vmatprep.mubr.bf16.mxu0 %v547
    %1342 = vmatmul.mubr.bf16.gmra.mrb[0].mxu0 %v546
    %v1343 = vpop.f32.mrb[0].mxu0
    %v1344 = vadd.f32 %v1215, %v1343
    %v1345 = vpop.f32.mrb[0].mxu0
    %v1346 = vpop.f32.mrb[0].mxu0
    %v1347 = vadd.f32 %v1218, %v1346
    %v1348 = vpop.f32.mrb[0].mxu0
    %1349 = vmatprep.mubr.bf16.mxu0 %v554
    %1350 = vmatmul.mubr.bf16.gmra.mrb[0].mxu0 %v553
    %v1351 = vpop.f32.mrb[0].mxu0
    %v1352 = vadd.f32 %v1223, %v1351
    %v1353 = vpop.f32.mrb[0].mxu0
    %v1354 = vpop.f32.mrb[0].mxu0
    %v1355 = vadd.f32 %v1226, %v1354
    %v1356 = vpop.f32.mrb[0].mxu0
    %1357 = vmatprep.mubr.bf16.mxu0 %v561
    %1358 = vmatmul.mubr.bf16.gmra.mrb[0].mxu0 %v560
    %v1359 = vpop.f32.mrb[0].mxu0
    %v1360 = vadd.f32 %v1231, %v1359
    %v1361 = vpop.f32.mrb[0].mxu0
    %v1362 = vpop.f32.mrb[0].mxu0
    %v1363 = vadd.f32 %v1234, %v1362
    %v1364 = vpop.f32.mrb[0].mxu0
    %1365 = vmatprep.mubr.bf16.mxu0 %v568
    %1366 = vmatmul.mubr.bf16.gmra.mrb[0].mxu0 %v567
    %v1367 = vpop.f32.mrb[0].mxu0
    %v1368 = vadd.f32 %v1239, %v1367
    %v1369 = vpop.f32.mrb[0].mxu0
    %v1370 = vpop.f32.mrb[0].mxu0
    %v1371 = vadd.f32 %v1242, %v1370
    %v1372 = vpop.f32.mrb[0].mxu0
    %1373 = vmatprep.mubr.bf16.mxu0 %v575
    %1374 = vmatmul.mubr.bf16.gmra.mrb[0].mxu0 %v574
    %v1375 = vpop.f32.mrb[0].mxu0
    %v1376 = vadd.f32 %v1247, %v1375
    %v1377 = vpop.f32.mrb[0].mxu0
    %v1378 = vpop.f32.mrb[0].mxu0
    %v1379 = vadd.f32 %v1250, %v1378
    %v1380 = vpop.f32.mrb[0].mxu0
    %1381 = vmatprep.mubr.bf16.mxu0 %v582
    %1382 = vmatmul.mubr.bf16.gmra.mrb[0].mxu0 %v581
    %v1383 = vpop.f32.mrb[0].mxu0
    %v1384 = vadd.f32 %v1255, %v1383
    %v1385 = vpop.f32.mrb[0].mxu0
    %v1386 = vpop.f32.mrb[0].mxu0
    %v1387 = vadd.f32 %v1258, %v1386
    %v1388 = vpop.f32.mrb[0].mxu0
    %1389 = vmatprep.mubr.bf16.mxu0 %v589
    %1390 = vmatmul.mubr.bf16.gmra.mrb[0].mxu0 %v588
    %v1391 = vpop.f32.mrb[0].mxu0
    %v1392 = vadd.f32 %v1263, %v1391
    %v1393 = vpop.f32.mrb[0].mxu0
    %v1394 = vpop.f32.mrb[0].mxu0
    %v1395 = vadd.f32 %v1266, %v1394
    %v1396 = vpop.f32.mrb[0].mxu0
    %1397 = vdwg.mxu0
    %1398 = vmatprep.subr.bf16.mxu0 0
    %1399 = vmatpush1.bf16.msra.mxu0 %v947
    %1400 = vmatprep.subr.bf16.mxu0 0
    %1401 = vmatpush1.bf16.msra.mxu0 %v948
    %1402 = vmatprep.subr.bf16.mxu0 0
    %1403 = vmatpush1.bf16.msra.mxu0 %v949
    %1404 = vmatprep.subr.bf16.mxu0 0
    %1405 = vmatpush1.bf16.msra.mxu0 %v950
    %1406 = vmatprep.subr.bf16.mxu0 0
    %1407 = vmatpush1.bf16.msra.mxu0 %v951
    %1408 = vmatprep.subr.bf16.mxu0 0
    %1409 = vmatpush1.bf16.msra.mxu0 %v952
    %1410 = vmatprep.subr.bf16.mxu0 0
    %1411 = vmatpush1.bf16.msra.mxu0 %v953
    %1412 = vmatprep.subr.bf16.mxu0 0
    %1413 = vmatpush1.bf16.msra.mxu0 %v954
    %1414 = vmatprep.subr.bf16.mxu0 0
    %1415 = vmatpush1.bf16.msra.mxu0 0
    %1416 = vmatprep.subr.bf16.mxu0 0
    %1417 = vmatpush1.bf16.msra.mxu0 0
    %1418 = vmatprep.subr.bf16.mxu0 0
    %1419 = vmatpush1.bf16.msra.mxu0 0
    %1420 = vmatprep.subr.bf16.mxu0 0
    %1421 = vmatpush1.bf16.msra.mxu0 0
    %1422 = vmatprep.subr.bf16.mxu0 0
    %1423 = vmatpush1.bf16.msra.mxu0 0
    %1424 = vmatprep.subr.bf16.mxu0 0
    %1425 = vmatpush1.bf16.msra.mxu0 0
    %1426 = vmatprep.subr.bf16.mxu0 0
    %1427 = vmatpush1.bf16.msra.mxu0 0
    %1428 = vmatprep.subr.bf16.mxu0 0
    %1429 = vmatpush1.bf16.msra.mxu0 0
    %1430 = vmatprep.mubr.bf16.mxu0 0
    %1431 = vmatmul.mubr.bf16.gmra.mrb[0].mxu0 %v513
    %v1432 = vpop.f32.mrb[0].mxu0
    %v1433 = vadd.f32 %v1304, %v1432
    %v1434 = vpop.f32.mrb[0].mxu0
    %v1435 = vpop.f32.mrb[0].mxu0
    %v1436 = vadd.f32 %v1307, %v1435
    %v1437 = vpop.f32.mrb[0].mxu0
    %1438 = vmatprep.mubr.bf16.mxu0 0
    %1439 = vmatmul.mubr.bf16.gmra.mrb[0].mxu0 %v520
    %v1440 = vpop.f32.mrb[0].mxu0
    %v1441 = vadd.f32 %v1312, %v1440
    %v1442 = vpop.f32.mrb[0].mxu0
    %v1443 = vpop.f32.mrb[0].mxu0
    %v1444 = vadd.f32 %v1315, %v1443
    %v1445 = vpop.f32.mrb[0].mxu0
    %1446 = vmatprep.mubr.bf16.mxu0 0
    %1447 = vmatmul.mubr.bf16.gmra.mrb[0].mxu0 %v527
    %v1448 = vpop.f32.mrb[0].mxu0
    %v1449 = vadd.f32 %v1320, %v1448
    %v1450 = vpop.f32.mrb[0].mxu0
    %v1451 = vpop.f32.mrb[0].mxu0
    %v1452 = vadd.f32 %v1323, %v1451
    %v1453 = vpop.f32.mrb[0].mxu0
    %1454 = vmatprep.mubr.bf16.mxu0 0
    %1455 = vmatmul.mubr.bf16.gmra.mrb[0].mxu0 %v534
    %v1456 = vpop.f32.mrb[0].mxu0
    %v1457 = vadd.f32 %v1328, %v1456
    %v1458 = vpop.f32.mrb[0].mxu0
    %v1459 = vpop.f32.mrb[0].mxu0
    %v1460 = vadd.f32 %v1331, %v1459
    %v1461 = vpop.f32.mrb[0].mxu0
    %1462 = vmatprep.mubr.bf16.mxu0 0
    %1463 = vmatmul.mubr.bf16.gmra.mrb[0].mxu0 %v541
    %v1464 = vpop.f32.mrb[0].mxu0
    %v1465 = vadd.f32 %v1336, %v1464
    %v1466 = vpop.f32.mrb[0].mxu0
    %v1467 = vpop.f32.mrb[0].mxu0
    %v1468 = vadd.f32 %v1339, %v1467
    %v1469 = vpop.f32.mrb[0].mxu0
    %1470 = vmatprep.mubr.bf16.mxu0 0
    %1471 = vmatmul.mubr.bf16.gmra.mrb[0].mxu0 %v548
    %v1472 = vpop.f32.mrb[0].mxu0
    %v1473 = vadd.f32 %v1344, %v1472
    %v1474 = vpop.f32.mrb[0].mxu0
    %v1475 = vpop.f32.mrb[0].mxu0
    %v1476 = vadd.f32 %v1347, %v1475
    %v1477 = vpop.f32.mrb[0].mxu0
    %1478 = vmatprep.mubr.bf16.mxu0 0
    %1479 = vmatmul.mubr.bf16.gmra.mrb[0].mxu0 %v555
    %v1480 = vpop.f32.mrb[0].mxu0
    %v1481 = vadd.f32 %v1352, %v1480
    %v1482 = vpop.f32.mrb[0].mxu0
    %v1483 = vpop.f32.mrb[0].mxu0
    %v1484 = vadd.f32 %v1355, %v1483
    %v1485 = vpop.f32.mrb[0].mxu0
    %1486 = vmatprep.mubr.bf16.mxu0 0
    %1487 = vmatmul.mubr.bf16.gmra.mrb[0].mxu0 %v562
    %v1488 = vpop.f32.mrb[0].mxu0
    %v1489 = vadd.f32 %v1360, %v1488
    %v1490 = vpop.f32.mrb[0].mxu0
    %v1491 = vpop.f32.mrb[0].mxu0
    %v1492 = vadd.f32 %v1363, %v1491
    %v1493 = vpop.f32.mrb[0].mxu0
    %1494 = vmatprep.mubr.bf16.mxu0 0
    %1495 = vmatmul.mubr.bf16.gmra.mrb[0].mxu0 %v569
    %v1496 = vpop.f32.mrb[0].mxu0
    %v1497 = vadd.f32 %v1368, %v1496
    %v1498 = vpop.f32.mrb[0].mxu0
    %v1499 = vpop.f32.mrb[0].mxu0
    %v1500 = vadd.f32 %v1371, %v1499
    %v1501 = vpop.f32.mrb[0].mxu0
    %1502 = vmatprep.mubr.bf16.mxu0 0
    %1503 = vmatmul.mubr.bf16.gmra.mrb[0].mxu0 %v576
    %v1504 = vpop.f32.mrb[0].mxu0
    %v1505 = vadd.f32 %v1376, %v1504
    %v1506 = vpop.f32.mrb[0].mxu0
    %v1507 = vpop.f32.mrb[0].mxu0
    %v1508 = vadd.f32 %v1379, %v1507
    %v1509 = vpop.f32.mrb[0].mxu0
    %1510 = vmatprep.mubr.bf16.mxu0 0
    %1511 = vmatmul.mubr.bf16.gmra.mrb[0].mxu0 %v583
    %v1512 = vpop.f32.mrb[0].mxu0
    %v1513 = vadd.f32 %v1384, %v1512
    %v1514 = vpop.f32.mrb[0].mxu0
    %v1515 = vpop.f32.mrb[0].mxu0
    %v1516 = vadd.f32 %v1387, %v1515
    %v1517 = vpop.f32.mrb[0].mxu0
    %1518 = vmatprep.mubr.bf16.mxu0 0
    %1519 = vmatmul.mubr.bf16.gmra.mrb[0].mxu0 %v590
    %v1520 = vpop.f32.mrb[0].mxu0
    %v1521 = vadd.f32 %v1392, %v1520
    %v1522 = vpop.f32.mrb[0].mxu0
    %v1523 = vpop.f32.mrb[0].mxu0
    %v1524 = vadd.f32 %v1395, %v1523
    %v1525 = vpop.f32.mrb[0].mxu0
    %1526 = vdwg.mxu0
    %v1527 = vmax.f32 %v1433, 0.0
    %v1528 = vmax.f32 %v1436, 0.0
    %v1529 = vmax.f32 %v1441, 0.0
    %v1530 = vmax.f32 %v1444, 0.0
    %v1531 = vmax.f32 %v1449, 0.0
    %v1532 = vmax.f32 %v1452, 0.0
    %v1533 = vmax.f32 %v1457, 0.0
    %v1534 = vmax.f32 %v1460, 0.0
    %v1535 = vmax.f32 %v1465, 0.0
    %v1536 = vmax.f32 %v1468, 0.0
    %v1537 = vmax.f32 %v1473, 0.0
    %v1538 = vmax.f32 %v1476, 0.0
    %v1539 = vmax.f32 %v1481, 0.0
    %v1540 = vmax.f32 %v1484, 0.0
    %v1541 = vmax.f32 %v1489, 0.0
    %v1542 = vmax.f32 %v1492, 0.0
    %v1543 = vmax.f32 %v1497, 0.0
    %v1544 = vmax.f32 %v1500, 0.0
    %v1545 = vmax.f32 %v1505, 0.0
    %v1546 = vmax.f32 %v1508, 0.0
    %v1547 = vmax.f32 %v1513, 0.0
    %v1548 = vmax.f32 %v1516, 0.0
    %v1549 = vmax.f32 %v1521, 0.0
    %v1550 = vmax.f32 %v1524, 0.0
    %vm1551 = vcmask 523264
    %1552 = vst.msk [vmem:[#allocation2] sm:$0xff] %vm1551, %v1527
    %1553 = vst.msk [vmem:[#allocation2 + $0x8] sm:$0xff] %vm1551, %v1528
    %1554 = vst.msk [vmem:[#allocation2 + $0x10] sm:$0xff] %vm1551, %v1529
    %1555 = vst.msk [vmem:[#allocation2 + $0x18] sm:$0xff] %vm1551, %v1530
    %1556 = vst.msk [vmem:[#allocation2 + $0x20] sm:$0xff] %vm1551, %v1531
    %1557 = vst.msk [vmem:[#allocation2 + $0x28] sm:$0xff] %vm1551, %v1532
    %1558 = vst.msk [vmem:[#allocation2 + $0x30] sm:$0xff] %vm1551, %v1533
    %1559 = vst.msk [vmem:[#allocation2 + $0x38] sm:$0xff] %vm1551, %v1534
    %1560 = vst.msk [vmem:[#allocation2 + $0x40] sm:$0xff] %vm1551, %v1535
    %1561 = vst.msk [vmem:[#allocation2 + $0x48] sm:$0xff] %vm1551, %v1536
    %1562 = vst.msk [vmem:[#allocation2 + $0x50] sm:$0xff] %vm1551, %v1537
    %1563 = vst.msk [vmem:[#allocation2 + $0x58] sm:$0xff] %vm1551, %v1538
    %1564 = vst.msk [vmem:[#allocation2 + $0x60] sm:$0xff] %vm1551, %v1539
    %1565 = vst.msk [vmem:[#allocation2 + $0x68] sm:$0xff] %vm1551, %v1540
    %1566 = vst.msk [vmem:[#allocation2 + $0x70] sm:$0xff] %vm1551, %v1541
    %1567 = vst.msk [vmem:[#allocation2 + $0x78] sm:$0xff] %vm1551, %v1542
    %1568 = vst.msk [vmem:[#allocation2 + $0x80] sm:$0xff] %vm1551, %v1543
    %1569 = vst.msk [vmem:[#allocation2 + $0x88] sm:$0xff] %vm1551, %v1544
    %1570 = vst.msk [vmem:[#allocation2 + $0x90] sm:$0xff] %vm1551, %v1545
    %1571 = vst.msk [vmem:[#allocation2 + $0x98] sm:$0xff] %vm1551, %v1546
    %1572 = vst.msk [vmem:[#allocation2 + $0xa0] sm:$0xff] %vm1551, %v1547
    %1573 = vst.msk [vmem:[#allocation2 + $0xa8] sm:$0xff] %vm1551, %v1548
    %1574 = vst.msk [vmem:[#allocation2 + $0xb0] sm:$0xff] %vm1551, %v1549
    %1575 = vst.msk [vmem:[#allocation2 + $0xb8] sm:$0xff] %vm1551, %v1550
    %v1576 = vld [vmem:[#allocation2] sm:$0x1]
    %v1577 = vld [vmem:[#allocation2 + $0x10] sm:$0x1]
    %v1578 = vld [vmem:[#allocation2 + $0x20] sm:$0x1]
    %v1579 = vld [vmem:[#allocation2 + $0x60] sm:$0x1]
    %v1580 = vld [vmem:[#allocation2 + $0x70] sm:$0x1]
    %v1581 = vld [vmem:[#allocation2 + $0x80] sm:$0x1]
    %v1582 = vld [vmem:[#allocation2 + $0x8] sm:$0x1]
    %v1583 = vld [vmem:[#allocation2 + $0x18] sm:$0x1]
    %v1584 = vld [vmem:[#allocation2 + $0x28] sm:$0x1]
    %v1585 = vld [vmem:[#allocation2 + $0x68] sm:$0x1]
    %v1586 = vld [vmem:[#allocation2 + $0x78] sm:$0x1]
    %v1587 = vld [vmem:[#allocation2 + $0x88] sm:$0x1]
    %v1588 = vmax.f32 %v1576, %v1582
    %v1589 = vmax.f32 %v1577, %v1583
    %v1590 = vmax.f32 %v1578, %v1584
    %v1591 = vmax.f32 %v1579, %v1585
    %v1592 = vmax.f32 %v1580, %v1586
    %v1593 = vmax.f32 %v1581, %v1587
    %v1594 = vld [vmem:[#allocation2 + $0x1] sm:$0x1]
    %v1595 = vld [vmem:[#allocation2 + $0x11] sm:$0x1]
    %v1596 = vld [vmem:[#allocation2 + $0x21] sm:$0x1]
    %v1597 = vld [vmem:[#allocation2 + $0x61] sm:$0x1]
    %v1598 = vld [vmem:[#allocation2 + $0x71] sm:$0x1]
    %v1599 = vld [vmem:[#allocation2 + $0x81] sm:$0x1]
    %v1600 = vmax.f32 %v1588, %v1594
    %v1601 = vmax.f32 %v1589, %v1595
    %v1602 = vmax.f32 %v1590, %v1596
    %v1603 = vmax.f32 %v1591, %v1597
    %v1604 = vmax.f32 %v1592, %v1598
    %v1605 = vmax.f32 %v1593, %v1599
    %v1606 = vld [vmem:[#allocation2 + $0x9] sm:$0x1]
    %v1607 = vld [vmem:[#allocation2 + $0x19] sm:$0x1]
    %v1608 = vld [vmem:[#allocation2 + $0x29] sm:$0x1]
    %v1609 = vld [vmem:[#allocation2 + $0x69] sm:$0x1]
    %v1610 = vld [vmem:[#allocation2 + $0x79] sm:$0x1]
    %v1611 = vld [vmem:[#allocation2 + $0x89] sm:$0x1]
    %v1612 = vmax.f32 %v1600, %v1606
    %v1613 = vmax.f32 %v1601, %v1607
    %v1614 = vmax.f32 %v1602, %v1608
    %v1615 = vmax.f32 %v1603, %v1609
    %v1616 = vmax.f32 %v1604, %v1610
    %v1617 = vmax.f32 %v1605, %v1611
    %v1618 = vld [vmem:[#allocation2 + $0x2] sm:$0x1]
    %v1619 = vld [vmem:[#allocation2 + $0x12] sm:$0x1]
    %v1620 = vld [vmem:[#allocation2 + $0x22] sm:$0x1]
    %v1621 = vld [vmem:[#allocation2 + $0x62] sm:$0x1]
    %v1622 = vld [vmem:[#allocation2 + $0x72] sm:$0x1]
    %v1623 = vld [vmem:[#allocation2 + $0x82] sm:$0x1]
    %v1624 = vmax.f32 %v1612, %v1618
    %v1625 = vmax.f32 %v1613, %v1619
    %v1626 = vmax.f32 %v1614, %v1620
    %v1627 = vmax.f32 %v1615, %v1621
    %v1628 = vmax.f32 %v1616, %v1622
    %v1629 = vmax.f32 %v1617, %v1623
    %s1630 = scalar_lea.vmem [#allocation2], 48
    %v1631 = vld [vmem:[%s1630] sm:$0x1]
    %v1632 = vld [vmem:[%s1630 + $0x10] sm:$0x1]
    %v1633 = vld [vmem:[%s1630 + $0x60] sm:$0x1]
    %v1634 = vld [vmem:[%s1630 + $0x70] sm:$0x1]
    %v1635 = vld [vmem:[%s1630 + $0x8] sm:$0x1]
    %v1636 = vld [vmem:[%s1630 + $0x18] sm:$0x1]
    %v1637 = vld [vmem:[%s1630 + $0x68] sm:$0x1]
    %v1638 = vld [vmem:[%s1630 + $0x78] sm:$0x1]
    %v1639 = vmax.f32 %v1631, %v1635
    %v1640 = vmax.f32 %v1632, %v1636
    %v1641 = vmax.f32 %v1633, %v1637
    %v1642 = vmax.f32 %v1634, %v1638
    %v1643 = vld [vmem:[%s1630 + $0x1] sm:$0x1]
    %v1644 = vld [vmem:[%s1630 + $0x11] sm:$0x1]
    %v1645 = vld [vmem:[%s1630 + $0x61] sm:$0x1]
    %v1646 = vld [vmem:[%s1630 + $0x71] sm:$0x1]
    %v1647 = vmax.f32 %v1639, %v1643
    %v1648 = vmax.f32 %v1640, %v1644
    %v1649 = vmax.f32 %v1641, %v1645
    %v1650 = vmax.f32 %v1642, %v1646
    %v1651 = vld [vmem:[%s1630 + $0x9] sm:$0x1]
    %v1652 = vld [vmem:[%s1630 + $0x19] sm:$0x1]
    %v1653 = vld [vmem:[%s1630 + $0x69] sm:$0x1]
    %v1654 = vld [vmem:[%s1630 + $0x79] sm:$0x1]
    %v1655 = vmax.f32 %v1647, %v1651
    %v1656 = vmax.f32 %v1648, %v1652
    %v1657 = vmax.f32 %v1649, %v1653
    %v1658 = vmax.f32 %v1650, %v1654
    %v1659 = vld [vmem:[%s1630 + $0x2] sm:$0x1]
    %v1660 = vld [vmem:[%s1630 + $0x12] sm:$0x1]
    %v1661 = vld [vmem:[%s1630 + $0x62] sm:$0x1]
    %v1662 = vld [vmem:[%s1630 + $0x72] sm:$0x1]
    %v1663 = vmax.f32 %v1655, %v1659
    %v1664 = vmax.f32 %v1656, %v1660
    %v1665 = vmax.f32 %v1657, %v1661
    %v1666 = vmax.f32 %v1658, %v1662
    %v1667 = vmax.f32 %v1624, %v1663
    %v1668 = vmax.f32 %v1627, %v1665
    %v1669 = vmax.f32 %v1667, %v1625
    %v1670 = vmax.f32 %v1668, %v1628
    %v1671 = vmax.f32 %v1669, %v1664
    %v1672 = vmax.f32 %v1670, %v1666
    %v1673 = vmax.f32 %v1671, %v1626
    %v1674 = vmax.f32 %v1672, %v1629
    %vm1675 = vcmask 516096
    %1676 = vst.msk [vmem:[#allocation3] sm:$0x1] %vm1675, %v1673
    %1677 = vst.msk [vmem:[#allocation3 + $0x1] sm:$0x1] %vm1675, %v1674
    %v1678 = vld [vmem:[#allocation3] sm:$0x3]
    %v1679 = vpack.c.bf16 %v1678, %v1678
    %v1680 = vld [vmem:[%s3] sm:$0xf]
    %v1681 = vld [vmem:[%s3 + $0x4] sm:$0xf]
    %v1682 = vld [vmem:[%s3 + $0x8] sm:$0xf]
    %v1683 = vld [vmem:[%s3 + $0xc] sm:$0xf]
    %v1684 = vld [vmem:[%s3 + $0x10] sm:$0xf]
    %v1685 = vld [vmem:[%s3 + $0x14] sm:$0xf]
    %v1686 = vld [vmem:[%s3 + $0x18] sm:$0xf]
    %v1687 = vld [vmem:[%s3 + $0x1c] sm:$0xf]
    %v1688 = vld [vmem:[%s4] sm:$0x1]
    %v1690 = vlaneseq
    %v1691 = vshrl.u32 %v1690, 7
    %v1692 = vsub.s32 0, %v1691
    %v1693 = vrot.slane %v1688, %v1692
    %v1703 = vunpack.c.l.b16 %v1680
    %v1704 = vunpack.c.l.b16 %v1681
    %v1705 = vunpack.c.l.b16 %v1682
    %v1706 = vunpack.c.l.b16 %v1683
    %v1707 = vunpack.c.l.b16 %v1684
    %v1708 = vunpack.c.l.b16 %v1685
    %v1709 = vunpack.c.l.b16 %v1686
    %v1710 = vunpack.c.l.b16 %v1687
    %v1711 = vpack.c.b16 %v1704, %v1703
    %v1712 = vpack.c.b16 %v1706, %v1705
    %v1713 = vpack.c.b16 %v1708, %v1707
    %v1714 = vpack.c.b16 %v1710, %v1709
    %v1720 = vsel %vm1551, %v1679, 0
    %1722 = vmatprep.subr.bf16.mxu0 0
    %1723 = vmatpush1.bf16.msra.mxu0 %v1711
    %1724 = vmatprep.subr.bf16.mxu0 0
    %1725 = vmatpush1.bf16.msra.mxu0 %v1712
    %1726 = vmatprep.subr.bf16.mxu0 0
    %1727 = vmatpush1.bf16.msra.mxu0 %v1713
    %1728 = vmatprep.subr.bf16.mxu0 0
    %1729 = vmatpush1.bf16.msra.mxu0 %v1714
    %1730 = vmatprep.subr.bf16.mxu0 0
    %1731 = vmatpush1.bf16.msra.mxu0 0
    %1732 = vmatprep.subr.bf16.mxu0 0
    %1733 = vmatpush1.bf16.msra.mxu0 0
    %1734 = vmatprep.subr.bf16.mxu0 0
    %1735 = vmatpush1.bf16.msra.mxu0 0
    %1736 = vmatprep.subr.bf16.mxu0 0
    %1737 = vmatpush1.bf16.msra.mxu0 0
    %1738 = vmatprep.subr.bf16.mxu0 0
    %1739 = vmatpush1.bf16.msra.mxu0 0
    %1740 = vmatprep.subr.bf16.mxu0 0
    %1741 = vmatpush1.bf16.msra.mxu0 0
    %1742 = vmatprep.subr.bf16.mxu0 0
    %1743 = vmatpush1.bf16.msra.mxu0 0
    %1744 = vmatprep.subr.bf16.mxu0 0
    %1745 = vmatpush1.bf16.msra.mxu0 0
    %1746 = vmatprep.subr.bf16.mxu0 0
    %1747 = vmatpush1.bf16.msra.mxu0 0
    %1748 = vmatprep.subr.bf16.mxu0 0
    %1749 = vmatpush1.bf16.msra.mxu0 0
    %1750 = vmatprep.subr.bf16.mxu0 0
    %1751 = vmatpush1.bf16.msra.mxu0 0
    %1752 = vmatprep.subr.bf16.mxu0 0
    %1753 = vmatpush1.bf16.msra.mxu0 0
    %1754 = vmatprep.mubr.bf16.mxu0 0
    %1755 = vmatmul.mubr.bf16.gmra.mrb[0].mxu0 %v1720
    %v1756 = vpop.f32.mrb[0].mxu0
    %v1757 = vadd.f32 %v1693, %v1756
    %v1758 = vpop.f32.mrb[0].mxu0
    %v1759 = vpop.f32.mrb[0].mxu0
    %v1760 = vpop.f32.mrb[0].mxu0
    %1761 = vdwg.mxu0
    %v1762 = vmax.f32 %v1757, 0.0
    %v1763 = vpack.c.bf16 %v1762, %v1762
    %v1764 = vld [vmem:[%s5] sm:$0xf]
    %v1765 = vld [vmem:[%s5 + $0x4] sm:$0xf]
    %v1766 = vld [vmem:[%s5 + $0x8] sm:$0xf]
    %v1767 = vld [vmem:[%s5 + $0xc] sm:$0xf]
    %v1768 = vld [vmem:[%s5 + $0x10] sm:$0xf]
    %v1769 = vld [vmem:[%s5 + $0x14] sm:$0xf]
    %v1770 = vld [vmem:[%s5 + $0x18] sm:$0xf]
    %v1771 = vld [vmem:[%s5 + $0x1c] sm:$0xf]
    %v1772 = vld [vmem:[%s5 + $0x20] sm:$0xf]
    %v1773 = vld [vmem:[%s5 + $0x24] sm:$0xf]
    %v1774 = vld [vmem:[%s5 + $0x28] sm:$0xf]
    %v1775 = vld [vmem:[%s5 + $0x2c] sm:$0xf]
    %v1776 = vld [vmem:[%s5 + $0x30] sm:$0xf]
    %v1777 = vld [vmem:[%s5 + $0x34] sm:$0xf]
    %v1778 = vld [vmem:[%s5 + $0x38] sm:$0xf]
    %v1779 = vld [vmem:[%s5 + $0x3c] sm:$0xf]
    %v1780 = vld [vmem:[%s6] sm:$0x1]
    %v1782 = vlaneseq
    %v1783 = vshrl.u32 %v1782, 7
    %v1784 = vsub.s32 0, %v1783
    %v1785 = vrot.slane %v1780, %v1784
    %v1803 = vunpack.c.l.b16 %v1764
    %v1804 = vunpack.c.l.b16 %v1765
    %v1805 = vunpack.c.l.b16 %v1766
    %v1806 = vunpack.c.l.b16 %v1767
    %v1807 = vunpack.c.l.b16 %v1768
    %v1808 = vunpack.c.l.b16 %v1769
    %v1809 = vunpack.c.l.b16 %v1770
    %v1810 = vunpack.c.l.b16 %v1771
    %v1811 = vunpack.c.l.b16 %v1772
    %v1812 = vunpack.c.l.b16 %v1773
    %v1813 = vunpack.c.l.b16 %v1774
    %v1814 = vunpack.c.l.b16 %v1775
    %v1815 = vunpack.c.l.b16 %v1776
    %v1816 = vunpack.c.l.b16 %v1777
    %v1817 = vunpack.c.l.b16 %v1778
    %v1818 = vunpack.c.l.b16 %v1779
    %v1819 = vpack.c.b16 %v1804, %v1803
    %v1820 = vpack.c.b16 %v1806, %v1805
    %v1821 = vpack.c.b16 %v1808, %v1807
    %v1822 = vpack.c.b16 %v1810, %v1809
    %v1823 = vpack.c.b16 %v1812, %v1811
    %v1824 = vpack.c.b16 %v1814, %v1813
    %v1825 = vpack.c.b16 %v1816, %v1815
    %v1826 = vpack.c.b16 %v1818, %v1817
    %1835 = vmatprep.subr.bf16.mxu0 0
    %1836 = vmatpush1.bf16.msra.mxu0 %v1819
    %1837 = vmatprep.subr.bf16.mxu0 0
    %1838 = vmatpush1.bf16.msra.mxu0 %v1820
    %1839 = vmatprep.subr.bf16.mxu0 0
    %1840 = vmatpush1.bf16.msra.mxu0 %v1821
    %1841 = vmatprep.subr.bf16.mxu0 0
    %1842 = vmatpush1.bf16.msra.mxu0 %v1822
    %1843 = vmatprep.subr.bf16.mxu0 0
    %1844 = vmatpush1.bf16.msra.mxu0 %v1823
    %1845 = vmatprep.subr.bf16.mxu0 0
    %1846 = vmatpush1.bf16.msra.mxu0 %v1824
    %1847 = vmatprep.subr.bf16.mxu0 0
    %1848 = vmatpush1.bf16.msra.mxu0 %v1825
    %1849 = vmatprep.subr.bf16.mxu0 0
    %1850 = vmatpush1.bf16.msra.mxu0 %v1826
    %1851 = vmatprep.subr.bf16.mxu0 0
    %1852 = vmatpush1.bf16.msra.mxu0 0
    %1853 = vmatprep.subr.bf16.mxu0 0
    %1854 = vmatpush1.bf16.msra.mxu0 0
    %1855 = vmatprep.subr.bf16.mxu0 0
    %1856 = vmatpush1.bf16.msra.mxu0 0
    %1857 = vmatprep.subr.bf16.mxu0 0
    %1858 = vmatpush1.bf16.msra.mxu0 0
    %1859 = vmatprep.subr.bf16.mxu0 0
    %1860 = vmatpush1.bf16.msra.mxu0 0
    %1861 = vmatprep.subr.bf16.mxu0 0
    %1862 = vmatpush1.bf16.msra.mxu0 0
    %1863 = vmatprep.subr.bf16.mxu0 0
    %1864 = vmatpush1.bf16.msra.mxu0 0
    %1865 = vmatprep.subr.bf16.mxu0 0
    %1866 = vmatpush1.bf16.msra.mxu0 0
    %1867 = vmatprep.mubr.bf16.mxu0 0
    %1868 = vmatmul.mubr.bf16.gmra.mrb[0].mxu0 %v1763
    %v1869 = vpop.f32.mrb[0].mxu0
    %v1870 = vadd.f32 %v1785, %v1869
    %v1871 = vpop.f32.mrb[0].mxu0
    %v1872 = vpop.f32.mrb[0].mxu0
    %v1873 = vpop.f32.mrb[0].mxu0
    %1874 = vdwg.mxu0
    %vm1875 = vcmask 9216
    %1876 = vst.msk [vmem:[#allocation4] sm:$0x3] %vm1875, %v1870
    // Predicated region
    $region30: #{forward.3} parent=1 // pred_check
      _
    $region31: #{forward.3} parent=1 // pred_check_branch
      %1878 = sbr.rel (0) target = $region33
    $region32: #{forward.3} parent=1 // pred_region
      %s1880 = ssub.s32 32, 32
      %1881 = vsyncadd [#allocation5], %s1880
      %s1883 = sshll.u32 [#allocation4], 4
      %s1884 = int_to_ptr.vmem [resolvable:$true] %s1883
      %1886 = dma.vmem_to_hbm [thread:$0]  %s1884, 32, %s7, [#allocation5]
    $region33: #{forward.3} parent=1 // pred_fallthru
      _
    // Predicated region
    $region34: #{forward.3} parent=1 // pred_check
      _
    $region35: #{forward.3} parent=1 // pred_check_branch
      %1888 = sbr.rel (0) target = $region37
    $region36: #{forward.3} parent=1 // pred_region
      %1889 = dma.done [#allocation5], 32
    $region37: #{forward.3} parent=1 // pred_fallthru
      _
    %1890 = vsyncpa [#allocation5], 1

</llo_original>
